<compile_context>
chip_gen: v6e
topology: v6e:2x2x1
jax: 0.10.0
libtpu: 0.0.40
codegen_flags: <defaults>
</compile_context>

<pallas_src>
import math
import functools

import jax
import jax.numpy as jnp
from jax import lax
from jax.experimental import pallas as pl
from jax.experimental.pallas import tpu as pltpu


def _uniform_u32(shape, salt_u32):
    """Counter-based hash -> uniform uint32 bits. Plain jnp/lax ops only (portable)."""
    r = lax.broadcasted_iota(jnp.int32, shape, 0).astype(jnp.uint32)
    c = lax.broadcasted_iota(jnp.int32, shape, 1).astype(jnp.uint32)
    x = salt_u32 + r * jnp.uint32(0x9E3779B9) + c * jnp.uint32(0x85EBCA6B)
    # murmur3-style finalizer
    x = x ^ (x >> 16)
    x = x * jnp.uint32(0x7FEB352D)
    x = x ^ (x >> 15)
    x = x * jnp.uint32(0x846CA68B)
    x = x ^ (x >> 16)
    return x


def _sdpa_kernel(q_ref, k_ref, v_ref, m_ref, o_ref, *,
                 num_heads, head_dim, head_dim_v, scale, p_drop, seed):
    b = pl.program_id(0)

    mask = m_ref[0].astype(jnp.float32)                       # (S, S)
    thresh = jnp.uint32(int(p_drop * (2.0 ** 32)))            # drop prob = p_drop
    inv_keep = 1.0 / (1.0 - p_drop)

    outs = []
    # Static unroll over heads (small H). TODO(synk): for large H, add a head-group
    # grid axis instead of unrolling.
    for h in range(num_heads):
        qh = q_ref[0, :, pl.ds(h * head_dim, head_dim)].astype(jnp.bfloat16)     # (S, D)
        kh = k_ref[0, :, pl.ds(h * head_dim, head_dim)].astype(jnp.bfloat16)     # (S, D)
        vh = v_ref[0, :, pl.ds(h * head_dim_v, head_dim_v)].astype(jnp.bfloat16)  # (S, Dv)

        # scores = (q @ k^T) * scale + mask ; contract last dims, no transpose copy.
        scores = lax.dot_general(
            qh, kh, (((1,), (1,)), ((), ())),
            preferred_element_type=jnp.float32) * scale + mask                   # (S, S)

        # Numerically-stable softmax; fold dropout 1/(1-p) into the normalizer so
        # there is a single (S,1) divide and one (S,S) multiply.
        m_max = jnp.max(scores, axis=-1, keepdims=True)
        e = jnp.exp(scores - m_max)
        denom = jnp.sum(e, axis=-1, keepdims=True)
        p = e * (inv_keep / denom)

        # Dropout (train=True): keep with prob 1 - p_drop, survivors pre-scaled above.
        salt = (jnp.uint32(seed)
                + (b * num_heads + h).astype(jnp.uint32) * jnp.uint32(0x632BE59B))
        bits = _uniform_u32(scores.shape, salt)
        attn = jnp.where(bits >= thresh, p, 0.0)

        outs.append(jnp.dot(attn.astype(jnp.bfloat16), vh,
                            preferred_element_type=jnp.float32))                 # (S, Dv)

    # Lane-dense (S, H*Dv) store (single unmasked slab).
    o_ref[0] = jnp.concatenate(outs, axis=-1).astype(o_ref.dtype)


def sdpa_dropout(query, key, value, attn_mask, *, seed=0, p_drop=0.1):
    """query/key: (B, H, S, D), value: (B, H, S, Dv), attn_mask: (B, 1, S, S)."""
    B, H, S, D = query.shape
    Dv = value.shape[-1]
    scale = 1.0 / math.sqrt(D)

    # Lane-dense plumbing: (B, H, S, D) -> (B, S, H*D).
    q2 = jnp.transpose(query, (0, 2, 1, 3)).reshape(B, S, H * D)
    k2 = jnp.transpose(key, (0, 2, 1, 3)).reshape(B, S, H * D)
    v2 = jnp.transpose(value, (0, 2, 1, 3)).reshape(B, S, H * Dv)
    m2 = attn_mask.reshape(B, S, S)

    kernel = functools.partial(
        _sdpa_kernel, num_heads=H, head_dim=D, head_dim_v=Dv,
        scale=scale, p_drop=float(p_drop), seed=int(seed))

    out2 = pl.pallas_call(
        kernel,
        out_shape=jax.ShapeDtypeStruct((B, S, H * Dv), query.dtype),
        grid=(B,),
        in_specs=[
            pl.BlockSpec((1, S, H * D), lambda b: (b, 0, 0)),
            pl.BlockSpec((1, S, H * D), lambda b: (b, 0, 0)),
            pl.BlockSpec((1, S, H * Dv), lambda b: (b, 0, 0)),
            pl.BlockSpec((1, S, S), lambda b: (b, 0, 0)),
        ],
        out_specs=pl.BlockSpec((1, S, H * Dv), lambda b: (b, 0, 0)),
        compiler_params=pltpu.CompilerParams(
            dimension_semantics=("parallel",),
        ),
    )(q2, k2, v2, m2)

    # (B, S, H*Dv) -> (B, H, S, Dv)
    return out2.reshape(B, S, H, Dv).transpose(0, 2, 1, 3)


if __name__ == "__main__":
    # Small shapes consistent with the module's forward (q/k share head dim so
    # query @ key.transpose(-2,-1) is valid).
    B, H, S, D, Dv = 2, 4, 128, 32, 32

    root = jax.random.PRNGKey(0)
    kq, kk, kv, km = jax.random.split(root, 4)
    query = jax.random.normal(kq, (B, H, S, D), dtype=jnp.float32)
    key = jax.random.normal(kk, (B, H, S, D), dtype=jnp.float32)
    value = jax.random.normal(kv, (B, H, S, Dv), dtype=jnp.float32)
    attn_mask = jax.random.normal(km, (B, 1, S, S), dtype=jnp.float32)

    out = sdpa_dropout(query, key, value, attn_mask, seed=0, p_drop=0.1)
    jax.block_until_ready(out)
    assert out.shape == (B, H, S, Dv), out.shape
    assert bool(jnp.isfinite(out).all())
    print("KERNEL_OK")
</pallas_src>

<mosaic_0001>
module attributes {stable_mosaic.version = 11 : i64} {
  func.func @_sdpa_kernel(%arg0: i32, %arg1: memref<1x128x128xf32, #tpu.memory_space<vmem>>, %arg2: memref<1x128x128xf32, #tpu.memory_space<vmem>>, %arg3: memref<1x128x128xf32, #tpu.memory_space<vmem>>, %arg4: memref<1x128x128xf32, #tpu.memory_space<vmem>>, %arg5: memref<1x128x128xf32, #tpu.memory_space<vmem>>) attributes {dimension_semantics = [#tpu.dimension_semantics<parallel>], iteration_bounds = array<i64: 2>, scalar_prefetch = 0 : i64, scratch_operands = 0 : i64, tpu.core_type = #tpu.core_type<tc>, window_params = [{transform_indices = @transform_0, window_bounds = array<i64: 1, 128, 128>}, {transform_indices = @transform_1, window_bounds = array<i64: 1, 128, 128>}, {transform_indices = @transform_2, window_bounds = array<i64: 1, 128, 128>}, {transform_indices = @transform_3, window_bounds = array<i64: 1, 128, 128>}, {transform_indices = @transform_4, window_bounds = array<i64: 1, 128, 128>}]} {
    %c0 = arith.constant 0 : index
    %c0_0 = arith.constant 0 : index
    %c0_1 = arith.constant 0 : index
    %0 = vector.load %arg4[%c0, %c0_0, %c0_1] : memref<1x128x128xf32, #tpu.memory_space<vmem>>, vector<1x128x128xf32>
    %1 = vector.shape_cast %0 : vector<1x128x128xf32> to vector<128x128xf32>
    %c0_2 = arith.constant 0 : index
    %c0_3 = arith.constant 0 : index
    %c0_4 = arith.constant 0 : index
    %2 = vector.load %arg1[%c0_2, %c0_3, %c0_4] : memref<1x128x128xf32, #tpu.memory_space<vmem>>, vector<1x128x32xf32>
    %3 = vector.shape_cast %2 : vector<1x128x32xf32> to vector<128x32xf32>
    %4 = arith.truncf %3 : vector<128x32xf32> to vector<128x32xbf16>
    %c0_5 = arith.constant 0 : index
    %c0_6 = arith.constant 0 : index
    %c0_7 = arith.constant 0 : index
    %5 = vector.load %arg2[%c0_5, %c0_6, %c0_7] : memref<1x128x128xf32, #tpu.memory_space<vmem>>, vector<1x128x32xf32>
    %6 = vector.shape_cast %5 : vector<1x128x32xf32> to vector<128x32xf32>
    %7 = arith.truncf %6 : vector<128x32xf32> to vector<128x32xbf16>
    %c0_8 = arith.constant 0 : index
    %c0_9 = arith.constant 0 : index
    %c0_10 = arith.constant 0 : index
    %8 = vector.load %arg3[%c0_8, %c0_9, %c0_10] : memref<1x128x128xf32, #tpu.memory_space<vmem>>, vector<1x128x32xf32>
    %9 = vector.shape_cast %8 : vector<1x128x32xf32> to vector<128x32xf32>
    %10 = arith.truncf %9 : vector<128x32xf32> to vector<128x32xbf16>
    %cst = arith.constant dense<0.000000e+00> : vector<128x128xf32>
    %11 = tpu.matmul %4, %7, %cst {dimension_numbers = #tpu.dot_dimension_numbers<[1], [1], [0], [0], [0, 0, 1, 0], [], []>} : vector<128x32xbf16>, vector<128x32xbf16>, vector<128x128xf32> -> vector<128x128xf32>
    %cst_11 = arith.constant 0.176776692 : f32
    %12 = vector.broadcast %cst_11 : f32 to vector<128x128xf32>
    %13 = arith.mulf %11, %12 : vector<128x128xf32>
    %14 = arith.addf %13, %1 : vector<128x128xf32>
    %cst_12 = arith.constant dense<0xFF800000> : vector<128xf32>
    %15 = vector.multi_reduction <maximumf>, %14, %cst_12 [1] : vector<128x128xf32> to vector<128xf32>
    %16 = vector.shape_cast %15 : vector<128xf32> to vector<128x1xf32>
    %17 = vector.broadcast %16 : vector<128x1xf32> to vector<128x128xf32>
    %18 = arith.subf %14, %17 : vector<128x128xf32>
    %19 = math.exp %18 : vector<128x128xf32>
    %cst_13 = arith.constant dense<0.000000e+00> : vector<128xf32>
    %20 = vector.multi_reduction <add>, %19, %cst_13 [1] : vector<128x128xf32> to vector<128xf32>
    %21 = vector.shape_cast %20 : vector<128xf32> to vector<128x1xf32>
    %cst_14 = arith.constant 1.11111116 : f32
    %22 = vector.broadcast %cst_14 : f32 to vector<128x1xf32>
    %23 = arith.divf %22, %21 : vector<128x1xf32>
    %24 = vector.broadcast %23 : vector<128x1xf32> to vector<128x128xf32>
    %25 = arith.mulf %19, %24 : vector<128x128xf32>
    %c4_i32 = arith.constant 4 : i32
    %26 = arith.muli %arg0, %c4_i32 : i32
    %c0_i32 = arith.constant 0 : i32
    %27 = arith.addi %26, %c0_i32 : i32
    %c1663821211_i32 = arith.constant 1663821211 : i32
    %28 = arith.muli %27, %c1663821211_i32 : i32
    %c0_i32_15 = arith.constant 0 : i32
    %29 = arith.addi %c0_i32_15, %28 : i32
    %30 = tpu.iota {dimensions = array<i32: 0>} : vector<128x128xi32>
    %31 = tpu.iota {dimensions = array<i32: 1>} : vector<128x128xi32>
    %c-1640531527_i32 = arith.constant -1640531527 : i32
    %32 = vector.broadcast %c-1640531527_i32 : i32 to vector<128x128xi32>
    %33 = arith.muli %30, %32 : vector<128x128xi32>
    %34 = vector.broadcast %29 : i32 to vector<128x128xi32>
    %35 = arith.addi %34, %33 : vector<128x128xi32>
    %c-2048144789_i32 = arith.constant -2048144789 : i32
    %36 = vector.broadcast %c-2048144789_i32 : i32 to vector<128x128xi32>
    %37 = arith.muli %31, %36 : vector<128x128xi32>
    %38 = arith.addi %35, %37 : vector<128x128xi32>
    %c16_i32 = arith.constant 16 : i32
    %39 = vector.broadcast %c16_i32 : i32 to vector<128x128xi32>
    %40 = arith.shrui %38, %39 : vector<128x128xi32>
    %41 = arith.xori %38, %40 : vector<128x128xi32>
    %c2146121005_i32 = arith.constant 2146121005 : i32
    %42 = vector.broadcast %c2146121005_i32 : i32 to vector<128x128xi32>
    %43 = arith.muli %41, %42 : vector<128x128xi32>
    %c15_i32 = arith.constant 15 : i32
    %44 = vector.broadcast %c15_i32 : i32 to vector<128x128xi32>
    %45 = arith.shrui %43, %44 : vector<128x128xi32>
    %46 = arith.xori %43, %45 : vector<128x128xi32>
    %c-2073254261_i32 = arith.constant -2073254261 : i32
    %47 = vector.broadcast %c-2073254261_i32 : i32 to vector<128x128xi32>
    %48 = arith.muli %46, %47 : vector<128x128xi32>
    %c16_i32_16 = arith.constant 16 : i32
    %49 = vector.broadcast %c16_i32_16 : i32 to vector<128x128xi32>
    %50 = arith.shrui %48, %49 : vector<128x128xi32>
    %51 = arith.xori %48, %50 : vector<128x128xi32>
    %c429496729_i32 = arith.constant 429496729 : i32
    %52 = vector.broadcast %c429496729_i32 : i32 to vector<128x128xi32>
    %53 = arith.cmpi uge, %51, %52 : vector<128x128xi32>
    %cst_17 = arith.constant 0.000000e+00 : f32
    %54 = vector.broadcast %cst_17 : f32 to vector<128x128xf32>
    %55 = arith.select %53, %25, %54 : vector<128x128xi1>, vector<128x128xf32>
    %56 = arith.truncf %55 : vector<128x128xf32> to vector<128x128xbf16>
    %cst_18 = arith.constant dense<0.000000e+00> : vector<128x32xf32>
    %57 = tpu.matmul %56, %10, %cst_18 {dimension_numbers = #tpu.dot_dimension_numbers<[1], [0], [0], [1], [0, 0, 1, 1], [], []>} : vector<128x128xbf16>, vector<128x32xbf16>, vector<128x32xf32> -> vector<128x32xf32>
    %c0_19 = arith.constant 0 : index
    %c0_20 = arith.constant 0 : index
    %c32 = arith.constant 32 : index
    %58 = vector.load %arg1[%c0_19, %c0_20, %c32] : memref<1x128x128xf32, #tpu.memory_space<vmem>>, vector<1x128x32xf32>
    %59 = vector.shape_cast %58 : vector<1x128x32xf32> to vector<128x32xf32>
    %60 = arith.truncf %59 : vector<128x32xf32> to vector<128x32xbf16>
    %c0_21 = arith.constant 0 : index
    %c0_22 = arith.constant 0 : index
    %c32_23 = arith.constant 32 : index
    %61 = vector.load %arg2[%c0_21, %c0_22, %c32_23] : memref<1x128x128xf32, #tpu.memory_space<vmem>>, vector<1x128x32xf32>
    %62 = vector.shape_cast %61 : vector<1x128x32xf32> to vector<128x32xf32>
    %63 = arith.truncf %62 : vector<128x32xf32> to vector<128x32xbf16>
    %c0_24 = arith.constant 0 : index
    %c0_25 = arith.constant 0 : index
    %c32_26 = arith.constant 32 : index
    %64 = vector.load %arg3[%c0_24, %c0_25, %c32_26] : memref<1x128x128xf32, #tpu.memory_space<vmem>>, vector<1x128x32xf32>
    %65 = vector.shape_cast %64 : vector<1x128x32xf32> to vector<128x32xf32>
    %66 = arith.truncf %65 : vector<128x32xf32> to vector<128x32xbf16>
    %cst_27 = arith.constant dense<0.000000e+00> : vector<128x128xf32>
    %67 = tpu.matmul %60, %63, %cst_27 {dimension_numbers = #tpu.dot_dimension_numbers<[1], [1], [0], [0], [0, 0, 1, 0], [], []>} : vector<128x32xbf16>, vector<128x32xbf16>, vector<128x128xf32> -> vector<128x128xf32>
    %cst_28 = arith.constant 0.176776692 : f32
    %68 = vector.broadcast %cst_28 : f32 to vector<128x128xf32>
    %69 = arith.mulf %67, %68 : vector<128x128xf32>
    %70 = arith.addf %69, %1 : vector<128x128xf32>
    %cst_29 = arith.constant dense<0xFF800000> : vector<128xf32>
    %71 = vector.multi_reduction <maximumf>, %70, %cst_29 [1] : vector<128x128xf32> to vector<128xf32>
    %72 = vector.shape_cast %71 : vector<128xf32> to vector<128x1xf32>
    %73 = vector.broadcast %72 : vector<128x1xf32> to vector<128x128xf32>
    %74 = arith.subf %70, %73 : vector<128x128xf32>
    %75 = math.exp %74 : vector<128x128xf32>
    %cst_30 = arith.constant dense<0.000000e+00> : vector<128xf32>
    %76 = vector.multi_reduction <add>, %75, %cst_30 [1] : vector<128x128xf32> to vector<128xf32>
    %77 = vector.shape_cast %76 : vector<128xf32> to vector<128x1xf32>
    %cst_31 = arith.constant 1.11111116 : f32
    %78 = vector.broadcast %cst_31 : f32 to vector<128x1xf32>
    %79 = arith.divf %78, %77 : vector<128x1xf32>
    %80 = vector.broadcast %79 : vector<128x1xf32> to vector<128x128xf32>
    %81 = arith.mulf %75, %80 : vector<128x128xf32>
    %c4_i32_32 = arith.constant 4 : i32
    %82 = arith.muli %arg0, %c4_i32_32 : i32
    %c1_i32 = arith.constant 1 : i32
    %83 = arith.addi %82, %c1_i32 : i32
    %c1663821211_i32_33 = arith.constant 1663821211 : i32
    %84 = arith.muli %83, %c1663821211_i32_33 : i32
    %c0_i32_34 = arith.constant 0 : i32
    %85 = arith.addi %c0_i32_34, %84 : i32
    %86 = tpu.iota {dimensions = array<i32: 0>} : vector<128x128xi32>
    %87 = tpu.iota {dimensions = array<i32: 1>} : vector<128x128xi32>
    %c-1640531527_i32_35 = arith.constant -1640531527 : i32
    %88 = vector.broadcast %c-1640531527_i32_35 : i32 to vector<128x128xi32>
    %89 = arith.muli %86, %88 : vector<128x128xi32>
    %90 = vector.broadcast %85 : i32 to vector<128x128xi32>
    %91 = arith.addi %90, %89 : vector<128x128xi32>
    %c-2048144789_i32_36 = arith.constant -2048144789 : i32
    %92 = vector.broadcast %c-2048144789_i32_36 : i32 to vector<128x128xi32>
    %93 = arith.muli %87, %92 : vector<128x128xi32>
    %94 = arith.addi %91, %93 : vector<128x128xi32>
    %c16_i32_37 = arith.constant 16 : i32
    %95 = vector.broadcast %c16_i32_37 : i32 to vector<128x128xi32>
    %96 = arith.shrui %94, %95 : vector<128x128xi32>
    %97 = arith.xori %94, %96 : vector<128x128xi32>
    %c2146121005_i32_38 = arith.constant 2146121005 : i32
    %98 = vector.broadcast %c2146121005_i32_38 : i32 to vector<128x128xi32>
    %99 = arith.muli %97, %98 : vector<128x128xi32>
    %c15_i32_39 = arith.constant 15 : i32
    %100 = vector.broadcast %c15_i32_39 : i32 to vector<128x128xi32>
    %101 = arith.shrui %99, %100 : vector<128x128xi32>
    %102 = arith.xori %99, %101 : vector<128x128xi32>
    %c-2073254261_i32_40 = arith.constant -2073254261 : i32
    %103 = vector.broadcast %c-2073254261_i32_40 : i32 to vector<128x128xi32>
    %104 = arith.muli %102, %103 : vector<128x128xi32>
    %c16_i32_41 = arith.constant 16 : i32
    %105 = vector.broadcast %c16_i32_41 : i32 to vector<128x128xi32>
    %106 = arith.shrui %104, %105 : vector<128x128xi32>
    %107 = arith.xori %104, %106 : vector<128x128xi32>
    %c429496729_i32_42 = arith.constant 429496729 : i32
    %108 = vector.broadcast %c429496729_i32_42 : i32 to vector<128x128xi32>
    %109 = arith.cmpi uge, %107, %108 : vector<128x128xi32>
    %cst_43 = arith.constant 0.000000e+00 : f32
    %110 = vector.broadcast %cst_43 : f32 to vector<128x128xf32>
    %111 = arith.select %109, %81, %110 : vector<128x128xi1>, vector<128x128xf32>
    %112 = arith.truncf %111 : vector<128x128xf32> to vector<128x128xbf16>
    %cst_44 = arith.constant dense<0.000000e+00> : vector<128x32xf32>
    %113 = tpu.matmul %112, %66, %cst_44 {dimension_numbers = #tpu.dot_dimension_numbers<[1], [0], [0], [1], [0, 0, 1, 1], [], []>} : vector<128x128xbf16>, vector<128x32xbf16>, vector<128x32xf32> -> vector<128x32xf32>
    %c0_45 = arith.constant 0 : index
    %c0_46 = arith.constant 0 : index
    %c64 = arith.constant 64 : index
    %114 = vector.load %arg1[%c0_45, %c0_46, %c64] : memref<1x128x128xf32, #tpu.memory_space<vmem>>, vector<1x128x32xf32>
    %115 = vector.shape_cast %114 : vector<1x128x32xf32> to vector<128x32xf32>
    %116 = arith.truncf %115 : vector<128x32xf32> to vector<128x32xbf16>
    %c0_47 = arith.constant 0 : index
    %c0_48 = arith.constant 0 : index
    %c64_49 = arith.constant 64 : index
    %117 = vector.load %arg2[%c0_47, %c0_48, %c64_49] : memref<1x128x128xf32, #tpu.memory_space<vmem>>, vector<1x128x32xf32>
    %118 = vector.shape_cast %117 : vector<1x128x32xf32> to vector<128x32xf32>
    %119 = arith.truncf %118 : vector<128x32xf32> to vector<128x32xbf16>
    %c0_50 = arith.constant 0 : index
    %c0_51 = arith.constant 0 : index
    %c64_52 = arith.constant 64 : index
    %120 = vector.load %arg3[%c0_50, %c0_51, %c64_52] : memref<1x128x128xf32, #tpu.memory_space<vmem>>, vector<1x128x32xf32>
    %121 = vector.shape_cast %120 : vector<1x128x32xf32> to vector<128x32xf32>
    %122 = arith.truncf %121 : vector<128x32xf32> to vector<128x32xbf16>
    %cst_53 = arith.constant dense<0.000000e+00> : vector<128x128xf32>
    %123 = tpu.matmul %116, %119, %cst_53 {dimension_numbers = #tpu.dot_dimension_numbers<[1], [1], [0], [0], [0, 0, 1, 0], [], []>} : vector<128x32xbf16>, vector<128x32xbf16>, vector<128x128xf32> -> vector<128x128xf32>
    %cst_54 = arith.constant 0.176776692 : f32
    %124 = vector.broadcast %cst_54 : f32 to vector<128x128xf32>
    %125 = arith.mulf %123, %124 : vector<128x128xf32>
    %126 = arith.addf %125, %1 : vector<128x128xf32>
    %cst_55 = arith.constant dense<0xFF800000> : vector<128xf32>
    %127 = vector.multi_reduction <maximumf>, %126, %cst_55 [1] : vector<128x128xf32> to vector<128xf32>
    %128 = vector.shape_cast %127 : vector<128xf32> to vector<128x1xf32>
    %129 = vector.broadcast %128 : vector<128x1xf32> to vector<128x128xf32>
    %130 = arith.subf %126, %129 : vector<128x128xf32>
    %131 = math.exp %130 : vector<128x128xf32>
    %cst_56 = arith.constant dense<0.000000e+00> : vector<128xf32>
    %132 = vector.multi_reduction <add>, %131, %cst_56 [1] : vector<128x128xf32> to vector<128xf32>
    %133 = vector.shape_cast %132 : vector<128xf32> to vector<128x1xf32>
    %cst_57 = arith.constant 1.11111116 : f32
    %134 = vector.broadcast %cst_57 : f32 to vector<128x1xf32>
    %135 = arith.divf %134, %133 : vector<128x1xf32>
    %136 = vector.broadcast %135 : vector<128x1xf32> to vector<128x128xf32>
    %137 = arith.mulf %131, %136 : vector<128x128xf32>
    %c4_i32_58 = arith.constant 4 : i32
    %138 = arith.muli %arg0, %c4_i32_58 : i32
    %c2_i32 = arith.constant 2 : i32
    %139 = arith.addi %138, %c2_i32 : i32
    %c1663821211_i32_59 = arith.constant 1663821211 : i32
    %140 = arith.muli %139, %c1663821211_i32_59 : i32
    %c0_i32_60 = arith.constant 0 : i32
    %141 = arith.addi %c0_i32_60, %140 : i32
    %142 = tpu.iota {dimensions = array<i32: 0>} : vector<128x128xi32>
    %143 = tpu.iota {dimensions = array<i32: 1>} : vector<128x128xi32>
    %c-1640531527_i32_61 = arith.constant -1640531527 : i32
    %144 = vector.broadcast %c-1640531527_i32_61 : i32 to vector<128x128xi32>
    %145 = arith.muli %142, %144 : vector<128x128xi32>
    %146 = vector.broadcast %141 : i32 to vector<128x128xi32>
    %147 = arith.addi %146, %145 : vector<128x128xi32>
    %c-2048144789_i32_62 = arith.constant -2048144789 : i32
    %148 = vector.broadcast %c-2048144789_i32_62 : i32 to vector<128x128xi32>
    %149 = arith.muli %143, %148 : vector<128x128xi32>
    %150 = arith.addi %147, %149 : vector<128x128xi32>
    %c16_i32_63 = arith.constant 16 : i32
    %151 = vector.broadcast %c16_i32_63 : i32 to vector<128x128xi32>
    %152 = arith.shrui %150, %151 : vector<128x128xi32>
    %153 = arith.xori %150, %152 : vector<128x128xi32>
    %c2146121005_i32_64 = arith.constant 2146121005 : i32
    %154 = vector.broadcast %c2146121005_i32_64 : i32 to vector<128x128xi32>
    %155 = arith.muli %153, %154 : vector<128x128xi32>
    %c15_i32_65 = arith.constant 15 : i32
    %156 = vector.broadcast %c15_i32_65 : i32 to vector<128x128xi32>
    %157 = arith.shrui %155, %156 : vector<128x128xi32>
    %158 = arith.xori %155, %157 : vector<128x128xi32>
    %c-2073254261_i32_66 = arith.constant -2073254261 : i32
    %159 = vector.broadcast %c-2073254261_i32_66 : i32 to vector<128x128xi32>
    %160 = arith.muli %158, %159 : vector<128x128xi32>
    %c16_i32_67 = arith.constant 16 : i32
    %161 = vector.broadcast %c16_i32_67 : i32 to vector<128x128xi32>
    %162 = arith.shrui %160, %161 : vector<128x128xi32>
    %163 = arith.xori %160, %162 : vector<128x128xi32>
    %c429496729_i32_68 = arith.constant 429496729 : i32
    %164 = vector.broadcast %c429496729_i32_68 : i32 to vector<128x128xi32>
    %165 = arith.cmpi uge, %163, %164 : vector<128x128xi32>
    %cst_69 = arith.constant 0.000000e+00 : f32
    %166 = vector.broadcast %cst_69 : f32 to vector<128x128xf32>
    %167 = arith.select %165, %137, %166 : vector<128x128xi1>, vector<128x128xf32>
    %168 = arith.truncf %167 : vector<128x128xf32> to vector<128x128xbf16>
    %cst_70 = arith.constant dense<0.000000e+00> : vector<128x32xf32>
    %169 = tpu.matmul %168, %122, %cst_70 {dimension_numbers = #tpu.dot_dimension_numbers<[1], [0], [0], [1], [0, 0, 1, 1], [], []>} : vector<128x128xbf16>, vector<128x32xbf16>, vector<128x32xf32> -> vector<128x32xf32>
    %c0_71 = arith.constant 0 : index
    %c0_72 = arith.constant 0 : index
    %c96 = arith.constant 96 : index
    %170 = vector.load %arg1[%c0_71, %c0_72, %c96] : memref<1x128x128xf32, #tpu.memory_space<vmem>>, vector<1x128x32xf32>
    %171 = vector.shape_cast %170 : vector<1x128x32xf32> to vector<128x32xf32>
    %172 = arith.truncf %171 : vector<128x32xf32> to vector<128x32xbf16>
    %c0_73 = arith.constant 0 : index
    %c0_74 = arith.constant 0 : index
    %c96_75 = arith.constant 96 : index
    %173 = vector.load %arg2[%c0_73, %c0_74, %c96_75] : memref<1x128x128xf32, #tpu.memory_space<vmem>>, vector<1x128x32xf32>
    %174 = vector.shape_cast %173 : vector<1x128x32xf32> to vector<128x32xf32>
    %175 = arith.truncf %174 : vector<128x32xf32> to vector<128x32xbf16>
    %c0_76 = arith.constant 0 : index
    %c0_77 = arith.constant 0 : index
    %c96_78 = arith.constant 96 : index
    %176 = vector.load %arg3[%c0_76, %c0_77, %c96_78] : memref<1x128x128xf32, #tpu.memory_space<vmem>>, vector<1x128x32xf32>
    %177 = vector.shape_cast %176 : vector<1x128x32xf32> to vector<128x32xf32>
    %178 = arith.truncf %177 : vector<128x32xf32> to vector<128x32xbf16>
    %cst_79 = arith.constant dense<0.000000e+00> : vector<128x128xf32>
    %179 = tpu.matmul %172, %175, %cst_79 {dimension_numbers = #tpu.dot_dimension_numbers<[1], [1], [0], [0], [0, 0, 1, 0], [], []>} : vector<128x32xbf16>, vector<128x32xbf16>, vector<128x128xf32> -> vector<128x128xf32>
    %cst_80 = arith.constant 0.176776692 : f32
    %180 = vector.broadcast %cst_80 : f32 to vector<128x128xf32>
    %181 = arith.mulf %179, %180 : vector<128x128xf32>
    %182 = arith.addf %181, %1 : vector<128x128xf32>
    %cst_81 = arith.constant dense<0xFF800000> : vector<128xf32>
    %183 = vector.multi_reduction <maximumf>, %182, %cst_81 [1] : vector<128x128xf32> to vector<128xf32>
    %184 = vector.shape_cast %183 : vector<128xf32> to vector<128x1xf32>
    %185 = vector.broadcast %184 : vector<128x1xf32> to vector<128x128xf32>
    %186 = arith.subf %182, %185 : vector<128x128xf32>
    %187 = math.exp %186 : vector<128x128xf32>
    %cst_82 = arith.constant dense<0.000000e+00> : vector<128xf32>
    %188 = vector.multi_reduction <add>, %187, %cst_82 [1] : vector<128x128xf32> to vector<128xf32>
    %189 = vector.shape_cast %188 : vector<128xf32> to vector<128x1xf32>
    %cst_83 = arith.constant 1.11111116 : f32
    %190 = vector.broadcast %cst_83 : f32 to vector<128x1xf32>
    %191 = arith.divf %190, %189 : vector<128x1xf32>
    %192 = vector.broadcast %191 : vector<128x1xf32> to vector<128x128xf32>
    %193 = arith.mulf %187, %192 : vector<128x128xf32>
    %c4_i32_84 = arith.constant 4 : i32
    %194 = arith.muli %arg0, %c4_i32_84 : i32
    %c3_i32 = arith.constant 3 : i32
    %195 = arith.addi %194, %c3_i32 : i32
    %c1663821211_i32_85 = arith.constant 1663821211 : i32
    %196 = arith.muli %195, %c1663821211_i32_85 : i32
    %c0_i32_86 = arith.constant 0 : i32
    %197 = arith.addi %c0_i32_86, %196 : i32
    %198 = tpu.iota {dimensions = array<i32: 0>} : vector<128x128xi32>
    %199 = tpu.iota {dimensions = array<i32: 1>} : vector<128x128xi32>
    %c-1640531527_i32_87 = arith.constant -1640531527 : i32
    %200 = vector.broadcast %c-1640531527_i32_87 : i32 to vector<128x128xi32>
    %201 = arith.muli %198, %200 : vector<128x128xi32>
    %202 = vector.broadcast %197 : i32 to vector<128x128xi32>
    %203 = arith.addi %202, %201 : vector<128x128xi32>
    %c-2048144789_i32_88 = arith.constant -2048144789 : i32
    %204 = vector.broadcast %c-2048144789_i32_88 : i32 to vector<128x128xi32>
    %205 = arith.muli %199, %204 : vector<128x128xi32>
    %206 = arith.addi %203, %205 : vector<128x128xi32>
    %c16_i32_89 = arith.constant 16 : i32
    %207 = vector.broadcast %c16_i32_89 : i32 to vector<128x128xi32>
    %208 = arith.shrui %206, %207 : vector<128x128xi32>
    %209 = arith.xori %206, %208 : vector<128x128xi32>
    %c2146121005_i32_90 = arith.constant 2146121005 : i32
    %210 = vector.broadcast %c2146121005_i32_90 : i32 to vector<128x128xi32>
    %211 = arith.muli %209, %210 : vector<128x128xi32>
    %c15_i32_91 = arith.constant 15 : i32
    %212 = vector.broadcast %c15_i32_91 : i32 to vector<128x128xi32>
    %213 = arith.shrui %211, %212 : vector<128x128xi32>
    %214 = arith.xori %211, %213 : vector<128x128xi32>
    %c-2073254261_i32_92 = arith.constant -2073254261 : i32
    %215 = vector.broadcast %c-2073254261_i32_92 : i32 to vector<128x128xi32>
    %216 = arith.muli %214, %215 : vector<128x128xi32>
    %c16_i32_93 = arith.constant 16 : i32
    %217 = vector.broadcast %c16_i32_93 : i32 to vector<128x128xi32>
    %218 = arith.shrui %216, %217 : vector<128x128xi32>
    %219 = arith.xori %216, %218 : vector<128x128xi32>
    %c429496729_i32_94 = arith.constant 429496729 : i32
    %220 = vector.broadcast %c429496729_i32_94 : i32 to vector<128x128xi32>
    %221 = arith.cmpi uge, %219, %220 : vector<128x128xi32>
    %cst_95 = arith.constant 0.000000e+00 : f32
    %222 = vector.broadcast %cst_95 : f32 to vector<128x128xf32>
    %223 = arith.select %221, %193, %222 : vector<128x128xi1>, vector<128x128xf32>
    %224 = arith.truncf %223 : vector<128x128xf32> to vector<128x128xbf16>
    %cst_96 = arith.constant dense<0.000000e+00> : vector<128x32xf32>
    %225 = tpu.matmul %224, %178, %cst_96 {dimension_numbers = #tpu.dot_dimension_numbers<[1], [0], [0], [1], [0, 0, 1, 1], [], []>} : vector<128x128xbf16>, vector<128x32xbf16>, vector<128x32xf32> -> vector<128x32xf32>
    %226 = tpu.concatenate %57, %113, %169, %225 in 1 : vector<128x32xf32>, vector<128x32xf32>, vector<128x32xf32>, vector<128x32xf32> -> vector<128x128xf32>
    %c0_97 = arith.constant 0 : index
    %c0_98 = arith.constant 0 : index
    %c0_99 = arith.constant 0 : index
    %227 = vector.load %arg5[%c0_97, %c0_98, %c0_99] : memref<1x128x128xf32, #tpu.memory_space<vmem>>, vector<1x128x128xf32>
    %228 = vector.shape_cast %227 : vector<1x128x128xf32> to vector<128x128xf32>
    %229 = vector.shape_cast %226 : vector<128x128xf32> to vector<1x128x128xf32>
    tpu.vector_store %arg5[%c0_97, %c0_98, %c0_99], %229 {strides = array<i32>} : memref<1x128x128xf32, #tpu.memory_space<vmem>>, vector<1x128x128xf32>,
    return
  }
  func.func @transform_0(%arg0: i32) -> (i32, i32, i32) {
    %c0_i32 = arith.constant 0 : i32
    %c0_i32_0 = arith.constant 0 : i32
    %c0_i32_1 = arith.constant 0 : i32
    return %arg0, %c0_i32, %c0_i32_0 : i32, i32, i32
  }
  func.func @transform_1(%arg0: i32) -> (i32, i32, i32) {
    %c0_i32 = arith.constant 0 : i32
    %c0_i32_0 = arith.constant 0 : i32
    %c0_i32_1 = arith.constant 0 : i32
    return %arg0, %c0_i32, %c0_i32_0 : i32, i32, i32
  }
  func.func @transform_2(%arg0: i32) -> (i32, i32, i32) {
    %c0_i32 = arith.constant 0 : i32
    %c0_i32_0 = arith.constant 0 : i32
    %c0_i32_1 = arith.constant 0 : i32
    return %arg0, %c0_i32, %c0_i32_0 : i32, i32, i32
  }
  func.func @transform_3(%arg0: i32) -> (i32, i32, i32) {
    %c0_i32 = arith.constant 0 : i32
    %c0_i32_0 = arith.constant 0 : i32
    %c0_i32_1 = arith.constant 0 : i32
    return %arg0, %c0_i32, %c0_i32_0 : i32, i32, i32
  }
  func.func @transform_4(%arg0: i32) -> (i32, i32, i32) {
    %c0_i32 = arith.constant 0 : i32
    %c0_i32_0 = arith.constant 0 : i32
    %c0_i32_1 = arith.constant 0 : i32
    return %arg0, %c0_i32, %c0_i32_0 : i32, i32, i32
  }
}

</mosaic_0001>

<llo_original>
// kernel: tpu_custom_call.1
$region0: #{tpu_custom_call.1}
  #allocation0 [shape = 'u32[]', space=smem, size = 0x4, offset = 0x4, fixed_abs, tag = 'smem constant byte address 0x4 - core index']
  #allocation1 [shape = 'u32[144,128]{1,0:T(1,128)}', space=vmem, size = 0x12000, scoped, tag = 'internal scratch']
  %s0 = inlined_call_operand.hbm [shape: f32[2,128,128], index: 0, kind: input, shape index: {}]
  %s1 = inlined_call_operand.hbm [shape: f32[2,128,128], index: 1, kind: input, shape index: {}]
  %s2 = inlined_call_operand.hbm [shape: f32[2,128,128], index: 2, kind: input, shape index: {}]
  %s3 = inlined_call_operand.hbm [shape: f32[2,128,128], index: 3, kind: input, shape index: {}]
  %s4 = inlined_call_operand.hbm [shape: f32[2,128,128], index: 4, kind: output, shape index: {}]
  %s5 = sld [smem:[#allocation0]]
  $region65: #{tpu_custom_call.1} parent=0
    _
  %s7 = ssub.s32 1, %s5
  %s8 = scalar_select 0, %s7, %s5
  $region1: #{tpu_custom_call.1} parent=0
    #allocation2 [shape = 'u8[131072]{0}', space=vmem, size = 0x20000, scoped, tag = 'input window, operand 0']
    #allocation3 [shape = 's32[2]{0}', space=sflag, size = 0x8, scoped, tag = 'scoped memory for tpu_custom_call.1']
    #allocation4 [shape = 's32[2]{0}', space=sflag, size = 0x8, scoped, tag = 'scoped memory for tpu_custom_call.1']
    #allocation5 [shape = 'u8[131072]{0}', space=vmem, size = 0x20000, scoped, tag = 'input window, operand 1']
    #allocation6 [shape = 's32[2]{0}', space=sflag, size = 0x8, scoped, tag = 'scoped memory for tpu_custom_call.1']
    #allocation7 [shape = 'u8[131072]{0}', space=vmem, size = 0x20000, scoped, tag = 'input window, operand 2']
    #allocation8 [shape = 'u8[131072]{0}', space=vmem, size = 0x20000, scoped, tag = 'input window, operand 3']
    #allocation9 [shape = 's32[2]{0}', space=sflag, size = 0x8, scoped, tag = 'scoped memory for tpu_custom_call.1']
    #allocation10 [shape = 'u8[131072]{0}', space=vmem, size = 0x20000, scoped, tag = 'output window, operand 0']
    %9 = vsyncpa [#allocation3], 0
    %s10 = scalar_lea.sflag [#allocation3], 1
    %11 = vsyncpa %s10, 0
    %12 = vsyncpa [#allocation6], 0
    %s13 = scalar_lea.sflag [#allocation6], 1
    %14 = vsyncpa %s13, 0
    %15 = vsyncpa [#allocation9], 0
    %s16 = scalar_lea.sflag [#allocation9], 1
    %17 = vsyncpa %s16, 0
    %18 = vsyncpa [#allocation4], 0
    %s19 = scalar_lea.sflag [#allocation4], 1
    %20 = vsyncpa %s19, 0
    loop: start=0, step=1, limit=4
    $region2: #{tpu_custom_call.1} parent=1 // loop_pre_header
      _
    $region3: #{tpu_custom_call.1} parent=1 // loop_header
      %s22 = sphi 0, %s26
      %p23 = scmp.ge.s32.totalorder %s22, 4
      %s32 = sphi 0, %s34
      %s35 = sphi 0, %s32
      %s36 = sphi 0, %s35
      %s52 = sphi 0, %s36
      %s58 = sphi 0, %s60
      %s61 = sphi 0, %s58
      %s62 = sphi 0, %s61
      %s78 = sphi 0, %s62
      %s84 = sphi 0, %s86
      %s87 = sphi 0, %s84
      %s88 = sphi 0, %s87
      %s104 = sphi 0, %s88
      %s110 = sphi 0, %s112
      %s113 = sphi 0, %s110
      %s114 = sphi 0, %s113
      %s130 = sphi 0, %s114
      %s136 = sphi 0, %s138
      %s139 = sphi 0, %s136
      %s140 = sphi 0, %s139
      %s156 = sphi 0, %s140
    $region4: #{tpu_custom_call.1} parent=1 // loop_header_branch
      %25 = sbr.rel (%p23) target = $region8
    $region5: #{tpu_custom_call.1} parent=1 // loop_body
      %s27 = ssub.s32 %s22, 1
      %s28 = ssub.s32 %s22, 2
      %s29 = sadd.s32 %s22, 1
      %s30 = ssub.s32 %s22, %s29
      %p31 = scmp.eq.s32.totalorder %s30, 0
      %s33 = sadd.s32 %s32, 1
      %s34 = scalar_select %p31, %s32, %s33
      %p37 = pneg %p31
      %p38 = scmp.eq.s32.totalorder %s22, 1
      %p39 = por %p37, %p38
      %p40 = scmp.ne.s32.totalorder %s32, %s35
      %p41 = scmp.eq.s32.totalorder %s22, 0
      %p42 = por %p40, %p41
      %p43 = scmp.ne.s32.totalorder %s32, %s35
      %p44 = scmp.eq.s32.totalorder %s27, 1
      %p45 = por %p43, %p44
      %p46 = scmp.ne.s32.totalorder %s35, %s36
      %p47 = scmp.eq.s32.totalorder %s27, 0
      %p48 = por %p46, %p47
      %p49 = scmp.ne.s32.totalorder %s35, %s36
      %p50 = scmp.eq.s32.totalorder %s28, 1
      %p51 = por %p49, %p50
      %p53 = scmp.ne.s32.totalorder %s36, %s52
      %p54 = scmp.eq.s32.totalorder %s28, 0
      %p55 = por %p53, %p54
      %s56 = ssub.s32 %s22, %s29
      %p57 = scmp.eq.s32.totalorder %s56, 0
      %s59 = sadd.s32 %s58, 1
      %s60 = scalar_select %p57, %s58, %s59
      %p63 = pneg %p57
      %p64 = scmp.eq.s32.totalorder %s22, 1
      %p65 = por %p63, %p64
      %p66 = scmp.ne.s32.totalorder %s58, %s61
      %p67 = scmp.eq.s32.totalorder %s22, 0
      %p68 = por %p66, %p67
      %p69 = scmp.ne.s32.totalorder %s58, %s61
      %p70 = scmp.eq.s32.totalorder %s27, 1
      %p71 = por %p69, %p70
      %p72 = scmp.ne.s32.totalorder %s61, %s62
      %p73 = scmp.eq.s32.totalorder %s27, 0
      %p74 = por %p72, %p73
      %p75 = scmp.ne.s32.totalorder %s61, %s62
      %p76 = scmp.eq.s32.totalorder %s28, 1
      %p77 = por %p75, %p76
      %p79 = scmp.ne.s32.totalorder %s62, %s78
      %p80 = scmp.eq.s32.totalorder %s28, 0
      %p81 = por %p79, %p80
      %s82 = ssub.s32 %s22, %s29
      %p83 = scmp.eq.s32.totalorder %s82, 0
      %s85 = sadd.s32 %s84, 1
      %s86 = scalar_select %p83, %s84, %s85
      %p89 = pneg %p83
      %p90 = scmp.eq.s32.totalorder %s22, 1
      %p91 = por %p89, %p90
      %p92 = scmp.ne.s32.totalorder %s84, %s87
      %p93 = scmp.eq.s32.totalorder %s22, 0
      %p94 = por %p92, %p93
      %p95 = scmp.ne.s32.totalorder %s84, %s87
      %p96 = scmp.eq.s32.totalorder %s27, 1
      %p97 = por %p95, %p96
      %p98 = scmp.ne.s32.totalorder %s87, %s88
      %p99 = scmp.eq.s32.totalorder %s27, 0
      %p100 = por %p98, %p99
      %p101 = scmp.ne.s32.totalorder %s87, %s88
      %p102 = scmp.eq.s32.totalorder %s28, 1
      %p103 = por %p101, %p102
      %p105 = scmp.ne.s32.totalorder %s88, %s104
      %p106 = scmp.eq.s32.totalorder %s28, 0
      %p107 = por %p105, %p106
      %s108 = ssub.s32 %s22, %s29
      %p109 = scmp.eq.s32.totalorder %s108, 0
      %s111 = sadd.s32 %s110, 1
      %s112 = scalar_select %p109, %s110, %s111
      %p115 = pneg %p109
      %p116 = scmp.eq.s32.totalorder %s22, 1
      %p117 = por %p115, %p116
      %p118 = scmp.ne.s32.totalorder %s110, %s113
      %p119 = scmp.eq.s32.totalorder %s22, 0
      %p120 = por %p118, %p119
      %p121 = scmp.ne.s32.totalorder %s110, %s113
      %p122 = scmp.eq.s32.totalorder %s27, 1
      %p123 = por %p121, %p122
      %p124 = scmp.ne.s32.totalorder %s113, %s114
      %p125 = scmp.eq.s32.totalorder %s27, 0
      %p126 = por %p124, %p125
      %p127 = scmp.ne.s32.totalorder %s113, %s114
      %p128 = scmp.eq.s32.totalorder %s28, 1
      %p129 = por %p127, %p128
      %p131 = scmp.ne.s32.totalorder %s114, %s130
      %p132 = scmp.eq.s32.totalorder %s28, 0
      %p133 = por %p131, %p132
      %s134 = ssub.s32 %s22, %s29
      %p135 = scmp.eq.s32.totalorder %s134, 0
      %s137 = sadd.s32 %s136, 1
      %s138 = scalar_select %p135, %s136, %s137
      %p141 = pneg %p135
      %p142 = scmp.eq.s32.totalorder %s22, 1
      %p143 = por %p141, %p142
      %p144 = scmp.ne.s32.totalorder %s136, %s139
      %p145 = scmp.eq.s32.totalorder %s22, 0
      %p146 = por %p144, %p145
      %p147 = scmp.ne.s32.totalorder %s136, %s139
      %p148 = scmp.eq.s32.totalorder %s27, 1
      %p149 = por %p147, %p148
      %p150 = scmp.ne.s32.totalorder %s139, %s140
      %p151 = scmp.eq.s32.totalorder %s27, 0
      %p152 = por %p150, %p151
      %p153 = scmp.ne.s32.totalorder %s139, %s140
      %p154 = scmp.eq.s32.totalorder %s28, 1
      %p155 = por %p153, %p154
      %p157 = scmp.ne.s32.totalorder %s140, %s156
      %p158 = scmp.eq.s32.totalorder %s28, 0
      %p159 = por %p157, %p158
      %p160 = scmp.le.s32.totalorder 1, %s22
      %p161 = scmp.lt.s32.totalorder %s22, 3
      %p162 = pnand %p160, %p161
      %p163 = pneg %p162
      // Predicated region
      $region9: #{tpu_custom_call.1} parent=5 // pred_check
        _
      $region10: #{tpu_custom_call.1} parent=5 // pred_check_branch
        %165 = sbr.rel (%p162) target = $region12
      $region11: #{tpu_custom_call.1} parent=5 // pred_region
        %s166 = ssub.s32 %s22, 1
      $region12: #{tpu_custom_call.1} parent=5 // pred_fallthru
        _
      %p167 = scmp.lt.s32.totalorder %s22, 2
      // Predicated region
      $region13: #{tpu_custom_call.1} parent=5 // pred_check
        %p168 = pneg %p167
      $region14: #{tpu_custom_call.1} parent=5 // pred_check_branch
        %170 = sbr.rel (%p168) target = $region16
      $region15: #{tpu_custom_call.1} parent=5 // pred_region
        // Predicated region
        $region17: #{tpu_custom_call.1} parent=15 // pred_check
          %p171 = pneg %p42
        $region18: #{tpu_custom_call.1} parent=15 // pred_check_branch
          %173 = sbr.rel (%p171) target = $region20
        $region19: #{tpu_custom_call.1} parent=15 // pred_region
          %s174 = sand.u32 %s32, 1
          %s175 = scalar_lea.sflag [#allocation3], %s174
          %s176 = sand.u32 %s32, 1
          %s177 = smul.addr %s176, 128
          %s178 = scalar_lea.vmem [#allocation2], %s177
          %s180 = ssub.s32 2048, 2048
          %181 = vsyncadd %s175, %s180
          %s182 = smul.addr %s22, 16
          %s183 = smul.addr %s182, 128
          %s184 = scalar_lea.hbm %s0, %s183
          %s185 = sshll.u32 %s178, 4
          %s186 = int_to_ptr.vmem [resolvable:$true] %s185
          %191 = dma.hbm_to_vmem [thread:$0]  %s184, 2048, %s186, %s175, 128, 128, 8
        $region20: #{tpu_custom_call.1} parent=15 // pred_fallthru
          _
        // Predicated region
        $region21: #{tpu_custom_call.1} parent=15 // pred_check
          %p192 = pneg %p68
        $region22: #{tpu_custom_call.1} parent=15 // pred_check_branch
          %194 = sbr.rel (%p192) target = $region24
        $region23: #{tpu_custom_call.1} parent=15 // pred_region
          %s195 = sand.u32 %s22, 1
          %s196 = scalar_lea.sflag [#allocation6], %s195
          %s197 = sand.u32 %s58, 1
          %s198 = smul.addr %s197, 128
          %s199 = scalar_lea.vmem [#allocation5], %s198
          %s201 = ssub.s32 2048, 2048
          %202 = vsyncadd %s196, %s201
          %s203 = smul.addr %s22, 16
          %s204 = smul.addr %s203, 128
          %s205 = scalar_lea.hbm %s1, %s204
          %s206 = sshll.u32 %s199, 4
          %s207 = int_to_ptr.vmem [resolvable:$true] %s206
          %212 = dma.hbm_to_vmem [thread:$0]  %s205, 2048, %s207, %s196, 128, 128, 8
        $region24: #{tpu_custom_call.1} parent=15 // pred_fallthru
          _
        // Predicated region
        $region25: #{tpu_custom_call.1} parent=15 // pred_check
          %p213 = pneg %p94
        $region26: #{tpu_custom_call.1} parent=15 // pred_check_branch
          %215 = sbr.rel (%p213) target = $region28
        $region27: #{tpu_custom_call.1} parent=15 // pred_region
          %s216 = sand.u32 %s22, 1
          %s217 = scalar_lea.sflag [#allocation6], %s216
          %s218 = sand.u32 %s84, 1
          %s219 = smul.addr %s218, 128
          %s220 = scalar_lea.vmem [#allocation7], %s219
          %s222 = ssub.s32 2048, 2048
          %223 = vsyncadd %s217, %s222
          %s224 = smul.addr %s22, 16
          %s225 = smul.addr %s224, 128
          %s226 = scalar_lea.hbm %s2, %s225
          %s227 = sshll.u32 %s220, 4
          %s228 = int_to_ptr.vmem [resolvable:$true] %s227
          %233 = dma.hbm_to_vmem [thread:$0]  %s226, 2048, %s228, %s217, 128, 128, 8
        $region28: #{tpu_custom_call.1} parent=15 // pred_fallthru
          _
        // Predicated region
        $region29: #{tpu_custom_call.1} parent=15 // pred_check
          %p234 = pneg %p120
        $region30: #{tpu_custom_call.1} parent=15 // pred_check_branch
          %236 = sbr.rel (%p234) target = $region32
        $region31: #{tpu_custom_call.1} parent=15 // pred_region
          %s237 = sand.u32 %s110, 1
          %s238 = scalar_lea.sflag [#allocation9], %s237
          %s239 = sand.u32 %s110, 1
          %s240 = smul.addr %s239, 128
          %s241 = scalar_lea.vmem [#allocation8], %s240
          %s243 = ssub.s32 2048, 2048
          %244 = vsyncadd %s238, %s243
          %s245 = smul.addr %s22, 16
          %s246 = smul.addr %s245, 128
          %s247 = scalar_lea.hbm %s3, %s246
          %s248 = sshll.u32 %s241, 4
          %s249 = int_to_ptr.vmem [resolvable:$true] %s248
          %254 = dma.hbm_to_vmem [thread:$0]  %s247, 2048, %s249, %s238, 128, 128, 8
        $region32: #{tpu_custom_call.1} parent=15 // pred_fallthru
          _
      $region16: #{tpu_custom_call.1} parent=5 // pred_fallthru
        _
      %p255 = scmp.le.s32.totalorder 1, %s22
      %p256 = scmp.lt.s32.totalorder %s22, 3
      %p257 = pnand %p255, %p256
      %p258 = pneg %p257
      // Predicated region
      $region33: #{tpu_custom_call.1} parent=5 // pred_check
        _
      $region34: #{tpu_custom_call.1} parent=5 // pred_check_branch
        %260 = sbr.rel (%p257) target = $region36
      $region35: #{tpu_custom_call.1} parent=5 // pred_region
        %s261 = ssub.s32 %s22, 1
        %s262 = sand.u32 %s35, 1
        %s263 = scalar_lea.sflag [#allocation3], %s262
        %s264 = sand.u32 %s35, 1
        %s265 = smul.addr %s264, 128
        %s266 = scalar_lea.vmem [#allocation2], %s265
        // Predicated region
        $region37: #{tpu_custom_call.1} parent=35 // pred_check
          %p267 = pneg %p48
        $region38: #{tpu_custom_call.1} parent=35 // pred_check_branch
          %269 = sbr.rel (%p267) target = $region40
        $region39: #{tpu_custom_call.1} parent=35 // pred_region
          %270 = dma.done %s263, 2048
        $region40: #{tpu_custom_call.1} parent=35 // pred_fallthru
          _
        %s271 = sand.u32 %s27, 1
        %s272 = scalar_lea.sflag [#allocation6], %s271
        %s273 = sand.u32 %s61, 1
        %s274 = smul.addr %s273, 128
        %s275 = scalar_lea.vmem [#allocation5], %s274
        // Predicated region
        $region41: #{tpu_custom_call.1} parent=35 // pred_check
          %p276 = pneg %p74
        $region42: #{tpu_custom_call.1} parent=35 // pred_check_branch
          %278 = sbr.rel (%p276) target = $region44
        $region43: #{tpu_custom_call.1} parent=35 // pred_region
          %279 = dma.done %s272, 2048
        $region44: #{tpu_custom_call.1} parent=35 // pred_fallthru
          _
        %s280 = sand.u32 %s27, 1
        %s281 = scalar_lea.sflag [#allocation6], %s280
        %s282 = sand.u32 %s87, 1
        %s283 = smul.addr %s282, 128
        %s284 = scalar_lea.vmem [#allocation7], %s283
        // Predicated region
        $region45: #{tpu_custom_call.1} parent=35 // pred_check
          %p285 = pneg %p100
        $region46: #{tpu_custom_call.1} parent=35 // pred_check_branch
          %287 = sbr.rel (%p285) target = $region48
        $region47: #{tpu_custom_call.1} parent=35 // pred_region
          %288 = dma.done %s281, 2048
        $region48: #{tpu_custom_call.1} parent=35 // pred_fallthru
          _
        %s289 = sand.u32 %s113, 1
        %s290 = scalar_lea.sflag [#allocation9], %s289
        %s291 = sand.u32 %s113, 1
        %s292 = smul.addr %s291, 128
        %s293 = scalar_lea.vmem [#allocation8], %s292
        // Predicated region
        $region49: #{tpu_custom_call.1} parent=35 // pred_check
          %p294 = pneg %p126
        $region50: #{tpu_custom_call.1} parent=35 // pred_check_branch
          %296 = sbr.rel (%p294) target = $region52
        $region51: #{tpu_custom_call.1} parent=35 // pred_region
          %297 = dma.done %s290, 2048
        $region52: #{tpu_custom_call.1} parent=35 // pred_fallthru
          _
        %s298 = sand.u32 %s35, 1
        %s299 = scalar_lea.sflag [#allocation3], %s298
        %s300 = sand.u32 %s35, 1
        %s301 = smul.addr %s300, 128
        %s302 = scalar_lea.vmem [#allocation2], %s301
        %p303 = pneg %p48
        %p304 = pneg %p45
        %s305 = sand.u32 %s27, 1
        %s306 = scalar_lea.sflag [#allocation6], %s305
        %s307 = sand.u32 %s61, 1
        %s308 = smul.addr %s307, 128
        %s309 = scalar_lea.vmem [#allocation5], %s308
        %p310 = pneg %p74
        %p311 = pneg %p71
        %s312 = sand.u32 %s27, 1
        %s313 = scalar_lea.sflag [#allocation6], %s312
        %s314 = sand.u32 %s87, 1
        %s315 = smul.addr %s314, 128
        %s316 = scalar_lea.vmem [#allocation7], %s315
        %p317 = pneg %p100
        %p318 = pneg %p97
        %s319 = sand.u32 %s113, 1
        %s320 = scalar_lea.sflag [#allocation9], %s319
        %s321 = sand.u32 %s113, 1
        %s322 = smul.addr %s321, 128
        %s323 = scalar_lea.vmem [#allocation8], %s322
        %p324 = pneg %p126
        %p325 = pneg %p123
        %p326 = pneg %p152
        %p327 = pneg %p149
        %s328 = sand.u32 %s139, 1
        %s329 = scalar_lea.sflag [#allocation4], %s328
        %s330 = sand.u32 %s139, 1
        %s331 = smul.addr %s330, 128
        %s332 = scalar_lea.vmem [#allocation10], %s331
        %v334 = vld [vmem:[%s293] sm:$0xff]
        %v335 = vld [vmem:[%s293 + $0x8] sm:$0xff]
        %v336 = vld [vmem:[%s293 + $0x10] sm:$0xff]
        %v337 = vld [vmem:[%s293 + $0x18] sm:$0xff]
        %v338 = vld [vmem:[%s293 + $0x20] sm:$0xff]
        %v339 = vld [vmem:[%s293 + $0x28] sm:$0xff]
        %v340 = vld [vmem:[%s293 + $0x30] sm:$0xff]
        %v341 = vld [vmem:[%s293 + $0x38] sm:$0xff]
        %v342 = vld [vmem:[%s293 + $0x40] sm:$0xff]
        %v343 = vld [vmem:[%s293 + $0x48] sm:$0xff]
        %v344 = vld [vmem:[%s293 + $0x50] sm:$0xff]
        %v345 = vld [vmem:[%s293 + $0x58] sm:$0xff]
        %v346 = vld [vmem:[%s293 + $0x60] sm:$0xff]
        %v347 = vld [vmem:[%s293 + $0x68] sm:$0xff]
        %v348 = vld [vmem:[%s293 + $0x70] sm:$0xff]
        %v349 = vld [vmem:[%s293 + $0x78] sm:$0xff]
        %v350 = vld [vmem:[%s266] sm:$0xff]
        %v351 = vld [vmem:[%s266 + $0x8] sm:$0xff]
        %v352 = vld [vmem:[%s266 + $0x10] sm:$0xff]
        %v353 = vld [vmem:[%s266 + $0x18] sm:$0xff]
        %v354 = vld [vmem:[%s266 + $0x20] sm:$0xff]
        %v355 = vld [vmem:[%s266 + $0x28] sm:$0xff]
        %v356 = vld [vmem:[%s266 + $0x30] sm:$0xff]
        %v357 = vld [vmem:[%s266 + $0x38] sm:$0xff]
        %v358 = vld [vmem:[%s266 + $0x40] sm:$0xff]
        %v359 = vld [vmem:[%s266 + $0x48] sm:$0xff]
        %v360 = vld [vmem:[%s266 + $0x50] sm:$0xff]
        %v361 = vld [vmem:[%s266 + $0x58] sm:$0xff]
        %v362 = vld [vmem:[%s266 + $0x60] sm:$0xff]
        %v363 = vld [vmem:[%s266 + $0x68] sm:$0xff]
        %v364 = vld [vmem:[%s266 + $0x70] sm:$0xff]
        %v365 = vld [vmem:[%s266 + $0x78] sm:$0xff]
        %v366 = vpack.c.bf16 %v351, %v350
        %v367 = vpack.c.bf16 %v353, %v352
        %v368 = vpack.c.bf16 %v355, %v354
        %v369 = vpack.c.bf16 %v357, %v356
        %v370 = vpack.c.bf16 %v359, %v358
        %v371 = vpack.c.bf16 %v361, %v360
        %v372 = vpack.c.bf16 %v363, %v362
        %v373 = vpack.c.bf16 %v365, %v364
        %v374 = vld [vmem:[%s275] sm:$0xff]
        %v375 = vld [vmem:[%s275 + $0x8] sm:$0xff]
        %v376 = vld [vmem:[%s275 + $0x10] sm:$0xff]
        %v377 = vld [vmem:[%s275 + $0x18] sm:$0xff]
        %v378 = vld [vmem:[%s275 + $0x20] sm:$0xff]
        %v379 = vld [vmem:[%s275 + $0x28] sm:$0xff]
        %v380 = vld [vmem:[%s275 + $0x30] sm:$0xff]
        %v381 = vld [vmem:[%s275 + $0x38] sm:$0xff]
        %v382 = vld [vmem:[%s275 + $0x40] sm:$0xff]
        %v383 = vld [vmem:[%s275 + $0x48] sm:$0xff]
        %v384 = vld [vmem:[%s275 + $0x50] sm:$0xff]
        %v385 = vld [vmem:[%s275 + $0x58] sm:$0xff]
        %v386 = vld [vmem:[%s275 + $0x60] sm:$0xff]
        %v387 = vld [vmem:[%s275 + $0x68] sm:$0xff]
        %v388 = vld [vmem:[%s275 + $0x70] sm:$0xff]
        %v389 = vld [vmem:[%s275 + $0x78] sm:$0xff]
        %v390 = vpack.c.bf16 %v375, %v374
        %v391 = vpack.c.bf16 %v377, %v376
        %v392 = vpack.c.bf16 %v379, %v378
        %v393 = vpack.c.bf16 %v381, %v380
        %v394 = vpack.c.bf16 %v383, %v382
        %v395 = vpack.c.bf16 %v385, %v384
        %v396 = vpack.c.bf16 %v387, %v386
        %v397 = vpack.c.bf16 %v389, %v388
        %v398 = vld [vmem:[%s284] sm:$0xff]
        %v399 = vld [vmem:[%s284 + $0x8] sm:$0xff]
        %v400 = vld [vmem:[%s284 + $0x10] sm:$0xff]
        %v401 = vld [vmem:[%s284 + $0x18] sm:$0xff]
        %v402 = vld [vmem:[%s284 + $0x20] sm:$0xff]
        %v403 = vld [vmem:[%s284 + $0x28] sm:$0xff]
        %v404 = vld [vmem:[%s284 + $0x30] sm:$0xff]
        %v405 = vld [vmem:[%s284 + $0x38] sm:$0xff]
        %v406 = vld [vmem:[%s284 + $0x40] sm:$0xff]
        %v407 = vld [vmem:[%s284 + $0x48] sm:$0xff]
        %v408 = vld [vmem:[%s284 + $0x50] sm:$0xff]
        %v409 = vld [vmem:[%s284 + $0x58] sm:$0xff]
        %v410 = vld [vmem:[%s284 + $0x60] sm:$0xff]
        %v411 = vld [vmem:[%s284 + $0x68] sm:$0xff]
        %v412 = vld [vmem:[%s284 + $0x70] sm:$0xff]
        %v413 = vld [vmem:[%s284 + $0x78] sm:$0xff]
        %v414 = vpack.c.bf16 %v399, %v398
        %v415 = vpack.c.bf16 %v401, %v400
        %v416 = vpack.c.bf16 %v403, %v402
        %v417 = vpack.c.bf16 %v405, %v404
        %v418 = vpack.c.bf16 %v407, %v406
        %v419 = vpack.c.bf16 %v409, %v408
        %v420 = vpack.c.bf16 %v411, %v410
        %v421 = vpack.c.bf16 %v413, %v412
        %vm422 = vcmask 261120
        %v424 = vsel %vm422, %v366, 0
        %v427 = vsel %vm422, %v367, 0
        %v430 = vsel %vm422, %v368, 0
        %v433 = vsel %vm422, %v369, 0
        %v436 = vsel %vm422, %v370, 0
        %v439 = vsel %vm422, %v371, 0
        %v442 = vsel %vm422, %v372, 0
        %v445 = vsel %vm422, %v373, 0
        %v448 = vsel %vm422, %v390, 0
        %v451 = vsel %vm422, %v391, 0
        %v454 = vsel %vm422, %v392, 0
        %v457 = vsel %vm422, %v393, 0
        %v460 = vsel %vm422, %v394, 0
        %v463 = vsel %vm422, %v395, 0
        %v466 = vsel %vm422, %v396, 0
        %v469 = vsel %vm422, %v397, 0
        %471 = vmatprep.subr.bf16.mxu0 0
        %472 = vmatpush1.bf16.xpose.msra.mxu0 %v469
        %473 = vmatprep.subr.bf16.mxu0 0
        %474 = vmatpush1.bf16.xpose.msra.mxu0 %v466
        %475 = vmatprep.subr.bf16.mxu0 0
        %476 = vmatpush1.bf16.xpose.msra.mxu0 %v463
        %477 = vmatprep.subr.bf16.mxu0 0
        %478 = vmatpush1.bf16.xpose.msra.mxu0 %v460
        %479 = vmatprep.subr.bf16.mxu0 0
        %480 = vmatpush1.bf16.xpose.msra.mxu0 %v457
        %481 = vmatprep.subr.bf16.mxu0 0
        %482 = vmatpush1.bf16.xpose.msra.mxu0 %v454
        %483 = vmatprep.subr.bf16.mxu0 0
        %484 = vmatpush1.bf16.xpose.msra.mxu0 %v451
        %485 = vmatprep.subr.bf16.mxu0 0
        %486 = vmatpush1.bf16.xpose.msra.mxu0 %v448
        %487 = vmatprep.subr.bf16.mxu0 0
        %488 = vmatpush2.bf16.xpose.msra.mxu0 0
        %489 = vmatprep.subr.bf16.mxu0 0
        %490 = vmatpush2.bf16.xpose.msra.mxu0 0
        %491 = vmatprep.subr.bf16.mxu0 0
        %492 = vmatpush2.bf16.xpose.msra.mxu0 0
        %493 = vmatprep.subr.bf16.mxu0 0
        %494 = vmatpush2.bf16.xpose.msra.mxu0 0
        %495 = vmatprep.subr.bf16.mxu0 0
        %496 = vmatpush2.bf16.xpose.msra.mxu0 0
        %497 = vmatprep.subr.bf16.mxu0 0
        %498 = vmatpush2.bf16.xpose.msra.mxu0 0
        %499 = vmatprep.subr.bf16.mxu0 0
        %500 = vmatpush2.bf16.xpose.msra.mxu0 0
        %501 = vmatprep.subr.bf16.mxu0 0
        %502 = vmatpush2.bf16.xpose.msra.mxu0 0
        %503 = vmatprep.mubr.bf16.mxu0 0
        %504 = vmatmul.mubr.bf16.gmra.mxu0 %v424
        %v505 = vpop.f32.mrf.mxu0
        %v506 = vadd.f32 0.0, %v505
        %v507 = vpop.f32.mrf.mxu0
        %v508 = vpop.f32.mrf.mxu0
        %v509 = vadd.f32 0.0, %v508
        %v510 = vpop.f32.mrf.mxu0
        %511 = vmatprep.mubr.bf16.mxu0 0
        %512 = vmatmul.mubr.bf16.gmra.mxu0 %v427
        %v513 = vpop.f32.mrf.mxu0
        %v514 = vadd.f32 0.0, %v513
        %v515 = vpop.f32.mrf.mxu0
        %v516 = vpop.f32.mrf.mxu0
        %v517 = vadd.f32 0.0, %v516
        %v518 = vpop.f32.mrf.mxu0
        %519 = vmatprep.mubr.bf16.mxu0 0
        %520 = vmatmul.mubr.bf16.gmra.mxu0 %v430
        %v521 = vpop.f32.mrf.mxu0
        %v522 = vadd.f32 0.0, %v521
        %v523 = vpop.f32.mrf.mxu0
        %v524 = vpop.f32.mrf.mxu0
        %v525 = vadd.f32 0.0, %v524
        %v526 = vpop.f32.mrf.mxu0
        %527 = vmatprep.mubr.bf16.mxu0 0
        %528 = vmatmul.mubr.bf16.gmra.mxu0 %v433
        %v529 = vpop.f32.mrf.mxu0
        %v530 = vadd.f32 0.0, %v529
        %v531 = vpop.f32.mrf.mxu0
        %v532 = vpop.f32.mrf.mxu0
        %v533 = vadd.f32 0.0, %v532
        %v534 = vpop.f32.mrf.mxu0
        %535 = vmatprep.mubr.bf16.mxu0 0
        %536 = vmatmul.mubr.bf16.gmra.mxu0 %v436
        %v537 = vpop.f32.mrf.mxu0
        %v538 = vadd.f32 0.0, %v537
        %v539 = vpop.f32.mrf.mxu0
        %v540 = vpop.f32.mrf.mxu0
        %v541 = vadd.f32 0.0, %v540
        %v542 = vpop.f32.mrf.mxu0
        %543 = vmatprep.mubr.bf16.mxu0 0
        %544 = vmatmul.mubr.bf16.gmra.mxu0 %v439
        %v545 = vpop.f32.mrf.mxu0
        %v546 = vadd.f32 0.0, %v545
        %v547 = vpop.f32.mrf.mxu0
        %v548 = vpop.f32.mrf.mxu0
        %v549 = vadd.f32 0.0, %v548
        %v550 = vpop.f32.mrf.mxu0
        %551 = vmatprep.mubr.bf16.mxu0 0
        %552 = vmatmul.mubr.bf16.gmra.mxu0 %v442
        %v553 = vpop.f32.mrf.mxu0
        %v554 = vadd.f32 0.0, %v553
        %v555 = vpop.f32.mrf.mxu0
        %v556 = vpop.f32.mrf.mxu0
        %v557 = vadd.f32 0.0, %v556
        %v558 = vpop.f32.mrf.mxu0
        %559 = vmatprep.mubr.bf16.mxu0 0
        %560 = vmatmul.mubr.bf16.gmra.mxu0 %v445
        %v561 = vpop.f32.mrf.mxu0
        %v562 = vadd.f32 0.0, %v561
        %v563 = vpop.f32.mrf.mxu0
        %v564 = vpop.f32.mrf.mxu0
        %v565 = vadd.f32 0.0, %v564
        %v566 = vpop.f32.mrf.mxu0
        %567 = vdwg.mxu0
        %v568 = vmul.f32 %v506, 0.17677669
        %v569 = vmul.f32 %v509, 0.17677669
        %v570 = vmul.f32 %v514, 0.17677669
        %v571 = vmul.f32 %v517, 0.17677669
        %v572 = vmul.f32 %v522, 0.17677669
        %v573 = vmul.f32 %v525, 0.17677669
        %v574 = vmul.f32 %v530, 0.17677669
        %v575 = vmul.f32 %v533, 0.17677669
        %v576 = vmul.f32 %v538, 0.17677669
        %v577 = vmul.f32 %v541, 0.17677669
        %v578 = vmul.f32 %v546, 0.17677669
        %v579 = vmul.f32 %v549, 0.17677669
        %v580 = vmul.f32 %v554, 0.17677669
        %v581 = vmul.f32 %v557, 0.17677669
        %v582 = vmul.f32 %v562, 0.17677669
        %v583 = vmul.f32 %v565, 0.17677669
        %v584 = vadd.f32 %v568, %v334
        %v585 = vadd.f32 %v569, %v335
        %v586 = vadd.f32 %v570, %v336
        %v587 = vadd.f32 %v571, %v337
        %v588 = vadd.f32 %v572, %v338
        %v589 = vadd.f32 %v573, %v339
        %v590 = vadd.f32 %v574, %v340
        %v591 = vadd.f32 %v575, %v341
        %v592 = vadd.f32 %v576, %v342
        %v593 = vadd.f32 %v577, %v343
        %v594 = vadd.f32 %v578, %v344
        %v595 = vadd.f32 %v579, %v345
        %v596 = vadd.f32 %v580, %v346
        %v597 = vadd.f32 %v581, %v347
        %v598 = vadd.f32 %v582, %v348
        %v599 = vadd.f32 %v583, %v349
        %600 = vmax.xlane.f32.xlu0 %v584
        %v601 = vpop.xlane.xlu0 %600
        %602 = vmax.xlane.f32.xlu0 %v585
        %v603 = vpop.xlane.xlu0 %602
        %604 = vmax.xlane.f32.xlu0 %v586
        %v605 = vpop.xlane.xlu0 %604
        %606 = vmax.xlane.f32.xlu0 %v587
        %v607 = vpop.xlane.xlu0 %606
        %608 = vmax.xlane.f32.xlu0 %v588
        %v609 = vpop.xlane.xlu0 %608
        %610 = vmax.xlane.f32.xlu0 %v589
        %v611 = vpop.xlane.xlu0 %610
        %612 = vmax.xlane.f32.xlu0 %v590
        %v613 = vpop.xlane.xlu0 %612
        %614 = vmax.xlane.f32.xlu0 %v591
        %v615 = vpop.xlane.xlu0 %614
        %616 = vmax.xlane.f32.xlu0 %v592
        %v617 = vpop.xlane.xlu0 %616
        %618 = vmax.xlane.f32.xlu0 %v593
        %v619 = vpop.xlane.xlu0 %618
        %620 = vmax.xlane.f32.xlu0 %v594
        %v621 = vpop.xlane.xlu0 %620
        %622 = vmax.xlane.f32.xlu0 %v595
        %v623 = vpop.xlane.xlu0 %622
        %624 = vmax.xlane.f32.xlu0 %v596
        %v625 = vpop.xlane.xlu0 %624
        %626 = vmax.xlane.f32.xlu0 %v597
        %v627 = vpop.xlane.xlu0 %626
        %628 = vmax.xlane.f32.xlu0 %v598
        %v629 = vpop.xlane.xlu0 %628
        %630 = vmax.xlane.f32.xlu0 %v599
        %v631 = vpop.xlane.xlu0 %630
        %v632 = vsub.f32 %v584, %v601
        %v633 = vsub.f32 %v585, %v603
        %v634 = vsub.f32 %v586, %v605
        %v635 = vsub.f32 %v587, %v607
        %v636 = vsub.f32 %v588, %v609
        %v637 = vsub.f32 %v589, %v611
        %v638 = vsub.f32 %v590, %v613
        %v639 = vsub.f32 %v591, %v615
        %v640 = vsub.f32 %v592, %v617
        %v641 = vsub.f32 %v593, %v619
        %v642 = vsub.f32 %v594, %v621
        %v643 = vsub.f32 %v595, %v623
        %v644 = vsub.f32 %v596, %v625
        %v645 = vsub.f32 %v597, %v627
        %v646 = vsub.f32 %v598, %v629
        %v647 = vsub.f32 %v599, %v631
        %v648 = vmul.f32 %v632, 1.442695
        %v649 = vpow.pop %v648
        %v650 = vmul.f32 %v633, 1.442695
        %v651 = vpow.pop %v650
        %v652 = vmul.f32 %v634, 1.442695
        %v653 = vpow.pop %v652
        %v654 = vmul.f32 %v635, 1.442695
        %v655 = vpow.pop %v654
        %v656 = vmul.f32 %v636, 1.442695
        %v657 = vpow.pop %v656
        %v658 = vmul.f32 %v637, 1.442695
        %v659 = vpow.pop %v658
        %v660 = vmul.f32 %v638, 1.442695
        %v661 = vpow.pop %v660
        %v662 = vmul.f32 %v639, 1.442695
        %v663 = vpow.pop %v662
        %v664 = vmul.f32 %v640, 1.442695
        %v665 = vpow.pop %v664
        %v666 = vmul.f32 %v641, 1.442695
        %v667 = vpow.pop %v666
        %v668 = vmul.f32 %v642, 1.442695
        %v669 = vpow.pop %v668
        %v670 = vmul.f32 %v643, 1.442695
        %v671 = vpow.pop %v670
        %v672 = vmul.f32 %v644, 1.442695
        %v673 = vpow.pop %v672
        %v674 = vmul.f32 %v645, 1.442695
        %v675 = vpow.pop %v674
        %v676 = vmul.f32 %v646, 1.442695
        %v677 = vpow.pop %v676
        %v678 = vmul.f32 %v647, 1.442695
        %v679 = vpow.pop %v678
        %680 = vadd.xlane.f32.xlu0 %v649
        %v681 = vpop.xlane.xlu0 %680
        %682 = vadd.xlane.f32.xlu0 %v651
        %v683 = vpop.xlane.xlu0 %682
        %684 = vadd.xlane.f32.xlu0 %v653
        %v685 = vpop.xlane.xlu0 %684
        %686 = vadd.xlane.f32.xlu0 %v655
        %v687 = vpop.xlane.xlu0 %686
        %688 = vadd.xlane.f32.xlu0 %v657
        %v689 = vpop.xlane.xlu0 %688
        %690 = vadd.xlane.f32.xlu0 %v659
        %v691 = vpop.xlane.xlu0 %690
        %692 = vadd.xlane.f32.xlu0 %v661
        %v693 = vpop.xlane.xlu0 %692
        %694 = vadd.xlane.f32.xlu0 %v663
        %v695 = vpop.xlane.xlu0 %694
        %696 = vadd.xlane.f32.xlu0 %v665
        %v697 = vpop.xlane.xlu0 %696
        %698 = vadd.xlane.f32.xlu0 %v667
        %v699 = vpop.xlane.xlu0 %698
        %700 = vadd.xlane.f32.xlu0 %v669
        %v701 = vpop.xlane.xlu0 %700
        %702 = vadd.xlane.f32.xlu0 %v671
        %v703 = vpop.xlane.xlu0 %702
        %704 = vadd.xlane.f32.xlu0 %v673
        %v705 = vpop.xlane.xlu0 %704
        %706 = vadd.xlane.f32.xlu0 %v675
        %v707 = vpop.xlane.xlu0 %706
        %708 = vadd.xlane.f32.xlu0 %v677
        %v709 = vpop.xlane.xlu0 %708
        %710 = vadd.xlane.f32.xlu0 %v679
        %v711 = vpop.xlane.xlu0 %710
        %v712 = vrcp.pop %v681
        %v713 = vmul.f32 1.1111112, %v712
        %v714 = vrcp.pop %v683
        %v715 = vmul.f32 1.1111112, %v714
        %v716 = vrcp.pop %v685
        %v717 = vmul.f32 1.1111112, %v716
        %v718 = vrcp.pop %v687
        %v719 = vmul.f32 1.1111112, %v718
        %v720 = vrcp.pop %v689
        %v721 = vmul.f32 1.1111112, %v720
        %v722 = vrcp.pop %v691
        %v723 = vmul.f32 1.1111112, %v722
        %v724 = vrcp.pop %v693
        %v725 = vmul.f32 1.1111112, %v724
        %v726 = vrcp.pop %v695
        %v727 = vmul.f32 1.1111112, %v726
        %v728 = vrcp.pop %v697
        %v729 = vmul.f32 1.1111112, %v728
        %v730 = vrcp.pop %v699
        %v731 = vmul.f32 1.1111112, %v730
        %v732 = vrcp.pop %v701
        %v733 = vmul.f32 1.1111112, %v732
        %v734 = vrcp.pop %v703
        %v735 = vmul.f32 1.1111112, %v734
        %v736 = vrcp.pop %v705
        %v737 = vmul.f32 1.1111112, %v736
        %v738 = vrcp.pop %v707
        %v739 = vmul.f32 1.1111112, %v738
        %v740 = vrcp.pop %v709
        %v741 = vmul.f32 1.1111112, %v740
        %v742 = vrcp.pop %v711
        %v743 = vmul.f32 1.1111112, %v742
        %v744 = vmul.f32 %v649, %v713
        %v745 = vmul.f32 %v651, %v715
        %v746 = vmul.f32 %v653, %v717
        %v747 = vmul.f32 %v655, %v719
        %v748 = vmul.f32 %v657, %v721
        %v749 = vmul.f32 %v659, %v723
        %v750 = vmul.f32 %v661, %v725
        %v751 = vmul.f32 %v663, %v727
        %v752 = vmul.f32 %v665, %v729
        %v753 = vmul.f32 %v667, %v731
        %v754 = vmul.f32 %v669, %v733
        %v755 = vmul.f32 %v671, %v735
        %v756 = vmul.f32 %v673, %v737
        %v757 = vmul.f32 %v675, %v739
        %v758 = vmul.f32 %v677, %v741
        %v759 = vmul.f32 %v679, %v743
        %s760 = smul.u32 %s27, 2360317548
        %v761 = vlaneseq
        %v762 = vshrl.u32 %v761, 7
        %v763 = vadd.s32 %v762, 8
        %v764 = vadd.s32 %v762, 16
        %v765 = vadd.s32 %v762, 24
        %v766 = vadd.s32 %v762, 32
        %v767 = vadd.s32 %v762, 40
        %v768 = vadd.s32 %v762, 48
        %v769 = vadd.s32 %v762, 56
        %v770 = vadd.s32 %v762, 64
        %v771 = vadd.s32 %v762, 72
        %v772 = vadd.s32 %v762, 80
        %v773 = vadd.s32 %v762, 88
        %v774 = vadd.s32 %v762, 96
        %v775 = vadd.s32 %v762, 104
        %v776 = vadd.s32 %v762, 112
        %v777 = vadd.s32 %v762, 120
        %v778 = vlaneseq
        %v779 = vand.u32 %v778, 127
        %v780 = vmul.u32 %v762, 2654435769
        %v781 = vmul.u32 %v763, 2654435769
        %v782 = vmul.u32 %v764, 2654435769
        %v783 = vmul.u32 %v765, 2654435769
        %v784 = vmul.u32 %v766, 2654435769
        %v785 = vmul.u32 %v767, 2654435769
        %v786 = vmul.u32 %v768, 2654435769
        %v787 = vmul.u32 %v769, 2654435769
        %v788 = vmul.u32 %v770, 2654435769
        %v789 = vmul.u32 %v771, 2654435769
        %v790 = vmul.u32 %v772, 2654435769
        %v791 = vmul.u32 %v773, 2654435769
        %v792 = vmul.u32 %v774, 2654435769
        %v793 = vmul.u32 %v775, 2654435769
        %v794 = vmul.u32 %v776, 2654435769
        %v795 = vmul.u32 %v777, 2654435769
        %v796 = vstv %s760
        %v797 = vadd.s32 %v796, %v780
        %v798 = vadd.s32 %v796, %v781
        %v799 = vadd.s32 %v796, %v782
        %v800 = vadd.s32 %v796, %v783
        %v801 = vadd.s32 %v796, %v784
        %v802 = vadd.s32 %v796, %v785
        %v803 = vadd.s32 %v796, %v786
        %v804 = vadd.s32 %v796, %v787
        %v805 = vadd.s32 %v796, %v788
        %v806 = vadd.s32 %v796, %v789
        %v807 = vadd.s32 %v796, %v790
        %v808 = vadd.s32 %v796, %v791
        %v809 = vadd.s32 %v796, %v792
        %v810 = vadd.s32 %v796, %v793
        %v811 = vadd.s32 %v796, %v794
        %v812 = vadd.s32 %v796, %v795
        %v813 = vmul.u32 %v779, 2246822507
        %v814 = vadd.s32 %v797, %v813
        %v815 = vadd.s32 %v798, %v813
        %v816 = vadd.s32 %v799, %v813
        %v817 = vadd.s32 %v800, %v813
        %v818 = vadd.s32 %v801, %v813
        %v819 = vadd.s32 %v802, %v813
        %v820 = vadd.s32 %v803, %v813
        %v821 = vadd.s32 %v804, %v813
        %v822 = vadd.s32 %v805, %v813
        %v823 = vadd.s32 %v806, %v813
        %v824 = vadd.s32 %v807, %v813
        %v825 = vadd.s32 %v808, %v813
        %v826 = vadd.s32 %v809, %v813
        %v827 = vadd.s32 %v810, %v813
        %v828 = vadd.s32 %v811, %v813
        %v829 = vadd.s32 %v812, %v813
        %v830 = vshrl.u32 %v814, 16
        %v831 = vshrl.u32 %v815, 16
        %v832 = vshrl.u32 %v816, 16
        %v833 = vshrl.u32 %v817, 16
        %v834 = vshrl.u32 %v818, 16
        %v835 = vshrl.u32 %v819, 16
        %v836 = vshrl.u32 %v820, 16
        %v837 = vshrl.u32 %v821, 16
        %v838 = vshrl.u32 %v822, 16
        %v839 = vshrl.u32 %v823, 16
        %v840 = vshrl.u32 %v824, 16
        %v841 = vshrl.u32 %v825, 16
        %v842 = vshrl.u32 %v826, 16
        %v843 = vshrl.u32 %v827, 16
        %v844 = vshrl.u32 %v828, 16
        %v845 = vshrl.u32 %v829, 16
        %v846 = vxor.u32 %v814, %v830
        %v847 = vxor.u32 %v815, %v831
        %v848 = vxor.u32 %v816, %v832
        %v849 = vxor.u32 %v817, %v833
        %v850 = vxor.u32 %v818, %v834
        %v851 = vxor.u32 %v819, %v835
        %v852 = vxor.u32 %v820, %v836
        %v853 = vxor.u32 %v821, %v837
        %v854 = vxor.u32 %v822, %v838
        %v855 = vxor.u32 %v823, %v839
        %v856 = vxor.u32 %v824, %v840
        %v857 = vxor.u32 %v825, %v841
        %v858 = vxor.u32 %v826, %v842
        %v859 = vxor.u32 %v827, %v843
        %v860 = vxor.u32 %v828, %v844
        %v861 = vxor.u32 %v829, %v845
        %v862 = vmul.u32 %v846, 2146121005
        %v863 = vmul.u32 %v847, 2146121005
        %v864 = vmul.u32 %v848, 2146121005
        %v865 = vmul.u32 %v849, 2146121005
        %v866 = vmul.u32 %v850, 2146121005
        %v867 = vmul.u32 %v851, 2146121005
        %v868 = vmul.u32 %v852, 2146121005
        %v869 = vmul.u32 %v853, 2146121005
        %v870 = vmul.u32 %v854, 2146121005
        %v871 = vmul.u32 %v855, 2146121005
        %v872 = vmul.u32 %v856, 2146121005
        %v873 = vmul.u32 %v857, 2146121005
        %v874 = vmul.u32 %v858, 2146121005
        %v875 = vmul.u32 %v859, 2146121005
        %v876 = vmul.u32 %v860, 2146121005
        %v877 = vmul.u32 %v861, 2146121005
        %v878 = vshrl.u32 %v862, 15
        %v879 = vshrl.u32 %v863, 15
        %v880 = vshrl.u32 %v864, 15
        %v881 = vshrl.u32 %v865, 15
        %v882 = vshrl.u32 %v866, 15
        %v883 = vshrl.u32 %v867, 15
        %v884 = vshrl.u32 %v868, 15
        %v885 = vshrl.u32 %v869, 15
        %v886 = vshrl.u32 %v870, 15
        %v887 = vshrl.u32 %v871, 15
        %v888 = vshrl.u32 %v872, 15
        %v889 = vshrl.u32 %v873, 15
        %v890 = vshrl.u32 %v874, 15
        %v891 = vshrl.u32 %v875, 15
        %v892 = vshrl.u32 %v876, 15
        %v893 = vshrl.u32 %v877, 15
        %v894 = vxor.u32 %v862, %v878
        %v895 = vxor.u32 %v863, %v879
        %v896 = vxor.u32 %v864, %v880
        %v897 = vxor.u32 %v865, %v881
        %v898 = vxor.u32 %v866, %v882
        %v899 = vxor.u32 %v867, %v883
        %v900 = vxor.u32 %v868, %v884
        %v901 = vxor.u32 %v869, %v885
        %v902 = vxor.u32 %v870, %v886
        %v903 = vxor.u32 %v871, %v887
        %v904 = vxor.u32 %v872, %v888
        %v905 = vxor.u32 %v873, %v889
        %v906 = vxor.u32 %v874, %v890
        %v907 = vxor.u32 %v875, %v891
        %v908 = vxor.u32 %v876, %v892
        %v909 = vxor.u32 %v877, %v893
        %v910 = vmul.u32 %v894, 2221713035
        %v911 = vmul.u32 %v895, 2221713035
        %v912 = vmul.u32 %v896, 2221713035
        %v913 = vmul.u32 %v897, 2221713035
        %v914 = vmul.u32 %v898, 2221713035
        %v915 = vmul.u32 %v899, 2221713035
        %v916 = vmul.u32 %v900, 2221713035
        %v917 = vmul.u32 %v901, 2221713035
        %v918 = vmul.u32 %v902, 2221713035
        %v919 = vmul.u32 %v903, 2221713035
        %v920 = vmul.u32 %v904, 2221713035
        %v921 = vmul.u32 %v905, 2221713035
        %v922 = vmul.u32 %v906, 2221713035
        %v923 = vmul.u32 %v907, 2221713035
        %v924 = vmul.u32 %v908, 2221713035
        %v925 = vmul.u32 %v909, 2221713035
        %v926 = vshrl.u32 %v910, 16
        %v927 = vshrl.u32 %v911, 16
        %v928 = vshrl.u32 %v912, 16
        %v929 = vshrl.u32 %v913, 16
        %v930 = vshrl.u32 %v914, 16
        %v931 = vshrl.u32 %v915, 16
        %v932 = vshrl.u32 %v916, 16
        %v933 = vshrl.u32 %v917, 16
        %v934 = vshrl.u32 %v918, 16
        %v935 = vshrl.u32 %v919, 16
        %v936 = vshrl.u32 %v920, 16
        %v937 = vshrl.u32 %v921, 16
        %v938 = vshrl.u32 %v922, 16
        %v939 = vshrl.u32 %v923, 16
        %v940 = vshrl.u32 %v924, 16
        %v941 = vshrl.u32 %v925, 16
        %v942 = vxor.u32 %v910, %v926
        %v943 = vxor.u32 %v911, %v927
        %v944 = vxor.u32 %v912, %v928
        %v945 = vxor.u32 %v913, %v929
        %v946 = vxor.u32 %v914, %v930
        %v947 = vxor.u32 %v915, %v931
        %v948 = vxor.u32 %v916, %v932
        %v949 = vxor.u32 %v917, %v933
        %v950 = vxor.u32 %v918, %v934
        %v951 = vxor.u32 %v919, %v935
        %v952 = vxor.u32 %v920, %v936
        %v953 = vxor.u32 %v921, %v937
        %v954 = vxor.u32 %v922, %v938
        %v955 = vxor.u32 %v923, %v939
        %v956 = vxor.u32 %v924, %v940
        %v957 = vxor.u32 %v925, %v941
        %vm958 = vcmp.ge.u32.totalorder %v942, 429496729
        %vm959 = vcmp.ge.u32.totalorder %v943, 429496729
        %vm960 = vcmp.ge.u32.totalorder %v944, 429496729
        %vm961 = vcmp.ge.u32.totalorder %v945, 429496729
        %vm962 = vcmp.ge.u32.totalorder %v946, 429496729
        %vm963 = vcmp.ge.u32.totalorder %v947, 429496729
        %vm964 = vcmp.ge.u32.totalorder %v948, 429496729
        %vm965 = vcmp.ge.u32.totalorder %v949, 429496729
        %vm966 = vcmp.ge.u32.totalorder %v950, 429496729
        %vm967 = vcmp.ge.u32.totalorder %v951, 429496729
        %vm968 = vcmp.ge.u32.totalorder %v952, 429496729
        %vm969 = vcmp.ge.u32.totalorder %v953, 429496729
        %vm970 = vcmp.ge.u32.totalorder %v954, 429496729
        %vm971 = vcmp.ge.u32.totalorder %v955, 429496729
        %vm972 = vcmp.ge.u32.totalorder %v956, 429496729
        %vm973 = vcmp.ge.u32.totalorder %v957, 429496729
        %v974 = vsel %vm958, %v744, 0.0
        %v975 = vsel %vm959, %v745, 0.0
        %v976 = vsel %vm960, %v746, 0.0
        %v977 = vsel %vm961, %v747, 0.0
        %v978 = vsel %vm962, %v748, 0.0
        %v979 = vsel %vm963, %v749, 0.0
        %v980 = vsel %vm964, %v750, 0.0
        %v981 = vsel %vm965, %v751, 0.0
        %v982 = vsel %vm966, %v752, 0.0
        %v983 = vsel %vm967, %v753, 0.0
        %v984 = vsel %vm968, %v754, 0.0
        %v985 = vsel %vm969, %v755, 0.0
        %v986 = vsel %vm970, %v756, 0.0
        %v987 = vsel %vm971, %v757, 0.0
        %v988 = vsel %vm972, %v758, 0.0
        %v989 = vsel %vm973, %v759, 0.0
        %v990 = vpack.c.bf16 %v975, %v974
        %v991 = vpack.c.bf16 %v977, %v976
        %v992 = vpack.c.bf16 %v979, %v978
        %v993 = vpack.c.bf16 %v981, %v980
        %v994 = vpack.c.bf16 %v983, %v982
        %v995 = vpack.c.bf16 %v985, %v984
        %v996 = vpack.c.bf16 %v987, %v986
        %v997 = vpack.c.bf16 %v989, %v988
        %998 = vmatprep.subr.bf16.mxu0 0
        %999 = vmatpush1.bf16.msra.mxu0 %v421
        %1000 = vmatprep.subr.bf16.mxu0 0
        %1001 = vmatpush1.bf16.msra.mxu0 %v420
        %1002 = vmatprep.subr.bf16.mxu0 0
        %1003 = vmatpush1.bf16.msra.mxu0 %v419
        %1004 = vmatprep.subr.bf16.mxu0 0
        %1005 = vmatpush1.bf16.msra.mxu0 %v418
        %1006 = vmatprep.subr.bf16.mxu0 0
        %1007 = vmatpush1.bf16.msra.mxu0 %v417
        %1008 = vmatprep.subr.bf16.mxu0 0
        %1009 = vmatpush1.bf16.msra.mxu0 %v416
        %1010 = vmatprep.subr.bf16.mxu0 0
        %1011 = vmatpush1.bf16.msra.mxu0 %v415
        %1012 = vmatprep.subr.bf16.mxu0 0
        %1013 = vmatpush1.bf16.msra.mxu0 %v414
        %1014 = vmatprep.subr.bf16.mxu0 0
        %1015 = vmatpush2.bf16.msra.mxu0 0
        %1016 = vmatprep.subr.bf16.mxu0 0
        %1017 = vmatpush2.bf16.msra.mxu0 0
        %1018 = vmatprep.subr.bf16.mxu0 0
        %1019 = vmatpush2.bf16.msra.mxu0 0
        %1020 = vmatprep.subr.bf16.mxu0 0
        %1021 = vmatpush2.bf16.msra.mxu0 0
        %1022 = vmatprep.subr.bf16.mxu0 0
        %1023 = vmatpush2.bf16.msra.mxu0 0
        %1024 = vmatprep.subr.bf16.mxu0 0
        %1025 = vmatpush2.bf16.msra.mxu0 0
        %1026 = vmatprep.subr.bf16.mxu0 0
        %1027 = vmatpush2.bf16.msra.mxu0 0
        %1028 = vmatprep.subr.bf16.mxu0 0
        %1029 = vmatpush2.bf16.msra.mxu0 0
        %1030 = vmatprep.mubr.bf16.mxu0 0
        %1031 = vmatmul.mubr.bf16.gmra.mxu0 %v990
        %v1032 = vpop.f32.mrf.mxu0
        %v1033 = vadd.f32 0.0, %v1032
        %v1034 = vpop.f32.mrf.mxu0
        %v1035 = vpop.f32.mrf.mxu0
        %v1036 = vadd.f32 0.0, %v1035
        %v1037 = vpop.f32.mrf.mxu0
        %1038 = vmatprep.mubr.bf16.mxu0 0
        %1039 = vmatmul.mubr.bf16.gmra.mxu0 %v991
        %v1040 = vpop.f32.mrf.mxu0
        %v1041 = vadd.f32 0.0, %v1040
        %v1042 = vpop.f32.mrf.mxu0
        %v1043 = vpop.f32.mrf.mxu0
        %v1044 = vadd.f32 0.0, %v1043
        %v1045 = vpop.f32.mrf.mxu0
        %1046 = vmatprep.mubr.bf16.mxu0 0
        %1047 = vmatmul.mubr.bf16.gmra.mxu0 %v992
        %v1048 = vpop.f32.mrf.mxu0
        %v1049 = vadd.f32 0.0, %v1048
        %v1050 = vpop.f32.mrf.mxu0
        %v1051 = vpop.f32.mrf.mxu0
        %v1052 = vadd.f32 0.0, %v1051
        %v1053 = vpop.f32.mrf.mxu0
        %1054 = vmatprep.mubr.bf16.mxu0 0
        %1055 = vmatmul.mubr.bf16.gmra.mxu0 %v993
        %v1056 = vpop.f32.mrf.mxu0
        %v1057 = vadd.f32 0.0, %v1056
        %v1058 = vpop.f32.mrf.mxu0
        %v1059 = vpop.f32.mrf.mxu0
        %v1060 = vadd.f32 0.0, %v1059
        %v1061 = vpop.f32.mrf.mxu0
        %1062 = vmatprep.mubr.bf16.mxu0 0
        %1063 = vmatmul.mubr.bf16.gmra.mxu0 %v994
        %v1064 = vpop.f32.mrf.mxu0
        %v1065 = vadd.f32 0.0, %v1064
        %v1066 = vpop.f32.mrf.mxu0
        %v1067 = vpop.f32.mrf.mxu0
        %v1068 = vadd.f32 0.0, %v1067
        %v1069 = vpop.f32.mrf.mxu0
        %1070 = vmatprep.mubr.bf16.mxu0 0
        %1071 = vmatmul.mubr.bf16.gmra.mxu0 %v995
        %v1072 = vpop.f32.mrf.mxu0
        %v1073 = vadd.f32 0.0, %v1072
        %v1074 = vpop.f32.mrf.mxu0
        %v1075 = vpop.f32.mrf.mxu0
        %v1076 = vadd.f32 0.0, %v1075
        %v1077 = vpop.f32.mrf.mxu0
        %1078 = vmatprep.mubr.bf16.mxu0 0
        %1079 = vmatmul.mubr.bf16.gmra.mxu0 %v996
        %v1080 = vpop.f32.mrf.mxu0
        %v1081 = vadd.f32 0.0, %v1080
        %v1082 = vpop.f32.mrf.mxu0
        %v1083 = vpop.f32.mrf.mxu0
        %v1084 = vadd.f32 0.0, %v1083
        %v1085 = vpop.f32.mrf.mxu0
        %1086 = vmatprep.mubr.bf16.mxu0 0
        %1087 = vmatmul.mubr.bf16.gmra.mxu0 %v997
        %v1088 = vpop.f32.mrf.mxu0
        %v1089 = vadd.f32 0.0, %v1088
        %v1090 = vpop.f32.mrf.mxu0
        %v1091 = vpop.f32.mrf.mxu0
        %v1092 = vadd.f32 0.0, %v1091
        %v1093 = vpop.f32.mrf.mxu0
        %1094 = vdwg.mxu0
        %1103 = vrot.lane.b32.xlu0 %v366, 96
        %v1104 = vpop.permute.xlu0 %1103
        %1105 = vrot.lane.b32.xlu0 %v367, 96
        %v1106 = vpop.permute.xlu0 %1105
        %1107 = vrot.lane.b32.xlu0 %v368, 96
        %v1108 = vpop.permute.xlu0 %1107
        %1109 = vrot.lane.b32.xlu0 %v369, 96
        %v1110 = vpop.permute.xlu0 %1109
        %1111 = vrot.lane.b32.xlu0 %v370, 96
        %v1112 = vpop.permute.xlu0 %1111
        %1113 = vrot.lane.b32.xlu0 %v371, 96
        %v1114 = vpop.permute.xlu0 %1113
        %1115 = vrot.lane.b32.xlu0 %v372, 96
        %v1116 = vpop.permute.xlu0 %1115
        %1117 = vrot.lane.b32.xlu0 %v373, 96
        %v1118 = vpop.permute.xlu0 %1117
        %1127 = vrot.lane.b32.xlu0 %v390, 96
        %v1128 = vpop.permute.xlu0 %1127
        %1129 = vrot.lane.b32.xlu0 %v391, 96
        %v1130 = vpop.permute.xlu0 %1129
        %1131 = vrot.lane.b32.xlu0 %v392, 96
        %v1132 = vpop.permute.xlu0 %1131
        %1133 = vrot.lane.b32.xlu0 %v393, 96
        %v1134 = vpop.permute.xlu0 %1133
        %1135 = vrot.lane.b32.xlu0 %v394, 96
        %v1136 = vpop.permute.xlu0 %1135
        %1137 = vrot.lane.b32.xlu0 %v395, 96
        %v1138 = vpop.permute.xlu0 %1137
        %1139 = vrot.lane.b32.xlu0 %v396, 96
        %v1140 = vpop.permute.xlu0 %1139
        %1141 = vrot.lane.b32.xlu0 %v397, 96
        %v1142 = vpop.permute.xlu0 %1141
        %v1144 = vsel %vm422, %v1104, 0
        %v1147 = vsel %vm422, %v1106, 0
        %v1150 = vsel %vm422, %v1108, 0
        %v1153 = vsel %vm422, %v1110, 0
        %v1156 = vsel %vm422, %v1112, 0
        %v1159 = vsel %vm422, %v1114, 0
        %v1162 = vsel %vm422, %v1116, 0
        %v1165 = vsel %vm422, %v1118, 0
        %v1168 = vsel %vm422, %v1128, 0
        %v1171 = vsel %vm422, %v1130, 0
        %v1174 = vsel %vm422, %v1132, 0
        %v1177 = vsel %vm422, %v1134, 0
        %v1180 = vsel %vm422, %v1136, 0
        %v1183 = vsel %vm422, %v1138, 0
        %v1186 = vsel %vm422, %v1140, 0
        %v1189 = vsel %vm422, %v1142, 0
        %1191 = vmatprep.subr.bf16.mxu0 0
        %1192 = vmatpush1.bf16.xpose.msra.mxu0 %v1189
        %1193 = vmatprep.subr.bf16.mxu0 0
        %1194 = vmatpush1.bf16.xpose.msra.mxu0 %v1186
        %1195 = vmatprep.subr.bf16.mxu0 0
        %1196 = vmatpush1.bf16.xpose.msra.mxu0 %v1183
        %1197 = vmatprep.subr.bf16.mxu0 0
        %1198 = vmatpush1.bf16.xpose.msra.mxu0 %v1180
        %1199 = vmatprep.subr.bf16.mxu0 0
        %1200 = vmatpush1.bf16.xpose.msra.mxu0 %v1177
        %1201 = vmatprep.subr.bf16.mxu0 0
        %1202 = vmatpush1.bf16.xpose.msra.mxu0 %v1174
        %1203 = vmatprep.subr.bf16.mxu0 0
        %1204 = vmatpush1.bf16.xpose.msra.mxu0 %v1171
        %1205 = vmatprep.subr.bf16.mxu0 0
        %1206 = vmatpush1.bf16.xpose.msra.mxu0 %v1168
        %1207 = vmatprep.subr.bf16.mxu0 0
        %1208 = vmatpush2.bf16.xpose.msra.mxu0 0
        %1209 = vmatprep.subr.bf16.mxu0 0
        %1210 = vmatpush2.bf16.xpose.msra.mxu0 0
        %1211 = vmatprep.subr.bf16.mxu0 0
        %1212 = vmatpush2.bf16.xpose.msra.mxu0 0
        %1213 = vmatprep.subr.bf16.mxu0 0
        %1214 = vmatpush2.bf16.xpose.msra.mxu0 0
        %1215 = vmatprep.subr.bf16.mxu0 0
        %1216 = vmatpush2.bf16.xpose.msra.mxu0 0
        %1217 = vmatprep.subr.bf16.mxu0 0
        %1218 = vmatpush2.bf16.xpose.msra.mxu0 0
        %1219 = vmatprep.subr.bf16.mxu0 0
        %1220 = vmatpush2.bf16.xpose.msra.mxu0 0
        %1221 = vmatprep.subr.bf16.mxu0 0
        %1222 = vmatpush2.bf16.xpose.msra.mxu0 0
        %1223 = vmatprep.mubr.bf16.mxu0 0
        %1224 = vmatmul.mubr.bf16.gmra.mxu0 %v1144
        %v1225 = vpop.f32.mrf.mxu0
        %v1226 = vadd.f32 0.0, %v1225
        %v1227 = vpop.f32.mrf.mxu0
        %v1228 = vpop.f32.mrf.mxu0
        %v1229 = vadd.f32 0.0, %v1228
        %v1230 = vpop.f32.mrf.mxu0
        %1231 = vmatprep.mubr.bf16.mxu0 0
        %1232 = vmatmul.mubr.bf16.gmra.mxu0 %v1147
        %v1233 = vpop.f32.mrf.mxu0
        %v1234 = vadd.f32 0.0, %v1233
        %v1235 = vpop.f32.mrf.mxu0
        %v1236 = vpop.f32.mrf.mxu0
        %v1237 = vadd.f32 0.0, %v1236
        %v1238 = vpop.f32.mrf.mxu0
        %1239 = vmatprep.mubr.bf16.mxu0 0
        %1240 = vmatmul.mubr.bf16.gmra.mxu0 %v1150
        %v1241 = vpop.f32.mrf.mxu0
        %v1242 = vadd.f32 0.0, %v1241
        %v1243 = vpop.f32.mrf.mxu0
        %v1244 = vpop.f32.mrf.mxu0
        %v1245 = vadd.f32 0.0, %v1244
        %v1246 = vpop.f32.mrf.mxu0
        %1247 = vmatprep.mubr.bf16.mxu0 0
        %1248 = vmatmul.mubr.bf16.gmra.mxu0 %v1153
        %v1249 = vpop.f32.mrf.mxu0
        %v1250 = vadd.f32 0.0, %v1249
        %v1251 = vpop.f32.mrf.mxu0
        %v1252 = vpop.f32.mrf.mxu0
        %v1253 = vadd.f32 0.0, %v1252
        %v1254 = vpop.f32.mrf.mxu0
        %1255 = vmatprep.mubr.bf16.mxu0 0
        %1256 = vmatmul.mubr.bf16.gmra.mxu0 %v1156
        %v1257 = vpop.f32.mrf.mxu0
        %v1258 = vadd.f32 0.0, %v1257
        %v1259 = vpop.f32.mrf.mxu0
        %v1260 = vpop.f32.mrf.mxu0
        %v1261 = vadd.f32 0.0, %v1260
        %v1262 = vpop.f32.mrf.mxu0
        %1263 = vmatprep.mubr.bf16.mxu0 0
        %1264 = vmatmul.mubr.bf16.gmra.mxu0 %v1159
        %v1265 = vpop.f32.mrf.mxu0
        %v1266 = vadd.f32 0.0, %v1265
        %v1267 = vpop.f32.mrf.mxu0
        %v1268 = vpop.f32.mrf.mxu0
        %v1269 = vadd.f32 0.0, %v1268
        %v1270 = vpop.f32.mrf.mxu0
        %1271 = vmatprep.mubr.bf16.mxu0 0
        %1272 = vmatmul.mubr.bf16.gmra.mxu0 %v1162
        %v1273 = vpop.f32.mrf.mxu0
        %v1274 = vadd.f32 0.0, %v1273
        %v1275 = vpop.f32.mrf.mxu0
        %v1276 = vpop.f32.mrf.mxu0
        %v1277 = vadd.f32 0.0, %v1276
        %v1278 = vpop.f32.mrf.mxu0
        %1279 = vmatprep.mubr.bf16.mxu0 0
        %1280 = vmatmul.mubr.bf16.gmra.mxu0 %v1165
        %v1281 = vpop.f32.mrf.mxu0
        %v1282 = vadd.f32 0.0, %v1281
        %v1283 = vpop.f32.mrf.mxu0
        %v1284 = vpop.f32.mrf.mxu0
        %v1285 = vadd.f32 0.0, %v1284
        %v1286 = vpop.f32.mrf.mxu0
        %1287 = vdwg.mxu0
        %v1288 = vmul.f32 %v1226, 0.17677669
        %v1289 = vmul.f32 %v1229, 0.17677669
        %v1290 = vmul.f32 %v1234, 0.17677669
        %v1291 = vmul.f32 %v1237, 0.17677669
        %v1292 = vmul.f32 %v1242, 0.17677669
        %v1293 = vmul.f32 %v1245, 0.17677669
        %v1294 = vmul.f32 %v1250, 0.17677669
        %v1295 = vmul.f32 %v1253, 0.17677669
        %v1296 = vmul.f32 %v1258, 0.17677669
        %v1297 = vmul.f32 %v1261, 0.17677669
        %v1298 = vmul.f32 %v1266, 0.17677669
        %v1299 = vmul.f32 %v1269, 0.17677669
        %v1300 = vmul.f32 %v1274, 0.17677669
        %v1301 = vmul.f32 %v1277, 0.17677669
        %v1302 = vmul.f32 %v1282, 0.17677669
        %v1303 = vmul.f32 %v1285, 0.17677669
        %v1304 = vadd.f32 %v1288, %v334
        %v1305 = vadd.f32 %v1289, %v335
        %v1306 = vadd.f32 %v1290, %v336
        %v1307 = vadd.f32 %v1291, %v337
        %v1308 = vadd.f32 %v1292, %v338
        %v1309 = vadd.f32 %v1293, %v339
        %v1310 = vadd.f32 %v1294, %v340
        %v1311 = vadd.f32 %v1295, %v341
        %v1312 = vadd.f32 %v1296, %v342
        %v1313 = vadd.f32 %v1297, %v343
        %v1314 = vadd.f32 %v1298, %v344
        %v1315 = vadd.f32 %v1299, %v345
        %v1316 = vadd.f32 %v1300, %v346
        %v1317 = vadd.f32 %v1301, %v347
        %v1318 = vadd.f32 %v1302, %v348
        %v1319 = vadd.f32 %v1303, %v349
        %1320 = vmax.xlane.f32.xlu0 %v1304
        %v1321 = vpop.xlane.xlu0 %1320
        %1322 = vmax.xlane.f32.xlu0 %v1305
        %v1323 = vpop.xlane.xlu0 %1322
        %1324 = vmax.xlane.f32.xlu0 %v1306
        %v1325 = vpop.xlane.xlu0 %1324
        %1326 = vmax.xlane.f32.xlu0 %v1307
        %v1327 = vpop.xlane.xlu0 %1326
        %1328 = vmax.xlane.f32.xlu0 %v1308
        %v1329 = vpop.xlane.xlu0 %1328
        %1330 = vmax.xlane.f32.xlu0 %v1309
        %v1331 = vpop.xlane.xlu0 %1330
        %1332 = vmax.xlane.f32.xlu0 %v1310
        %v1333 = vpop.xlane.xlu0 %1332
        %1334 = vmax.xlane.f32.xlu0 %v1311
        %v1335 = vpop.xlane.xlu0 %1334
        %1336 = vmax.xlane.f32.xlu0 %v1312
        %v1337 = vpop.xlane.xlu0 %1336
        %1338 = vmax.xlane.f32.xlu0 %v1313
        %v1339 = vpop.xlane.xlu0 %1338
        %1340 = vmax.xlane.f32.xlu0 %v1314
        %v1341 = vpop.xlane.xlu0 %1340
        %1342 = vmax.xlane.f32.xlu0 %v1315
        %v1343 = vpop.xlane.xlu0 %1342
        %1344 = vmax.xlane.f32.xlu0 %v1316
        %v1345 = vpop.xlane.xlu0 %1344
        %1346 = vmax.xlane.f32.xlu0 %v1317
        %v1347 = vpop.xlane.xlu0 %1346
        %1348 = vmax.xlane.f32.xlu0 %v1318
        %v1349 = vpop.xlane.xlu0 %1348
        %1350 = vmax.xlane.f32.xlu0 %v1319
        %v1351 = vpop.xlane.xlu0 %1350
        %v1352 = vsub.f32 %v1304, %v1321
        %v1353 = vsub.f32 %v1305, %v1323
        %v1354 = vsub.f32 %v1306, %v1325
        %v1355 = vsub.f32 %v1307, %v1327
        %v1356 = vsub.f32 %v1308, %v1329
        %v1357 = vsub.f32 %v1309, %v1331
        %v1358 = vsub.f32 %v1310, %v1333
        %v1359 = vsub.f32 %v1311, %v1335
        %v1360 = vsub.f32 %v1312, %v1337
        %v1361 = vsub.f32 %v1313, %v1339
        %v1362 = vsub.f32 %v1314, %v1341
        %v1363 = vsub.f32 %v1315, %v1343
        %v1364 = vsub.f32 %v1316, %v1345
        %v1365 = vsub.f32 %v1317, %v1347
        %v1366 = vsub.f32 %v1318, %v1349
        %v1367 = vsub.f32 %v1319, %v1351
        %v1368 = vmul.f32 %v1352, 1.442695
        %v1369 = vpow.pop %v1368
        %v1370 = vmul.f32 %v1353, 1.442695
        %v1371 = vpow.pop %v1370
        %v1372 = vmul.f32 %v1354, 1.442695
        %v1373 = vpow.pop %v1372
        %v1374 = vmul.f32 %v1355, 1.442695
        %v1375 = vpow.pop %v1374
        %v1376 = vmul.f32 %v1356, 1.442695
        %v1377 = vpow.pop %v1376
        %v1378 = vmul.f32 %v1357, 1.442695
        %v1379 = vpow.pop %v1378
        %v1380 = vmul.f32 %v1358, 1.442695
        %v1381 = vpow.pop %v1380
        %v1382 = vmul.f32 %v1359, 1.442695
        %v1383 = vpow.pop %v1382
        %v1384 = vmul.f32 %v1360, 1.442695
        %v1385 = vpow.pop %v1384
        %v1386 = vmul.f32 %v1361, 1.442695
        %v1387 = vpow.pop %v1386
        %v1388 = vmul.f32 %v1362, 1.442695
        %v1389 = vpow.pop %v1388
        %v1390 = vmul.f32 %v1363, 1.442695
        %v1391 = vpow.pop %v1390
        %v1392 = vmul.f32 %v1364, 1.442695
        %v1393 = vpow.pop %v1392
        %v1394 = vmul.f32 %v1365, 1.442695
        %v1395 = vpow.pop %v1394
        %v1396 = vmul.f32 %v1366, 1.442695
        %v1397 = vpow.pop %v1396
        %v1398 = vmul.f32 %v1367, 1.442695
        %v1399 = vpow.pop %v1398
        %1400 = vadd.xlane.f32.xlu0 %v1369
        %v1401 = vpop.xlane.xlu0 %1400
        %1402 = vadd.xlane.f32.xlu0 %v1371
        %v1403 = vpop.xlane.xlu0 %1402
        %1404 = vadd.xlane.f32.xlu0 %v1373
        %v1405 = vpop.xlane.xlu0 %1404
        %1406 = vadd.xlane.f32.xlu0 %v1375
        %v1407 = vpop.xlane.xlu0 %1406
        %1408 = vadd.xlane.f32.xlu0 %v1377
        %v1409 = vpop.xlane.xlu0 %1408
        %1410 = vadd.xlane.f32.xlu0 %v1379
        %v1411 = vpop.xlane.xlu0 %1410
        %1412 = vadd.xlane.f32.xlu0 %v1381
        %v1413 = vpop.xlane.xlu0 %1412
        %1414 = vadd.xlane.f32.xlu0 %v1383
        %v1415 = vpop.xlane.xlu0 %1414
        %1416 = vadd.xlane.f32.xlu0 %v1385
        %v1417 = vpop.xlane.xlu0 %1416
        %1418 = vadd.xlane.f32.xlu0 %v1387
        %v1419 = vpop.xlane.xlu0 %1418
        %1420 = vadd.xlane.f32.xlu0 %v1389
        %v1421 = vpop.xlane.xlu0 %1420
        %1422 = vadd.xlane.f32.xlu0 %v1391
        %v1423 = vpop.xlane.xlu0 %1422
        %1424 = vadd.xlane.f32.xlu0 %v1393
        %v1425 = vpop.xlane.xlu0 %1424
        %1426 = vadd.xlane.f32.xlu0 %v1395
        %v1427 = vpop.xlane.xlu0 %1426
        %1428 = vadd.xlane.f32.xlu0 %v1397
        %v1429 = vpop.xlane.xlu0 %1428
        %1430 = vadd.xlane.f32.xlu0 %v1399
        %v1431 = vpop.xlane.xlu0 %1430
        %v1432 = vrcp.pop %v1401
        %v1433 = vmul.f32 1.1111112, %v1432
        %v1434 = vrcp.pop %v1403
        %v1435 = vmul.f32 1.1111112, %v1434
        %v1436 = vrcp.pop %v1405
        %v1437 = vmul.f32 1.1111112, %v1436
        %v1438 = vrcp.pop %v1407
        %v1439 = vmul.f32 1.1111112, %v1438
        %v1440 = vrcp.pop %v1409
        %v1441 = vmul.f32 1.1111112, %v1440
        %v1442 = vrcp.pop %v1411
        %v1443 = vmul.f32 1.1111112, %v1442
        %v1444 = vrcp.pop %v1413
        %v1445 = vmul.f32 1.1111112, %v1444
        %v1446 = vrcp.pop %v1415
        %v1447 = vmul.f32 1.1111112, %v1446
        %v1448 = vrcp.pop %v1417
        %v1449 = vmul.f32 1.1111112, %v1448
        %v1450 = vrcp.pop %v1419
        %v1451 = vmul.f32 1.1111112, %v1450
        %v1452 = vrcp.pop %v1421
        %v1453 = vmul.f32 1.1111112, %v1452
        %v1454 = vrcp.pop %v1423
        %v1455 = vmul.f32 1.1111112, %v1454
        %v1456 = vrcp.pop %v1425
        %v1457 = vmul.f32 1.1111112, %v1456
        %v1458 = vrcp.pop %v1427
        %v1459 = vmul.f32 1.1111112, %v1458
        %v1460 = vrcp.pop %v1429
        %v1461 = vmul.f32 1.1111112, %v1460
        %v1462 = vrcp.pop %v1431
        %v1463 = vmul.f32 1.1111112, %v1462
        %v1464 = vmul.f32 %v1369, %v1433
        %v1465 = vmul.f32 %v1371, %v1435
        %v1466 = vmul.f32 %v1373, %v1437
        %v1467 = vmul.f32 %v1375, %v1439
        %v1468 = vmul.f32 %v1377, %v1441
        %v1469 = vmul.f32 %v1379, %v1443
        %v1470 = vmul.f32 %v1381, %v1445
        %v1471 = vmul.f32 %v1383, %v1447
        %v1472 = vmul.f32 %v1385, %v1449
        %v1473 = vmul.f32 %v1387, %v1451
        %v1474 = vmul.f32 %v1389, %v1453
        %v1475 = vmul.f32 %v1391, %v1455
        %v1476 = vmul.f32 %v1393, %v1457
        %v1477 = vmul.f32 %v1395, %v1459
        %v1478 = vmul.f32 %v1397, %v1461
        %v1479 = vmul.f32 %v1399, %v1463
        %s1480 = smul.u32 %s27, 4
        %s1481 = sadd.s32 %s1480, 1
        %s1482 = smul.u32 %s1481, 1663821211
        %v1483 = vstv %s1482
        %v1484 = vadd.s32 %v1483, %v780
        %v1485 = vadd.s32 %v1483, %v781
        %v1486 = vadd.s32 %v1483, %v782
        %v1487 = vadd.s32 %v1483, %v783
        %v1488 = vadd.s32 %v1483, %v784
        %v1489 = vadd.s32 %v1483, %v785
        %v1490 = vadd.s32 %v1483, %v786
        %v1491 = vadd.s32 %v1483, %v787
        %v1492 = vadd.s32 %v1483, %v788
        %v1493 = vadd.s32 %v1483, %v789
        %v1494 = vadd.s32 %v1483, %v790
        %v1495 = vadd.s32 %v1483, %v791
        %v1496 = vadd.s32 %v1483, %v792
        %v1497 = vadd.s32 %v1483, %v793
        %v1498 = vadd.s32 %v1483, %v794
        %v1499 = vadd.s32 %v1483, %v795
        %v1500 = vadd.s32 %v1484, %v813
        %v1501 = vadd.s32 %v1485, %v813
        %v1502 = vadd.s32 %v1486, %v813
        %v1503 = vadd.s32 %v1487, %v813
        %v1504 = vadd.s32 %v1488, %v813
        %v1505 = vadd.s32 %v1489, %v813
        %v1506 = vadd.s32 %v1490, %v813
        %v1507 = vadd.s32 %v1491, %v813
        %v1508 = vadd.s32 %v1492, %v813
        %v1509 = vadd.s32 %v1493, %v813
        %v1510 = vadd.s32 %v1494, %v813
        %v1511 = vadd.s32 %v1495, %v813
        %v1512 = vadd.s32 %v1496, %v813
        %v1513 = vadd.s32 %v1497, %v813
        %v1514 = vadd.s32 %v1498, %v813
        %v1515 = vadd.s32 %v1499, %v813
        %v1516 = vshrl.u32 %v1500, 16
        %v1517 = vshrl.u32 %v1501, 16
        %v1518 = vshrl.u32 %v1502, 16
        %v1519 = vshrl.u32 %v1503, 16
        %v1520 = vshrl.u32 %v1504, 16
        %v1521 = vshrl.u32 %v1505, 16
        %v1522 = vshrl.u32 %v1506, 16
        %v1523 = vshrl.u32 %v1507, 16
        %v1524 = vshrl.u32 %v1508, 16
        %v1525 = vshrl.u32 %v1509, 16
        %v1526 = vshrl.u32 %v1510, 16
        %v1527 = vshrl.u32 %v1511, 16
        %v1528 = vshrl.u32 %v1512, 16
        %v1529 = vshrl.u32 %v1513, 16
        %v1530 = vshrl.u32 %v1514, 16
        %v1531 = vshrl.u32 %v1515, 16
        %v1532 = vxor.u32 %v1500, %v1516
        %v1533 = vxor.u32 %v1501, %v1517
        %v1534 = vxor.u32 %v1502, %v1518
        %v1535 = vxor.u32 %v1503, %v1519
        %v1536 = vxor.u32 %v1504, %v1520
        %v1537 = vxor.u32 %v1505, %v1521
        %v1538 = vxor.u32 %v1506, %v1522
        %v1539 = vxor.u32 %v1507, %v1523
        %v1540 = vxor.u32 %v1508, %v1524
        %v1541 = vxor.u32 %v1509, %v1525
        %v1542 = vxor.u32 %v1510, %v1526
        %v1543 = vxor.u32 %v1511, %v1527
        %v1544 = vxor.u32 %v1512, %v1528
        %v1545 = vxor.u32 %v1513, %v1529
        %v1546 = vxor.u32 %v1514, %v1530
        %v1547 = vxor.u32 %v1515, %v1531
        %v1548 = vmul.u32 %v1532, 2146121005
        %v1549 = vmul.u32 %v1533, 2146121005
        %v1550 = vmul.u32 %v1534, 2146121005
        %v1551 = vmul.u32 %v1535, 2146121005
        %v1552 = vmul.u32 %v1536, 2146121005
        %v1553 = vmul.u32 %v1537, 2146121005
        %v1554 = vmul.u32 %v1538, 2146121005
        %v1555 = vmul.u32 %v1539, 2146121005
        %v1556 = vmul.u32 %v1540, 2146121005
        %v1557 = vmul.u32 %v1541, 2146121005
        %v1558 = vmul.u32 %v1542, 2146121005
        %v1559 = vmul.u32 %v1543, 2146121005
        %v1560 = vmul.u32 %v1544, 2146121005
        %v1561 = vmul.u32 %v1545, 2146121005
        %v1562 = vmul.u32 %v1546, 2146121005
        %v1563 = vmul.u32 %v1547, 2146121005
        %v1564 = vshrl.u32 %v1548, 15
        %v1565 = vshrl.u32 %v1549, 15
        %v1566 = vshrl.u32 %v1550, 15
        %v1567 = vshrl.u32 %v1551, 15
        %v1568 = vshrl.u32 %v1552, 15
        %v1569 = vshrl.u32 %v1553, 15
        %v1570 = vshrl.u32 %v1554, 15
        %v1571 = vshrl.u32 %v1555, 15
        %v1572 = vshrl.u32 %v1556, 15
        %v1573 = vshrl.u32 %v1557, 15
        %v1574 = vshrl.u32 %v1558, 15
        %v1575 = vshrl.u32 %v1559, 15
        %v1576 = vshrl.u32 %v1560, 15
        %v1577 = vshrl.u32 %v1561, 15
        %v1578 = vshrl.u32 %v1562, 15
        %v1579 = vshrl.u32 %v1563, 15
        %v1580 = vxor.u32 %v1548, %v1564
        %v1581 = vxor.u32 %v1549, %v1565
        %v1582 = vxor.u32 %v1550, %v1566
        %v1583 = vxor.u32 %v1551, %v1567
        %v1584 = vxor.u32 %v1552, %v1568
        %v1585 = vxor.u32 %v1553, %v1569
        %v1586 = vxor.u32 %v1554, %v1570
        %v1587 = vxor.u32 %v1555, %v1571
        %v1588 = vxor.u32 %v1556, %v1572
        %v1589 = vxor.u32 %v1557, %v1573
        %v1590 = vxor.u32 %v1558, %v1574
        %v1591 = vxor.u32 %v1559, %v1575
        %v1592 = vxor.u32 %v1560, %v1576
        %v1593 = vxor.u32 %v1561, %v1577
        %v1594 = vxor.u32 %v1562, %v1578
        %v1595 = vxor.u32 %v1563, %v1579
        %v1596 = vmul.u32 %v1580, 2221713035
        %v1597 = vmul.u32 %v1581, 2221713035
        %v1598 = vmul.u32 %v1582, 2221713035
        %v1599 = vmul.u32 %v1583, 2221713035
        %v1600 = vmul.u32 %v1584, 2221713035
        %v1601 = vmul.u32 %v1585, 2221713035
        %v1602 = vmul.u32 %v1586, 2221713035
        %v1603 = vmul.u32 %v1587, 2221713035
        %v1604 = vmul.u32 %v1588, 2221713035
        %v1605 = vmul.u32 %v1589, 2221713035
        %v1606 = vmul.u32 %v1590, 2221713035
        %v1607 = vmul.u32 %v1591, 2221713035
        %v1608 = vmul.u32 %v1592, 2221713035
        %v1609 = vmul.u32 %v1593, 2221713035
        %v1610 = vmul.u32 %v1594, 2221713035
        %v1611 = vmul.u32 %v1595, 2221713035
        %v1612 = vshrl.u32 %v1596, 16
        %v1613 = vshrl.u32 %v1597, 16
        %v1614 = vshrl.u32 %v1598, 16
        %v1615 = vshrl.u32 %v1599, 16
        %v1616 = vshrl.u32 %v1600, 16
        %v1617 = vshrl.u32 %v1601, 16
        %v1618 = vshrl.u32 %v1602, 16
        %v1619 = vshrl.u32 %v1603, 16
        %v1620 = vshrl.u32 %v1604, 16
        %v1621 = vshrl.u32 %v1605, 16
        %v1622 = vshrl.u32 %v1606, 16
        %v1623 = vshrl.u32 %v1607, 16
        %v1624 = vshrl.u32 %v1608, 16
        %v1625 = vshrl.u32 %v1609, 16
        %v1626 = vshrl.u32 %v1610, 16
        %v1627 = vshrl.u32 %v1611, 16
        %v1628 = vxor.u32 %v1596, %v1612
        %v1629 = vxor.u32 %v1597, %v1613
        %v1630 = vxor.u32 %v1598, %v1614
        %v1631 = vxor.u32 %v1599, %v1615
        %v1632 = vxor.u32 %v1600, %v1616
        %v1633 = vxor.u32 %v1601, %v1617
        %v1634 = vxor.u32 %v1602, %v1618
        %v1635 = vxor.u32 %v1603, %v1619
        %v1636 = vxor.u32 %v1604, %v1620
        %v1637 = vxor.u32 %v1605, %v1621
        %v1638 = vxor.u32 %v1606, %v1622
        %v1639 = vxor.u32 %v1607, %v1623
        %v1640 = vxor.u32 %v1608, %v1624
        %v1641 = vxor.u32 %v1609, %v1625
        %v1642 = vxor.u32 %v1610, %v1626
        %v1643 = vxor.u32 %v1611, %v1627
        %vm1644 = vcmp.ge.u32.totalorder %v1628, 429496729
        %vm1645 = vcmp.ge.u32.totalorder %v1629, 429496729
        %vm1646 = vcmp.ge.u32.totalorder %v1630, 429496729
        %vm1647 = vcmp.ge.u32.totalorder %v1631, 429496729
        %vm1648 = vcmp.ge.u32.totalorder %v1632, 429496729
        %vm1649 = vcmp.ge.u32.totalorder %v1633, 429496729
        %vm1650 = vcmp.ge.u32.totalorder %v1634, 429496729
        %vm1651 = vcmp.ge.u32.totalorder %v1635, 429496729
        %vm1652 = vcmp.ge.u32.totalorder %v1636, 429496729
        %vm1653 = vcmp.ge.u32.totalorder %v1637, 429496729
        %vm1654 = vcmp.ge.u32.totalorder %v1638, 429496729
        %vm1655 = vcmp.ge.u32.totalorder %v1639, 429496729
        %vm1656 = vcmp.ge.u32.totalorder %v1640, 429496729
        %vm1657 = vcmp.ge.u32.totalorder %v1641, 429496729
        %vm1658 = vcmp.ge.u32.totalorder %v1642, 429496729
        %vm1659 = vcmp.ge.u32.totalorder %v1643, 429496729
        %v1660 = vsel %vm1644, %v1464, 0.0
        %v1661 = vsel %vm1645, %v1465, 0.0
        %v1662 = vsel %vm1646, %v1466, 0.0
        %v1663 = vsel %vm1647, %v1467, 0.0
        %v1664 = vsel %vm1648, %v1468, 0.0
        %v1665 = vsel %vm1649, %v1469, 0.0
        %v1666 = vsel %vm1650, %v1470, 0.0
        %v1667 = vsel %vm1651, %v1471, 0.0
        %v1668 = vsel %vm1652, %v1472, 0.0
        %v1669 = vsel %vm1653, %v1473, 0.0
        %v1670 = vsel %vm1654, %v1474, 0.0
        %v1671 = vsel %vm1655, %v1475, 0.0
        %v1672 = vsel %vm1656, %v1476, 0.0
        %v1673 = vsel %vm1657, %v1477, 0.0
        %v1674 = vsel %vm1658, %v1478, 0.0
        %v1675 = vsel %vm1659, %v1479, 0.0
        %v1676 = vpack.c.bf16 %v1661, %v1660
        %v1677 = vpack.c.bf16 %v1663, %v1662
        %v1678 = vpack.c.bf16 %v1665, %v1664
        %v1679 = vpack.c.bf16 %v1667, %v1666
        %v1680 = vpack.c.bf16 %v1669, %v1668
        %v1681 = vpack.c.bf16 %v1671, %v1670
        %v1682 = vpack.c.bf16 %v1673, %v1672
        %v1683 = vpack.c.bf16 %v1675, %v1674
        %1692 = vrot.lane.b32.xlu0 %v414, 96
        %v1693 = vpop.permute.xlu0 %1692
        %1694 = vrot.lane.b32.xlu0 %v415, 96
        %v1695 = vpop.permute.xlu0 %1694
        %1696 = vrot.lane.b32.xlu0 %v416, 96
        %v1697 = vpop.permute.xlu0 %1696
        %1698 = vrot.lane.b32.xlu0 %v417, 96
        %v1699 = vpop.permute.xlu0 %1698
        %1700 = vrot.lane.b32.xlu0 %v418, 96
        %v1701 = vpop.permute.xlu0 %1700
        %1702 = vrot.lane.b32.xlu0 %v419, 96
        %v1703 = vpop.permute.xlu0 %1702
        %1704 = vrot.lane.b32.xlu0 %v420, 96
        %v1705 = vpop.permute.xlu0 %1704
        %1706 = vrot.lane.b32.xlu0 %v421, 96
        %v1707 = vpop.permute.xlu0 %1706
        %1716 = vmatprep.subr.bf16.mxu0 0
        %1717 = vmatpush1.bf16.msra.mxu0 %v1707
        %1718 = vmatprep.subr.bf16.mxu0 0
        %1719 = vmatpush1.bf16.msra.mxu0 %v1705
        %1720 = vmatprep.subr.bf16.mxu0 0
        %1721 = vmatpush1.bf16.msra.mxu0 %v1703
        %1722 = vmatprep.subr.bf16.mxu0 0
        %1723 = vmatpush1.bf16.msra.mxu0 %v1701
        %1724 = vmatprep.subr.bf16.mxu0 0
        %1725 = vmatpush1.bf16.msra.mxu0 %v1699
        %1726 = vmatprep.subr.bf16.mxu0 0
        %1727 = vmatpush1.bf16.msra.mxu0 %v1697
        %1728 = vmatprep.subr.bf16.mxu0 0
        %1729 = vmatpush1.bf16.msra.mxu0 %v1695
        %1730 = vmatprep.subr.bf16.mxu0 0
        %1731 = vmatpush1.bf16.msra.mxu0 %v1693
        %1732 = vmatprep.subr.bf16.mxu0 0
        %1733 = vmatpush2.bf16.msra.mxu0 0
        %1734 = vmatprep.subr.bf16.mxu0 0
        %1735 = vmatpush2.bf16.msra.mxu0 0
        %1736 = vmatprep.subr.bf16.mxu0 0
        %1737 = vmatpush2.bf16.msra.mxu0 0
        %1738 = vmatprep.subr.bf16.mxu0 0
        %1739 = vmatpush2.bf16.msra.mxu0 0
        %1740 = vmatprep.subr.bf16.mxu0 0
        %1741 = vmatpush2.bf16.msra.mxu0 0
        %1742 = vmatprep.subr.bf16.mxu0 0
        %1743 = vmatpush2.bf16.msra.mxu0 0
        %1744 = vmatprep.subr.bf16.mxu0 0
        %1745 = vmatpush2.bf16.msra.mxu0 0
        %1746 = vmatprep.subr.bf16.mxu0 0
        %1747 = vmatpush2.bf16.msra.mxu0 0
        %1748 = vmatprep.mubr.bf16.mxu0 0
        %1749 = vmatmul.mubr.bf16.gmra.mxu0 %v1676
        %v1750 = vpop.f32.mrf.mxu0
        %v1751 = vadd.f32 0.0, %v1750
        %v1752 = vpop.f32.mrf.mxu0
        %v1753 = vpop.f32.mrf.mxu0
        %v1754 = vadd.f32 0.0, %v1753
        %v1755 = vpop.f32.mrf.mxu0
        %1756 = vmatprep.mubr.bf16.mxu0 0
        %1757 = vmatmul.mubr.bf16.gmra.mxu0 %v1677
        %v1758 = vpop.f32.mrf.mxu0
        %v1759 = vadd.f32 0.0, %v1758
        %v1760 = vpop.f32.mrf.mxu0
        %v1761 = vpop.f32.mrf.mxu0
        %v1762 = vadd.f32 0.0, %v1761
        %v1763 = vpop.f32.mrf.mxu0
        %1764 = vmatprep.mubr.bf16.mxu0 0
        %1765 = vmatmul.mubr.bf16.gmra.mxu0 %v1678
        %v1766 = vpop.f32.mrf.mxu0
        %v1767 = vadd.f32 0.0, %v1766
        %v1768 = vpop.f32.mrf.mxu0
        %v1769 = vpop.f32.mrf.mxu0
        %v1770 = vadd.f32 0.0, %v1769
        %v1771 = vpop.f32.mrf.mxu0
        %1772 = vmatprep.mubr.bf16.mxu0 0
        %1773 = vmatmul.mubr.bf16.gmra.mxu0 %v1679
        %v1774 = vpop.f32.mrf.mxu0
        %v1775 = vadd.f32 0.0, %v1774
        %v1776 = vpop.f32.mrf.mxu0
        %v1777 = vpop.f32.mrf.mxu0
        %v1778 = vadd.f32 0.0, %v1777
        %v1779 = vpop.f32.mrf.mxu0
        %1780 = vmatprep.mubr.bf16.mxu0 0
        %1781 = vmatmul.mubr.bf16.gmra.mxu0 %v1680
        %v1782 = vpop.f32.mrf.mxu0
        %v1783 = vadd.f32 0.0, %v1782
        %v1784 = vpop.f32.mrf.mxu0
        %v1785 = vpop.f32.mrf.mxu0
        %v1786 = vadd.f32 0.0, %v1785
        %v1787 = vpop.f32.mrf.mxu0
        %1788 = vmatprep.mubr.bf16.mxu0 0
        %1789 = vmatmul.mubr.bf16.gmra.mxu0 %v1681
        %v1790 = vpop.f32.mrf.mxu0
        %v1791 = vadd.f32 0.0, %v1790
        %v1792 = vpop.f32.mrf.mxu0
        %v1793 = vpop.f32.mrf.mxu0
        %v1794 = vadd.f32 0.0, %v1793
        %v1795 = vpop.f32.mrf.mxu0
        %1796 = vmatprep.mubr.bf16.mxu0 0
        %1797 = vmatmul.mubr.bf16.gmra.mxu0 %v1682
        %v1798 = vpop.f32.mrf.mxu0
        %v1799 = vadd.f32 0.0, %v1798
        %v1800 = vpop.f32.mrf.mxu0
        %v1801 = vpop.f32.mrf.mxu0
        %v1802 = vadd.f32 0.0, %v1801
        %v1803 = vpop.f32.mrf.mxu0
        %1804 = vmatprep.mubr.bf16.mxu0 0
        %1805 = vmatmul.mubr.bf16.gmra.mxu0 %v1683
        %v1806 = vpop.f32.mrf.mxu0
        %v1807 = vadd.f32 0.0, %v1806
        %v1808 = vpop.f32.mrf.mxu0
        %v1809 = vpop.f32.mrf.mxu0
        %v1810 = vadd.f32 0.0, %v1809
        %v1811 = vpop.f32.mrf.mxu0
        %1812 = vdwg.mxu0
        %1813 = vrot.lane.b32.xlu0 %v366, 64
        %v1814 = vpop.permute.xlu0 %1813
        %1815 = vrot.lane.b32.xlu0 %v367, 64
        %v1816 = vpop.permute.xlu0 %1815
        %1817 = vrot.lane.b32.xlu0 %v368, 64
        %v1818 = vpop.permute.xlu0 %1817
        %1819 = vrot.lane.b32.xlu0 %v369, 64
        %v1820 = vpop.permute.xlu0 %1819
        %1821 = vrot.lane.b32.xlu0 %v370, 64
        %v1822 = vpop.permute.xlu0 %1821
        %1823 = vrot.lane.b32.xlu0 %v371, 64
        %v1824 = vpop.permute.xlu0 %1823
        %1825 = vrot.lane.b32.xlu0 %v372, 64
        %v1826 = vpop.permute.xlu0 %1825
        %1827 = vrot.lane.b32.xlu0 %v373, 64
        %v1828 = vpop.permute.xlu0 %1827
        %1829 = vrot.lane.b32.xlu0 %v390, 64
        %v1830 = vpop.permute.xlu0 %1829
        %1831 = vrot.lane.b32.xlu0 %v391, 64
        %v1832 = vpop.permute.xlu0 %1831
        %1833 = vrot.lane.b32.xlu0 %v392, 64
        %v1834 = vpop.permute.xlu0 %1833
        %1835 = vrot.lane.b32.xlu0 %v393, 64
        %v1836 = vpop.permute.xlu0 %1835
        %1837 = vrot.lane.b32.xlu0 %v394, 64
        %v1838 = vpop.permute.xlu0 %1837
        %1839 = vrot.lane.b32.xlu0 %v395, 64
        %v1840 = vpop.permute.xlu0 %1839
        %1841 = vrot.lane.b32.xlu0 %v396, 64
        %v1842 = vpop.permute.xlu0 %1841
        %1843 = vrot.lane.b32.xlu0 %v397, 64
        %v1844 = vpop.permute.xlu0 %1843
        %v1846 = vsel %vm422, %v1814, 0
        %v1849 = vsel %vm422, %v1816, 0
        %v1852 = vsel %vm422, %v1818, 0
        %v1855 = vsel %vm422, %v1820, 0
        %v1858 = vsel %vm422, %v1822, 0
        %v1861 = vsel %vm422, %v1824, 0
        %v1864 = vsel %vm422, %v1826, 0
        %v1867 = vsel %vm422, %v1828, 0
        %v1870 = vsel %vm422, %v1830, 0
        %v1873 = vsel %vm422, %v1832, 0
        %v1876 = vsel %vm422, %v1834, 0
        %v1879 = vsel %vm422, %v1836, 0
        %v1882 = vsel %vm422, %v1838, 0
        %v1885 = vsel %vm422, %v1840, 0
        %v1888 = vsel %vm422, %v1842, 0
        %v1891 = vsel %vm422, %v1844, 0
        %1893 = vmatprep.subr.bf16.mxu0 0
        %1894 = vmatpush1.bf16.xpose.msra.mxu0 %v1891
        %1895 = vmatprep.subr.bf16.mxu0 0
        %1896 = vmatpush1.bf16.xpose.msra.mxu0 %v1888
        %1897 = vmatprep.subr.bf16.mxu0 0
        %1898 = vmatpush1.bf16.xpose.msra.mxu0 %v1885
        %1899 = vmatprep.subr.bf16.mxu0 0
        %1900 = vmatpush1.bf16.xpose.msra.mxu0 %v1882
        %1901 = vmatprep.subr.bf16.mxu0 0
        %1902 = vmatpush1.bf16.xpose.msra.mxu0 %v1879
        %1903 = vmatprep.subr.bf16.mxu0 0
        %1904 = vmatpush1.bf16.xpose.msra.mxu0 %v1876
        %1905 = vmatprep.subr.bf16.mxu0 0
        %1906 = vmatpush1.bf16.xpose.msra.mxu0 %v1873
        %1907 = vmatprep.subr.bf16.mxu0 0
        %1908 = vmatpush1.bf16.xpose.msra.mxu0 %v1870
        %1909 = vmatprep.subr.bf16.mxu0 0
        %1910 = vmatpush2.bf16.xpose.msra.mxu0 0
        %1911 = vmatprep.subr.bf16.mxu0 0
        %1912 = vmatpush2.bf16.xpose.msra.mxu0 0
        %1913 = vmatprep.subr.bf16.mxu0 0
        %1914 = vmatpush2.bf16.xpose.msra.mxu0 0
        %1915 = vmatprep.subr.bf16.mxu0 0
        %1916 = vmatpush2.bf16.xpose.msra.mxu0 0
        %1917 = vmatprep.subr.bf16.mxu0 0
        %1918 = vmatpush2.bf16.xpose.msra.mxu0 0
        %1919 = vmatprep.subr.bf16.mxu0 0
        %1920 = vmatpush2.bf16.xpose.msra.mxu0 0
        %1921 = vmatprep.subr.bf16.mxu0 0
        %1922 = vmatpush2.bf16.xpose.msra.mxu0 0
        %1923 = vmatprep.subr.bf16.mxu0 0
        %1924 = vmatpush2.bf16.xpose.msra.mxu0 0
        %1925 = vmatprep.mubr.bf16.mxu0 0
        %1926 = vmatmul.mubr.bf16.gmra.mxu0 %v1846
        %v1927 = vpop.f32.mrf.mxu0
        %v1928 = vadd.f32 0.0, %v1927
        %v1929 = vpop.f32.mrf.mxu0
        %v1930 = vpop.f32.mrf.mxu0
        %v1931 = vadd.f32 0.0, %v1930
        %v1932 = vpop.f32.mrf.mxu0
        %1933 = vmatprep.mubr.bf16.mxu0 0
        %1934 = vmatmul.mubr.bf16.gmra.mxu0 %v1849
        %v1935 = vpop.f32.mrf.mxu0
        %v1936 = vadd.f32 0.0, %v1935
        %v1937 = vpop.f32.mrf.mxu0
        %v1938 = vpop.f32.mrf.mxu0
        %v1939 = vadd.f32 0.0, %v1938
        %v1940 = vpop.f32.mrf.mxu0
        %1941 = vmatprep.mubr.bf16.mxu0 0
        %1942 = vmatmul.mubr.bf16.gmra.mxu0 %v1852
        %v1943 = vpop.f32.mrf.mxu0
        %v1944 = vadd.f32 0.0, %v1943
        %v1945 = vpop.f32.mrf.mxu0
        %v1946 = vpop.f32.mrf.mxu0
        %v1947 = vadd.f32 0.0, %v1946
        %v1948 = vpop.f32.mrf.mxu0
        %1949 = vmatprep.mubr.bf16.mxu0 0
        %1950 = vmatmul.mubr.bf16.gmra.mxu0 %v1855
        %v1951 = vpop.f32.mrf.mxu0
        %v1952 = vadd.f32 0.0, %v1951
        %v1953 = vpop.f32.mrf.mxu0
        %v1954 = vpop.f32.mrf.mxu0
        %v1955 = vadd.f32 0.0, %v1954
        %v1956 = vpop.f32.mrf.mxu0
        %1957 = vmatprep.mubr.bf16.mxu0 0
        %1958 = vmatmul.mubr.bf16.gmra.mxu0 %v1858
        %v1959 = vpop.f32.mrf.mxu0
        %v1960 = vadd.f32 0.0, %v1959
        %v1961 = vpop.f32.mrf.mxu0
        %v1962 = vpop.f32.mrf.mxu0
        %v1963 = vadd.f32 0.0, %v1962
        %v1964 = vpop.f32.mrf.mxu0
        %1965 = vmatprep.mubr.bf16.mxu0 0
        %1966 = vmatmul.mubr.bf16.gmra.mxu0 %v1861
        %v1967 = vpop.f32.mrf.mxu0
        %v1968 = vadd.f32 0.0, %v1967
        %v1969 = vpop.f32.mrf.mxu0
        %v1970 = vpop.f32.mrf.mxu0
        %v1971 = vadd.f32 0.0, %v1970
        %v1972 = vpop.f32.mrf.mxu0
        %1973 = vmatprep.mubr.bf16.mxu0 0
        %1974 = vmatmul.mubr.bf16.gmra.mxu0 %v1864
        %v1975 = vpop.f32.mrf.mxu0
        %v1976 = vadd.f32 0.0, %v1975
        %v1977 = vpop.f32.mrf.mxu0
        %v1978 = vpop.f32.mrf.mxu0
        %v1979 = vadd.f32 0.0, %v1978
        %v1980 = vpop.f32.mrf.mxu0
        %1981 = vmatprep.mubr.bf16.mxu0 0
        %1982 = vmatmul.mubr.bf16.gmra.mxu0 %v1867
        %v1983 = vpop.f32.mrf.mxu0
        %v1984 = vadd.f32 0.0, %v1983
        %v1985 = vpop.f32.mrf.mxu0
        %v1986 = vpop.f32.mrf.mxu0
        %v1987 = vadd.f32 0.0, %v1986
        %v1988 = vpop.f32.mrf.mxu0
        %1989 = vdwg.mxu0
        %v1990 = vmul.f32 %v1928, 0.17677669
        %v1991 = vmul.f32 %v1931, 0.17677669
        %v1992 = vmul.f32 %v1936, 0.17677669
        %v1993 = vmul.f32 %v1939, 0.17677669
        %v1994 = vmul.f32 %v1944, 0.17677669
        %v1995 = vmul.f32 %v1947, 0.17677669
        %v1996 = vmul.f32 %v1952, 0.17677669
        %v1997 = vmul.f32 %v1955, 0.17677669
        %v1998 = vmul.f32 %v1960, 0.17677669
        %v1999 = vmul.f32 %v1963, 0.17677669
        %v2000 = vmul.f32 %v1968, 0.17677669
        %v2001 = vmul.f32 %v1971, 0.17677669
        %v2002 = vmul.f32 %v1976, 0.17677669
        %v2003 = vmul.f32 %v1979, 0.17677669
        %v2004 = vmul.f32 %v1984, 0.17677669
        %v2005 = vmul.f32 %v1987, 0.17677669
        %v2006 = vadd.f32 %v1990, %v334
        %v2007 = vadd.f32 %v1991, %v335
        %v2008 = vadd.f32 %v1992, %v336
        %v2009 = vadd.f32 %v1993, %v337
        %v2010 = vadd.f32 %v1994, %v338
        %v2011 = vadd.f32 %v1995, %v339
        %v2012 = vadd.f32 %v1996, %v340
        %v2013 = vadd.f32 %v1997, %v341
        %v2014 = vadd.f32 %v1998, %v342
        %v2015 = vadd.f32 %v1999, %v343
        %v2016 = vadd.f32 %v2000, %v344
        %v2017 = vadd.f32 %v2001, %v345
        %v2018 = vadd.f32 %v2002, %v346
        %v2019 = vadd.f32 %v2003, %v347
        %v2020 = vadd.f32 %v2004, %v348
        %v2021 = vadd.f32 %v2005, %v349
        %2022 = vmax.xlane.f32.xlu0 %v2006
        %v2023 = vpop.xlane.xlu0 %2022
        %2024 = vmax.xlane.f32.xlu0 %v2007
        %v2025 = vpop.xlane.xlu0 %2024
        %2026 = vmax.xlane.f32.xlu0 %v2008
        %v2027 = vpop.xlane.xlu0 %2026
        %2028 = vmax.xlane.f32.xlu0 %v2009
        %v2029 = vpop.xlane.xlu0 %2028
        %2030 = vmax.xlane.f32.xlu0 %v2010
        %v2031 = vpop.xlane.xlu0 %2030
        %2032 = vmax.xlane.f32.xlu0 %v2011
        %v2033 = vpop.xlane.xlu0 %2032
        %2034 = vmax.xlane.f32.xlu0 %v2012
        %v2035 = vpop.xlane.xlu0 %2034
        %2036 = vmax.xlane.f32.xlu0 %v2013
        %v2037 = vpop.xlane.xlu0 %2036
        %2038 = vmax.xlane.f32.xlu0 %v2014
        %v2039 = vpop.xlane.xlu0 %2038
        %2040 = vmax.xlane.f32.xlu0 %v2015
        %v2041 = vpop.xlane.xlu0 %2040
        %2042 = vmax.xlane.f32.xlu0 %v2016
        %v2043 = vpop.xlane.xlu0 %2042
        %2044 = vmax.xlane.f32.xlu0 %v2017
        %v2045 = vpop.xlane.xlu0 %2044
        %2046 = vmax.xlane.f32.xlu0 %v2018
        %v2047 = vpop.xlane.xlu0 %2046
        %2048 = vmax.xlane.f32.xlu0 %v2019
        %v2049 = vpop.xlane.xlu0 %2048
        %2050 = vmax.xlane.f32.xlu0 %v2020
        %v2051 = vpop.xlane.xlu0 %2050
        %2052 = vmax.xlane.f32.xlu0 %v2021
        %v2053 = vpop.xlane.xlu0 %2052
        %v2054 = vsub.f32 %v2006, %v2023
        %v2055 = vsub.f32 %v2007, %v2025
        %v2056 = vsub.f32 %v2008, %v2027
        %v2057 = vsub.f32 %v2009, %v2029
        %v2058 = vsub.f32 %v2010, %v2031
        %v2059 = vsub.f32 %v2011, %v2033
        %v2060 = vsub.f32 %v2012, %v2035
        %v2061 = vsub.f32 %v2013, %v2037
        %v2062 = vsub.f32 %v2014, %v2039
        %v2063 = vsub.f32 %v2015, %v2041
        %v2064 = vsub.f32 %v2016, %v2043
        %v2065 = vsub.f32 %v2017, %v2045
        %v2066 = vsub.f32 %v2018, %v2047
        %v2067 = vsub.f32 %v2019, %v2049
        %v2068 = vsub.f32 %v2020, %v2051
        %v2069 = vsub.f32 %v2021, %v2053
        %v2070 = vmul.f32 %v2054, 1.442695
        %v2071 = vpow.pop %v2070
        %v2072 = vmul.f32 %v2055, 1.442695
        %v2073 = vpow.pop %v2072
        %v2074 = vmul.f32 %v2056, 1.442695
        %v2075 = vpow.pop %v2074
        %v2076 = vmul.f32 %v2057, 1.442695
        %v2077 = vpow.pop %v2076
        %v2078 = vmul.f32 %v2058, 1.442695
        %v2079 = vpow.pop %v2078
        %v2080 = vmul.f32 %v2059, 1.442695
        %v2081 = vpow.pop %v2080
        %v2082 = vmul.f32 %v2060, 1.442695
        %v2083 = vpow.pop %v2082
        %v2084 = vmul.f32 %v2061, 1.442695
        %v2085 = vpow.pop %v2084
        %v2086 = vmul.f32 %v2062, 1.442695
        %v2087 = vpow.pop %v2086
        %v2088 = vmul.f32 %v2063, 1.442695
        %v2089 = vpow.pop %v2088
        %v2090 = vmul.f32 %v2064, 1.442695
        %v2091 = vpow.pop %v2090
        %v2092 = vmul.f32 %v2065, 1.442695
        %v2093 = vpow.pop %v2092
        %v2094 = vmul.f32 %v2066, 1.442695
        %v2095 = vpow.pop %v2094
        %v2096 = vmul.f32 %v2067, 1.442695
        %v2097 = vpow.pop %v2096
        %v2098 = vmul.f32 %v2068, 1.442695
        %v2099 = vpow.pop %v2098
        %v2100 = vmul.f32 %v2069, 1.442695
        %v2101 = vpow.pop %v2100
        %2102 = vadd.xlane.f32.xlu0 %v2071
        %v2103 = vpop.xlane.xlu0 %2102
        %2104 = vadd.xlane.f32.xlu0 %v2073
        %v2105 = vpop.xlane.xlu0 %2104
        %2106 = vadd.xlane.f32.xlu0 %v2075
        %v2107 = vpop.xlane.xlu0 %2106
        %2108 = vadd.xlane.f32.xlu0 %v2077
        %v2109 = vpop.xlane.xlu0 %2108
        %2110 = vadd.xlane.f32.xlu0 %v2079
        %v2111 = vpop.xlane.xlu0 %2110
        %2112 = vadd.xlane.f32.xlu0 %v2081
        %v2113 = vpop.xlane.xlu0 %2112
        %2114 = vadd.xlane.f32.xlu0 %v2083
        %v2115 = vpop.xlane.xlu0 %2114
        %2116 = vadd.xlane.f32.xlu0 %v2085
        %v2117 = vpop.xlane.xlu0 %2116
        %2118 = vadd.xlane.f32.xlu0 %v2087
        %v2119 = vpop.xlane.xlu0 %2118
        %2120 = vadd.xlane.f32.xlu0 %v2089
        %v2121 = vpop.xlane.xlu0 %2120
        %2122 = vadd.xlane.f32.xlu0 %v2091
        %v2123 = vpop.xlane.xlu0 %2122
        %2124 = vadd.xlane.f32.xlu0 %v2093
        %v2125 = vpop.xlane.xlu0 %2124
        %2126 = vadd.xlane.f32.xlu0 %v2095
        %v2127 = vpop.xlane.xlu0 %2126
        %2128 = vadd.xlane.f32.xlu0 %v2097
        %v2129 = vpop.xlane.xlu0 %2128
        %2130 = vadd.xlane.f32.xlu0 %v2099
        %v2131 = vpop.xlane.xlu0 %2130
        %2132 = vadd.xlane.f32.xlu0 %v2101
        %v2133 = vpop.xlane.xlu0 %2132
        %v2134 = vrcp.pop %v2103
        %v2135 = vmul.f32 1.1111112, %v2134
        %v2136 = vrcp.pop %v2105
        %v2137 = vmul.f32 1.1111112, %v2136
        %v2138 = vrcp.pop %v2107
        %v2139 = vmul.f32 1.1111112, %v2138
        %v2140 = vrcp.pop %v2109
        %v2141 = vmul.f32 1.1111112, %v2140
        %v2142 = vrcp.pop %v2111
        %v2143 = vmul.f32 1.1111112, %v2142
        %v2144 = vrcp.pop %v2113
        %v2145 = vmul.f32 1.1111112, %v2144
        %v2146 = vrcp.pop %v2115
        %v2147 = vmul.f32 1.1111112, %v2146
        %v2148 = vrcp.pop %v2117
        %v2149 = vmul.f32 1.1111112, %v2148
        %v2150 = vrcp.pop %v2119
        %v2151 = vmul.f32 1.1111112, %v2150
        %v2152 = vrcp.pop %v2121
        %v2153 = vmul.f32 1.1111112, %v2152
        %v2154 = vrcp.pop %v2123
        %v2155 = vmul.f32 1.1111112, %v2154
        %v2156 = vrcp.pop %v2125
        %v2157 = vmul.f32 1.1111112, %v2156
        %v2158 = vrcp.pop %v2127
        %v2159 = vmul.f32 1.1111112, %v2158
        %v2160 = vrcp.pop %v2129
        %v2161 = vmul.f32 1.1111112, %v2160
        %v2162 = vrcp.pop %v2131
        %v2163 = vmul.f32 1.1111112, %v2162
        %v2164 = vrcp.pop %v2133
        %v2165 = vmul.f32 1.1111112, %v2164
        %v2166 = vmul.f32 %v2071, %v2135
        %v2167 = vmul.f32 %v2073, %v2137
        %v2168 = vmul.f32 %v2075, %v2139
        %v2169 = vmul.f32 %v2077, %v2141
        %v2170 = vmul.f32 %v2079, %v2143
        %v2171 = vmul.f32 %v2081, %v2145
        %v2172 = vmul.f32 %v2083, %v2147
        %v2173 = vmul.f32 %v2085, %v2149
        %v2174 = vmul.f32 %v2087, %v2151
        %v2175 = vmul.f32 %v2089, %v2153
        %v2176 = vmul.f32 %v2091, %v2155
        %v2177 = vmul.f32 %v2093, %v2157
        %v2178 = vmul.f32 %v2095, %v2159
        %v2179 = vmul.f32 %v2097, %v2161
        %v2180 = vmul.f32 %v2099, %v2163
        %v2181 = vmul.f32 %v2101, %v2165
        %s2182 = sadd.s32 %s1480, 2
        %s2183 = smul.u32 %s2182, 1663821211
        %v2184 = vstv %s2183
        %v2185 = vadd.s32 %v2184, %v780
        %v2186 = vadd.s32 %v2184, %v781
        %v2187 = vadd.s32 %v2184, %v782
        %v2188 = vadd.s32 %v2184, %v783
        %v2189 = vadd.s32 %v2184, %v784
        %v2190 = vadd.s32 %v2184, %v785
        %v2191 = vadd.s32 %v2184, %v786
        %v2192 = vadd.s32 %v2184, %v787
        %v2193 = vadd.s32 %v2184, %v788
        %v2194 = vadd.s32 %v2184, %v789
        %v2195 = vadd.s32 %v2184, %v790
        %v2196 = vadd.s32 %v2184, %v791
        %v2197 = vadd.s32 %v2184, %v792
        %v2198 = vadd.s32 %v2184, %v793
        %v2199 = vadd.s32 %v2184, %v794
        %v2200 = vadd.s32 %v2184, %v795
        %v2201 = vadd.s32 %v2185, %v813
        %v2202 = vadd.s32 %v2186, %v813
        %v2203 = vadd.s32 %v2187, %v813
        %v2204 = vadd.s32 %v2188, %v813
        %v2205 = vadd.s32 %v2189, %v813
        %v2206 = vadd.s32 %v2190, %v813
        %v2207 = vadd.s32 %v2191, %v813
        %v2208 = vadd.s32 %v2192, %v813
        %v2209 = vadd.s32 %v2193, %v813
        %v2210 = vadd.s32 %v2194, %v813
        %v2211 = vadd.s32 %v2195, %v813
        %v2212 = vadd.s32 %v2196, %v813
        %v2213 = vadd.s32 %v2197, %v813
        %v2214 = vadd.s32 %v2198, %v813
        %v2215 = vadd.s32 %v2199, %v813
        %v2216 = vadd.s32 %v2200, %v813
        %v2217 = vshrl.u32 %v2201, 16
        %v2218 = vshrl.u32 %v2202, 16
        %v2219 = vshrl.u32 %v2203, 16
        %v2220 = vshrl.u32 %v2204, 16
        %v2221 = vshrl.u32 %v2205, 16
        %v2222 = vshrl.u32 %v2206, 16
        %v2223 = vshrl.u32 %v2207, 16
        %v2224 = vshrl.u32 %v2208, 16
        %v2225 = vshrl.u32 %v2209, 16
        %v2226 = vshrl.u32 %v2210, 16
        %v2227 = vshrl.u32 %v2211, 16
        %v2228 = vshrl.u32 %v2212, 16
        %v2229 = vshrl.u32 %v2213, 16
        %v2230 = vshrl.u32 %v2214, 16
        %v2231 = vshrl.u32 %v2215, 16
        %v2232 = vshrl.u32 %v2216, 16
        %v2233 = vxor.u32 %v2201, %v2217
        %v2234 = vxor.u32 %v2202, %v2218
        %v2235 = vxor.u32 %v2203, %v2219
        %v2236 = vxor.u32 %v2204, %v2220
        %v2237 = vxor.u32 %v2205, %v2221
        %v2238 = vxor.u32 %v2206, %v2222
        %v2239 = vxor.u32 %v2207, %v2223
        %v2240 = vxor.u32 %v2208, %v2224
        %v2241 = vxor.u32 %v2209, %v2225
        %v2242 = vxor.u32 %v2210, %v2226
        %v2243 = vxor.u32 %v2211, %v2227
        %v2244 = vxor.u32 %v2212, %v2228
        %v2245 = vxor.u32 %v2213, %v2229
        %v2246 = vxor.u32 %v2214, %v2230
        %v2247 = vxor.u32 %v2215, %v2231
        %v2248 = vxor.u32 %v2216, %v2232
        %v2249 = vmul.u32 %v2233, 2146121005
        %v2250 = vmul.u32 %v2234, 2146121005
        %v2251 = vmul.u32 %v2235, 2146121005
        %v2252 = vmul.u32 %v2236, 2146121005
        %v2253 = vmul.u32 %v2237, 2146121005
        %v2254 = vmul.u32 %v2238, 2146121005
        %v2255 = vmul.u32 %v2239, 2146121005
        %v2256 = vmul.u32 %v2240, 2146121005
        %v2257 = vmul.u32 %v2241, 2146121005
        %v2258 = vmul.u32 %v2242, 2146121005
        %v2259 = vmul.u32 %v2243, 2146121005
        %v2260 = vmul.u32 %v2244, 2146121005
        %v2261 = vmul.u32 %v2245, 2146121005
        %v2262 = vmul.u32 %v2246, 2146121005
        %v2263 = vmul.u32 %v2247, 2146121005
        %v2264 = vmul.u32 %v2248, 2146121005
        %v2265 = vshrl.u32 %v2249, 15
        %v2266 = vshrl.u32 %v2250, 15
        %v2267 = vshrl.u32 %v2251, 15
        %v2268 = vshrl.u32 %v2252, 15
        %v2269 = vshrl.u32 %v2253, 15
        %v2270 = vshrl.u32 %v2254, 15
        %v2271 = vshrl.u32 %v2255, 15
        %v2272 = vshrl.u32 %v2256, 15
        %v2273 = vshrl.u32 %v2257, 15
        %v2274 = vshrl.u32 %v2258, 15
        %v2275 = vshrl.u32 %v2259, 15
        %v2276 = vshrl.u32 %v2260, 15
        %v2277 = vshrl.u32 %v2261, 15
        %v2278 = vshrl.u32 %v2262, 15
        %v2279 = vshrl.u32 %v2263, 15
        %v2280 = vshrl.u32 %v2264, 15
        %v2281 = vxor.u32 %v2249, %v2265
        %v2282 = vxor.u32 %v2250, %v2266
        %v2283 = vxor.u32 %v2251, %v2267
        %v2284 = vxor.u32 %v2252, %v2268
        %v2285 = vxor.u32 %v2253, %v2269
        %v2286 = vxor.u32 %v2254, %v2270
        %v2287 = vxor.u32 %v2255, %v2271
        %v2288 = vxor.u32 %v2256, %v2272
        %v2289 = vxor.u32 %v2257, %v2273
        %v2290 = vxor.u32 %v2258, %v2274
        %v2291 = vxor.u32 %v2259, %v2275
        %v2292 = vxor.u32 %v2260, %v2276
        %v2293 = vxor.u32 %v2261, %v2277
        %v2294 = vxor.u32 %v2262, %v2278
        %v2295 = vxor.u32 %v2263, %v2279
        %v2296 = vxor.u32 %v2264, %v2280
        %v2297 = vmul.u32 %v2281, 2221713035
        %v2298 = vmul.u32 %v2282, 2221713035
        %v2299 = vmul.u32 %v2283, 2221713035
        %v2300 = vmul.u32 %v2284, 2221713035
        %v2301 = vmul.u32 %v2285, 2221713035
        %v2302 = vmul.u32 %v2286, 2221713035
        %v2303 = vmul.u32 %v2287, 2221713035
        %v2304 = vmul.u32 %v2288, 2221713035
        %v2305 = vmul.u32 %v2289, 2221713035
        %v2306 = vmul.u32 %v2290, 2221713035
        %v2307 = vmul.u32 %v2291, 2221713035
        %v2308 = vmul.u32 %v2292, 2221713035
        %v2309 = vmul.u32 %v2293, 2221713035
        %v2310 = vmul.u32 %v2294, 2221713035
        %v2311 = vmul.u32 %v2295, 2221713035
        %v2312 = vmul.u32 %v2296, 2221713035
        %v2313 = vshrl.u32 %v2297, 16
        %v2314 = vshrl.u32 %v2298, 16
        %v2315 = vshrl.u32 %v2299, 16
        %v2316 = vshrl.u32 %v2300, 16
        %v2317 = vshrl.u32 %v2301, 16
        %v2318 = vshrl.u32 %v2302, 16
        %v2319 = vshrl.u32 %v2303, 16
        %v2320 = vshrl.u32 %v2304, 16
        %v2321 = vshrl.u32 %v2305, 16
        %v2322 = vshrl.u32 %v2306, 16
        %v2323 = vshrl.u32 %v2307, 16
        %v2324 = vshrl.u32 %v2308, 16
        %v2325 = vshrl.u32 %v2309, 16
        %v2326 = vshrl.u32 %v2310, 16
        %v2327 = vshrl.u32 %v2311, 16
        %v2328 = vshrl.u32 %v2312, 16
        %v2329 = vxor.u32 %v2297, %v2313
        %v2330 = vxor.u32 %v2298, %v2314
        %v2331 = vxor.u32 %v2299, %v2315
        %v2332 = vxor.u32 %v2300, %v2316
        %v2333 = vxor.u32 %v2301, %v2317
        %v2334 = vxor.u32 %v2302, %v2318
        %v2335 = vxor.u32 %v2303, %v2319
        %v2336 = vxor.u32 %v2304, %v2320
        %v2337 = vxor.u32 %v2305, %v2321
        %v2338 = vxor.u32 %v2306, %v2322
        %v2339 = vxor.u32 %v2307, %v2323
        %v2340 = vxor.u32 %v2308, %v2324
        %v2341 = vxor.u32 %v2309, %v2325
        %v2342 = vxor.u32 %v2310, %v2326
        %v2343 = vxor.u32 %v2311, %v2327
        %v2344 = vxor.u32 %v2312, %v2328
        %vm2345 = vcmp.ge.u32.totalorder %v2329, 429496729
        %vm2346 = vcmp.ge.u32.totalorder %v2330, 429496729
        %vm2347 = vcmp.ge.u32.totalorder %v2331, 429496729
        %vm2348 = vcmp.ge.u32.totalorder %v2332, 429496729
        %vm2349 = vcmp.ge.u32.totalorder %v2333, 429496729
        %vm2350 = vcmp.ge.u32.totalorder %v2334, 429496729
        %vm2351 = vcmp.ge.u32.totalorder %v2335, 429496729
        %vm2352 = vcmp.ge.u32.totalorder %v2336, 429496729
        %vm2353 = vcmp.ge.u32.totalorder %v2337, 429496729
        %vm2354 = vcmp.ge.u32.totalorder %v2338, 429496729
        %vm2355 = vcmp.ge.u32.totalorder %v2339, 429496729
        %vm2356 = vcmp.ge.u32.totalorder %v2340, 429496729
        %vm2357 = vcmp.ge.u32.totalorder %v2341, 429496729
        %vm2358 = vcmp.ge.u32.totalorder %v2342, 429496729
        %vm2359 = vcmp.ge.u32.totalorder %v2343, 429496729
        %vm2360 = vcmp.ge.u32.totalorder %v2344, 429496729
        %v2361 = vsel %vm2345, %v2166, 0.0
        %v2362 = vsel %vm2346, %v2167, 0.0
        %v2363 = vsel %vm2347, %v2168, 0.0
        %v2364 = vsel %vm2348, %v2169, 0.0
        %v2365 = vsel %vm2349, %v2170, 0.0
        %v2366 = vsel %vm2350, %v2171, 0.0
        %v2367 = vsel %vm2351, %v2172, 0.0
        %v2368 = vsel %vm2352, %v2173, 0.0
        %v2369 = vsel %vm2353, %v2174, 0.0
        %v2370 = vsel %vm2354, %v2175, 0.0
        %v2371 = vsel %vm2355, %v2176, 0.0
        %v2372 = vsel %vm2356, %v2177, 0.0
        %v2373 = vsel %vm2357, %v2178, 0.0
        %v2374 = vsel %vm2358, %v2179, 0.0
        %v2375 = vsel %vm2359, %v2180, 0.0
        %v2376 = vsel %vm2360, %v2181, 0.0
        %v2377 = vpack.c.bf16 %v2362, %v2361
        %v2378 = vpack.c.bf16 %v2364, %v2363
        %v2379 = vpack.c.bf16 %v2366, %v2365
        %v2380 = vpack.c.bf16 %v2368, %v2367
        %v2381 = vpack.c.bf16 %v2370, %v2369
        %v2382 = vpack.c.bf16 %v2372, %v2371
        %v2383 = vpack.c.bf16 %v2374, %v2373
        %v2384 = vpack.c.bf16 %v2376, %v2375
        %2385 = vrot.lane.b32.xlu0 %v414, 64
        %v2386 = vpop.permute.xlu0 %2385
        %2387 = vrot.lane.b32.xlu0 %v415, 64
        %v2388 = vpop.permute.xlu0 %2387
        %2389 = vrot.lane.b32.xlu0 %v416, 64
        %v2390 = vpop.permute.xlu0 %2389
        %2391 = vrot.lane.b32.xlu0 %v417, 64
        %v2392 = vpop.permute.xlu0 %2391
        %2393 = vrot.lane.b32.xlu0 %v418, 64
        %v2394 = vpop.permute.xlu0 %2393
        %2395 = vrot.lane.b32.xlu0 %v419, 64
        %v2396 = vpop.permute.xlu0 %2395
        %2397 = vrot.lane.b32.xlu0 %v420, 64
        %v2398 = vpop.permute.xlu0 %2397
        %2399 = vrot.lane.b32.xlu0 %v421, 64
        %v2400 = vpop.permute.xlu0 %2399
        %2409 = vmatprep.subr.bf16.mxu0 0
        %2410 = vmatpush1.bf16.msra.mxu0 %v2400
        %2411 = vmatprep.subr.bf16.mxu0 0
        %2412 = vmatpush1.bf16.msra.mxu0 %v2398
        %2413 = vmatprep.subr.bf16.mxu0 0
        %2414 = vmatpush1.bf16.msra.mxu0 %v2396
        %2415 = vmatprep.subr.bf16.mxu0 0
        %2416 = vmatpush1.bf16.msra.mxu0 %v2394
        %2417 = vmatprep.subr.bf16.mxu0 0
        %2418 = vmatpush1.bf16.msra.mxu0 %v2392
        %2419 = vmatprep.subr.bf16.mxu0 0
        %2420 = vmatpush1.bf16.msra.mxu0 %v2390
        %2421 = vmatprep.subr.bf16.mxu0 0
        %2422 = vmatpush1.bf16.msra.mxu0 %v2388
        %2423 = vmatprep.subr.bf16.mxu0 0
        %2424 = vmatpush1.bf16.msra.mxu0 %v2386
        %2425 = vmatprep.subr.bf16.mxu0 0
        %2426 = vmatpush2.bf16.msra.mxu0 0
        %2427 = vmatprep.subr.bf16.mxu0 0
        %2428 = vmatpush2.bf16.msra.mxu0 0
        %2429 = vmatprep.subr.bf16.mxu0 0
        %2430 = vmatpush2.bf16.msra.mxu0 0
        %2431 = vmatprep.subr.bf16.mxu0 0
        %2432 = vmatpush2.bf16.msra.mxu0 0
        %2433 = vmatprep.subr.bf16.mxu0 0
        %2434 = vmatpush2.bf16.msra.mxu0 0
        %2435 = vmatprep.subr.bf16.mxu0 0
        %2436 = vmatpush2.bf16.msra.mxu0 0
        %2437 = vmatprep.subr.bf16.mxu0 0
        %2438 = vmatpush2.bf16.msra.mxu0 0
        %2439 = vmatprep.subr.bf16.mxu0 0
        %2440 = vmatpush2.bf16.msra.mxu0 0
        %2441 = vmatprep.mubr.bf16.mxu0 0
        %2442 = vmatmul.mubr.bf16.gmra.mxu0 %v2377
        %v2443 = vpop.f32.mrf.mxu0
        %v2444 = vadd.f32 0.0, %v2443
        %v2445 = vpop.f32.mrf.mxu0
        %v2446 = vpop.f32.mrf.mxu0
        %v2447 = vadd.f32 0.0, %v2446
        %v2448 = vpop.f32.mrf.mxu0
        %2449 = vmatprep.mubr.bf16.mxu0 0
        %2450 = vmatmul.mubr.bf16.gmra.mxu0 %v2378
        %v2451 = vpop.f32.mrf.mxu0
        %v2452 = vadd.f32 0.0, %v2451
        %v2453 = vpop.f32.mrf.mxu0
        %v2454 = vpop.f32.mrf.mxu0
        %v2455 = vadd.f32 0.0, %v2454
        %v2456 = vpop.f32.mrf.mxu0
        %2457 = vmatprep.mubr.bf16.mxu0 0
        %2458 = vmatmul.mubr.bf16.gmra.mxu0 %v2379
        %v2459 = vpop.f32.mrf.mxu0
        %v2460 = vadd.f32 0.0, %v2459
        %v2461 = vpop.f32.mrf.mxu0
        %v2462 = vpop.f32.mrf.mxu0
        %v2463 = vadd.f32 0.0, %v2462
        %v2464 = vpop.f32.mrf.mxu0
        %2465 = vmatprep.mubr.bf16.mxu0 0
        %2466 = vmatmul.mubr.bf16.gmra.mxu0 %v2380
        %v2467 = vpop.f32.mrf.mxu0
        %v2468 = vadd.f32 0.0, %v2467
        %v2469 = vpop.f32.mrf.mxu0
        %v2470 = vpop.f32.mrf.mxu0
        %v2471 = vadd.f32 0.0, %v2470
        %v2472 = vpop.f32.mrf.mxu0
        %2473 = vmatprep.mubr.bf16.mxu0 0
        %2474 = vmatmul.mubr.bf16.gmra.mxu0 %v2381
        %v2475 = vpop.f32.mrf.mxu0
        %v2476 = vadd.f32 0.0, %v2475
        %v2477 = vpop.f32.mrf.mxu0
        %v2478 = vpop.f32.mrf.mxu0
        %v2479 = vadd.f32 0.0, %v2478
        %v2480 = vpop.f32.mrf.mxu0
        %2481 = vmatprep.mubr.bf16.mxu0 0
        %2482 = vmatmul.mubr.bf16.gmra.mxu0 %v2382
        %v2483 = vpop.f32.mrf.mxu0
        %v2484 = vadd.f32 0.0, %v2483
        %v2485 = vpop.f32.mrf.mxu0
        %v2486 = vpop.f32.mrf.mxu0
        %v2487 = vadd.f32 0.0, %v2486
        %v2488 = vpop.f32.mrf.mxu0
        %2489 = vmatprep.mubr.bf16.mxu0 0
        %2490 = vmatmul.mubr.bf16.gmra.mxu0 %v2383
        %v2491 = vpop.f32.mrf.mxu0
        %v2492 = vadd.f32 0.0, %v2491
        %v2493 = vpop.f32.mrf.mxu0
        %v2494 = vpop.f32.mrf.mxu0
        %v2495 = vadd.f32 0.0, %v2494
        %v2496 = vpop.f32.mrf.mxu0
        %2497 = vmatprep.mubr.bf16.mxu0 0
        %2498 = vmatmul.mubr.bf16.gmra.mxu0 %v2384
        %v2499 = vpop.f32.mrf.mxu0
        %v2500 = vadd.f32 0.0, %v2499
        %v2501 = vpop.f32.mrf.mxu0
        %v2502 = vpop.f32.mrf.mxu0
        %v2503 = vadd.f32 0.0, %v2502
        %v2504 = vpop.f32.mrf.mxu0
        %2505 = vdwg.mxu0
        %2506 = vrot.lane.b32.xlu0 %v366, 32
        %v2507 = vpop.permute.xlu0 %2506
        %2508 = vrot.lane.b32.xlu0 %v367, 32
        %v2509 = vpop.permute.xlu0 %2508
        %2510 = vrot.lane.b32.xlu0 %v368, 32
        %v2511 = vpop.permute.xlu0 %2510
        %2512 = vrot.lane.b32.xlu0 %v369, 32
        %v2513 = vpop.permute.xlu0 %2512
        %2514 = vrot.lane.b32.xlu0 %v370, 32
        %v2515 = vpop.permute.xlu0 %2514
        %2516 = vrot.lane.b32.xlu0 %v371, 32
        %v2517 = vpop.permute.xlu0 %2516
        %2518 = vrot.lane.b32.xlu0 %v372, 32
        %v2519 = vpop.permute.xlu0 %2518
        %2520 = vrot.lane.b32.xlu0 %v373, 32
        %v2521 = vpop.permute.xlu0 %2520
        %2522 = vrot.lane.b32.xlu0 %v390, 32
        %v2523 = vpop.permute.xlu0 %2522
        %2524 = vrot.lane.b32.xlu0 %v391, 32
        %v2525 = vpop.permute.xlu0 %2524
        %2526 = vrot.lane.b32.xlu0 %v392, 32
        %v2527 = vpop.permute.xlu0 %2526
        %2528 = vrot.lane.b32.xlu0 %v393, 32
        %v2529 = vpop.permute.xlu0 %2528
        %2530 = vrot.lane.b32.xlu0 %v394, 32
        %v2531 = vpop.permute.xlu0 %2530
        %2532 = vrot.lane.b32.xlu0 %v395, 32
        %v2533 = vpop.permute.xlu0 %2532
        %2534 = vrot.lane.b32.xlu0 %v396, 32
        %v2535 = vpop.permute.xlu0 %2534
        %2536 = vrot.lane.b32.xlu0 %v397, 32
        %v2537 = vpop.permute.xlu0 %2536
        %v2539 = vsel %vm422, %v2507, 0
        %v2542 = vsel %vm422, %v2509, 0
        %v2545 = vsel %vm422, %v2511, 0
        %v2548 = vsel %vm422, %v2513, 0
        %v2551 = vsel %vm422, %v2515, 0
        %v2554 = vsel %vm422, %v2517, 0
        %v2557 = vsel %vm422, %v2519, 0
        %v2560 = vsel %vm422, %v2521, 0
        %v2563 = vsel %vm422, %v2523, 0
        %v2566 = vsel %vm422, %v2525, 0
        %v2569 = vsel %vm422, %v2527, 0
        %v2572 = vsel %vm422, %v2529, 0
        %v2575 = vsel %vm422, %v2531, 0
        %v2578 = vsel %vm422, %v2533, 0
        %v2581 = vsel %vm422, %v2535, 0
        %v2584 = vsel %vm422, %v2537, 0
        %2586 = vmatprep.subr.bf16.mxu0 0
        %2587 = vmatpush1.bf16.xpose.msra.mxu0 %v2584
        %2588 = vmatprep.subr.bf16.mxu0 0
        %2589 = vmatpush1.bf16.xpose.msra.mxu0 %v2581
        %2590 = vmatprep.subr.bf16.mxu0 0
        %2591 = vmatpush1.bf16.xpose.msra.mxu0 %v2578
        %2592 = vmatprep.subr.bf16.mxu0 0
        %2593 = vmatpush1.bf16.xpose.msra.mxu0 %v2575
        %2594 = vmatprep.subr.bf16.mxu0 0
        %2595 = vmatpush1.bf16.xpose.msra.mxu0 %v2572
        %2596 = vmatprep.subr.bf16.mxu0 0
        %2597 = vmatpush1.bf16.xpose.msra.mxu0 %v2569
        %2598 = vmatprep.subr.bf16.mxu0 0
        %2599 = vmatpush1.bf16.xpose.msra.mxu0 %v2566
        %2600 = vmatprep.subr.bf16.mxu0 0
        %2601 = vmatpush1.bf16.xpose.msra.mxu0 %v2563
        %2602 = vmatprep.subr.bf16.mxu0 0
        %2603 = vmatpush2.bf16.xpose.msra.mxu0 0
        %2604 = vmatprep.subr.bf16.mxu0 0
        %2605 = vmatpush2.bf16.xpose.msra.mxu0 0
        %2606 = vmatprep.subr.bf16.mxu0 0
        %2607 = vmatpush2.bf16.xpose.msra.mxu0 0
        %2608 = vmatprep.subr.bf16.mxu0 0
        %2609 = vmatpush2.bf16.xpose.msra.mxu0 0
        %2610 = vmatprep.subr.bf16.mxu0 0
        %2611 = vmatpush2.bf16.xpose.msra.mxu0 0
        %2612 = vmatprep.subr.bf16.mxu0 0
        %2613 = vmatpush2.bf16.xpose.msra.mxu0 0
        %2614 = vmatprep.subr.bf16.mxu0 0
        %2615 = vmatpush2.bf16.xpose.msra.mxu0 0
        %2616 = vmatprep.subr.bf16.mxu0 0
        %2617 = vmatpush2.bf16.xpose.msra.mxu0 0
        %2618 = vmatprep.mubr.bf16.mxu0 0
        %2619 = vmatmul.mubr.bf16.gmra.mxu0 %v2539
        %v2620 = vpop.f32.mrf.mxu0
        %v2621 = vadd.f32 0.0, %v2620
        %v2622 = vpop.f32.mrf.mxu0
        %v2623 = vpop.f32.mrf.mxu0
        %v2624 = vadd.f32 0.0, %v2623
        %v2625 = vpop.f32.mrf.mxu0
        %2626 = vmatprep.mubr.bf16.mxu0 0
        %2627 = vmatmul.mubr.bf16.gmra.mxu0 %v2542
        %v2628 = vpop.f32.mrf.mxu0
        %v2629 = vadd.f32 0.0, %v2628
        %v2630 = vpop.f32.mrf.mxu0
        %v2631 = vpop.f32.mrf.mxu0
        %v2632 = vadd.f32 0.0, %v2631
        %v2633 = vpop.f32.mrf.mxu0
        %2634 = vmatprep.mubr.bf16.mxu0 0
        %2635 = vmatmul.mubr.bf16.gmra.mxu0 %v2545
        %v2636 = vpop.f32.mrf.mxu0
        %v2637 = vadd.f32 0.0, %v2636
        %v2638 = vpop.f32.mrf.mxu0
        %v2639 = vpop.f32.mrf.mxu0
        %v2640 = vadd.f32 0.0, %v2639
        %v2641 = vpop.f32.mrf.mxu0
        %2642 = vmatprep.mubr.bf16.mxu0 0
        %2643 = vmatmul.mubr.bf16.gmra.mxu0 %v2548
        %v2644 = vpop.f32.mrf.mxu0
        %v2645 = vadd.f32 0.0, %v2644
        %v2646 = vpop.f32.mrf.mxu0
        %v2647 = vpop.f32.mrf.mxu0
        %v2648 = vadd.f32 0.0, %v2647
        %v2649 = vpop.f32.mrf.mxu0
        %2650 = vmatprep.mubr.bf16.mxu0 0
        %2651 = vmatmul.mubr.bf16.gmra.mxu0 %v2551
        %v2652 = vpop.f32.mrf.mxu0
        %v2653 = vadd.f32 0.0, %v2652
        %v2654 = vpop.f32.mrf.mxu0
        %v2655 = vpop.f32.mrf.mxu0
        %v2656 = vadd.f32 0.0, %v2655
        %v2657 = vpop.f32.mrf.mxu0
        %2658 = vmatprep.mubr.bf16.mxu0 0
        %2659 = vmatmul.mubr.bf16.gmra.mxu0 %v2554
        %v2660 = vpop.f32.mrf.mxu0
        %v2661 = vadd.f32 0.0, %v2660
        %v2662 = vpop.f32.mrf.mxu0
        %v2663 = vpop.f32.mrf.mxu0
        %v2664 = vadd.f32 0.0, %v2663
        %v2665 = vpop.f32.mrf.mxu0
        %2666 = vmatprep.mubr.bf16.mxu0 0
        %2667 = vmatmul.mubr.bf16.gmra.mxu0 %v2557
        %v2668 = vpop.f32.mrf.mxu0
        %v2669 = vadd.f32 0.0, %v2668
        %v2670 = vpop.f32.mrf.mxu0
        %v2671 = vpop.f32.mrf.mxu0
        %v2672 = vadd.f32 0.0, %v2671
        %v2673 = vpop.f32.mrf.mxu0
        %2674 = vmatprep.mubr.bf16.mxu0 0
        %2675 = vmatmul.mubr.bf16.gmra.mxu0 %v2560
        %v2676 = vpop.f32.mrf.mxu0
        %v2677 = vadd.f32 0.0, %v2676
        %v2678 = vpop.f32.mrf.mxu0
        %v2679 = vpop.f32.mrf.mxu0
        %v2680 = vadd.f32 0.0, %v2679
        %v2681 = vpop.f32.mrf.mxu0
        %2682 = vdwg.mxu0
        %v2683 = vmul.f32 %v2621, 0.17677669
        %v2684 = vmul.f32 %v2624, 0.17677669
        %v2685 = vmul.f32 %v2629, 0.17677669
        %v2686 = vmul.f32 %v2632, 0.17677669
        %v2687 = vmul.f32 %v2637, 0.17677669
        %v2688 = vmul.f32 %v2640, 0.17677669
        %v2689 = vmul.f32 %v2645, 0.17677669
        %v2690 = vmul.f32 %v2648, 0.17677669
        %v2691 = vmul.f32 %v2653, 0.17677669
        %v2692 = vmul.f32 %v2656, 0.17677669
        %v2693 = vmul.f32 %v2661, 0.17677669
        %v2694 = vmul.f32 %v2664, 0.17677669
        %v2695 = vmul.f32 %v2669, 0.17677669
        %v2696 = vmul.f32 %v2672, 0.17677669
        %v2697 = vmul.f32 %v2677, 0.17677669
        %v2698 = vmul.f32 %v2680, 0.17677669
        %v2699 = vadd.f32 %v2683, %v334
        %v2700 = vadd.f32 %v2684, %v335
        %v2701 = vadd.f32 %v2685, %v336
        %v2702 = vadd.f32 %v2686, %v337
        %v2703 = vadd.f32 %v2687, %v338
        %v2704 = vadd.f32 %v2688, %v339
        %v2705 = vadd.f32 %v2689, %v340
        %v2706 = vadd.f32 %v2690, %v341
        %v2707 = vadd.f32 %v2691, %v342
        %v2708 = vadd.f32 %v2692, %v343
        %v2709 = vadd.f32 %v2693, %v344
        %v2710 = vadd.f32 %v2694, %v345
        %v2711 = vadd.f32 %v2695, %v346
        %v2712 = vadd.f32 %v2696, %v347
        %v2713 = vadd.f32 %v2697, %v348
        %v2714 = vadd.f32 %v2698, %v349
        %2715 = vmax.xlane.f32.xlu0 %v2699
        %v2716 = vpop.xlane.xlu0 %2715
        %2717 = vmax.xlane.f32.xlu0 %v2700
        %v2718 = vpop.xlane.xlu0 %2717
        %2719 = vmax.xlane.f32.xlu0 %v2701
        %v2720 = vpop.xlane.xlu0 %2719
        %2721 = vmax.xlane.f32.xlu0 %v2702
        %v2722 = vpop.xlane.xlu0 %2721
        %2723 = vmax.xlane.f32.xlu0 %v2703
        %v2724 = vpop.xlane.xlu0 %2723
        %2725 = vmax.xlane.f32.xlu0 %v2704
        %v2726 = vpop.xlane.xlu0 %2725
        %2727 = vmax.xlane.f32.xlu0 %v2705
        %v2728 = vpop.xlane.xlu0 %2727
        %2729 = vmax.xlane.f32.xlu0 %v2706
        %v2730 = vpop.xlane.xlu0 %2729
        %2731 = vmax.xlane.f32.xlu0 %v2707
        %v2732 = vpop.xlane.xlu0 %2731
        %2733 = vmax.xlane.f32.xlu0 %v2708
        %v2734 = vpop.xlane.xlu0 %2733
        %2735 = vmax.xlane.f32.xlu0 %v2709
        %v2736 = vpop.xlane.xlu0 %2735
        %2737 = vmax.xlane.f32.xlu0 %v2710
        %v2738 = vpop.xlane.xlu0 %2737
        %2739 = vmax.xlane.f32.xlu0 %v2711
        %v2740 = vpop.xlane.xlu0 %2739
        %2741 = vmax.xlane.f32.xlu0 %v2712
        %v2742 = vpop.xlane.xlu0 %2741
        %2743 = vmax.xlane.f32.xlu0 %v2713
        %v2744 = vpop.xlane.xlu0 %2743
        %2745 = vmax.xlane.f32.xlu0 %v2714
        %v2746 = vpop.xlane.xlu0 %2745
        %v2747 = vsub.f32 %v2699, %v2716
        %v2748 = vsub.f32 %v2700, %v2718
        %v2749 = vsub.f32 %v2701, %v2720
        %v2750 = vsub.f32 %v2702, %v2722
        %v2751 = vsub.f32 %v2703, %v2724
        %v2752 = vsub.f32 %v2704, %v2726
        %v2753 = vsub.f32 %v2705, %v2728
        %v2754 = vsub.f32 %v2706, %v2730
        %v2755 = vsub.f32 %v2707, %v2732
        %v2756 = vsub.f32 %v2708, %v2734
        %v2757 = vsub.f32 %v2709, %v2736
        %v2758 = vsub.f32 %v2710, %v2738
        %v2759 = vsub.f32 %v2711, %v2740
        %v2760 = vsub.f32 %v2712, %v2742
        %v2761 = vsub.f32 %v2713, %v2744
        %v2762 = vsub.f32 %v2714, %v2746
        %v2763 = vmul.f32 %v2747, 1.442695
        %v2764 = vpow.pop %v2763
        %v2765 = vmul.f32 %v2748, 1.442695
        %v2766 = vpow.pop %v2765
        %v2767 = vmul.f32 %v2749, 1.442695
        %v2768 = vpow.pop %v2767
        %v2769 = vmul.f32 %v2750, 1.442695
        %v2770 = vpow.pop %v2769
        %v2771 = vmul.f32 %v2751, 1.442695
        %v2772 = vpow.pop %v2771
        %v2773 = vmul.f32 %v2752, 1.442695
        %v2774 = vpow.pop %v2773
        %v2775 = vmul.f32 %v2753, 1.442695
        %v2776 = vpow.pop %v2775
        %v2777 = vmul.f32 %v2754, 1.442695
        %v2778 = vpow.pop %v2777
        %v2779 = vmul.f32 %v2755, 1.442695
        %v2780 = vpow.pop %v2779
        %v2781 = vmul.f32 %v2756, 1.442695
        %v2782 = vpow.pop %v2781
        %v2783 = vmul.f32 %v2757, 1.442695
        %v2784 = vpow.pop %v2783
        %v2785 = vmul.f32 %v2758, 1.442695
        %v2786 = vpow.pop %v2785
        %v2787 = vmul.f32 %v2759, 1.442695
        %v2788 = vpow.pop %v2787
        %v2789 = vmul.f32 %v2760, 1.442695
        %v2790 = vpow.pop %v2789
        %v2791 = vmul.f32 %v2761, 1.442695
        %v2792 = vpow.pop %v2791
        %v2793 = vmul.f32 %v2762, 1.442695
        %v2794 = vpow.pop %v2793
        %2795 = vadd.xlane.f32.xlu0 %v2764
        %v2796 = vpop.xlane.xlu0 %2795
        %2797 = vadd.xlane.f32.xlu0 %v2766
        %v2798 = vpop.xlane.xlu0 %2797
        %2799 = vadd.xlane.f32.xlu0 %v2768
        %v2800 = vpop.xlane.xlu0 %2799
        %2801 = vadd.xlane.f32.xlu0 %v2770
        %v2802 = vpop.xlane.xlu0 %2801
        %2803 = vadd.xlane.f32.xlu0 %v2772
        %v2804 = vpop.xlane.xlu0 %2803
        %2805 = vadd.xlane.f32.xlu0 %v2774
        %v2806 = vpop.xlane.xlu0 %2805
        %2807 = vadd.xlane.f32.xlu0 %v2776
        %v2808 = vpop.xlane.xlu0 %2807
        %2809 = vadd.xlane.f32.xlu0 %v2778
        %v2810 = vpop.xlane.xlu0 %2809
        %2811 = vadd.xlane.f32.xlu0 %v2780
        %v2812 = vpop.xlane.xlu0 %2811
        %2813 = vadd.xlane.f32.xlu0 %v2782
        %v2814 = vpop.xlane.xlu0 %2813
        %2815 = vadd.xlane.f32.xlu0 %v2784
        %v2816 = vpop.xlane.xlu0 %2815
        %2817 = vadd.xlane.f32.xlu0 %v2786
        %v2818 = vpop.xlane.xlu0 %2817
        %2819 = vadd.xlane.f32.xlu0 %v2788
        %v2820 = vpop.xlane.xlu0 %2819
        %2821 = vadd.xlane.f32.xlu0 %v2790
        %v2822 = vpop.xlane.xlu0 %2821
        %2823 = vadd.xlane.f32.xlu0 %v2792
        %v2824 = vpop.xlane.xlu0 %2823
        %2825 = vadd.xlane.f32.xlu0 %v2794
        %v2826 = vpop.xlane.xlu0 %2825
        %v2827 = vrcp.pop %v2796
        %v2828 = vmul.f32 1.1111112, %v2827
        %v2829 = vrcp.pop %v2798
        %v2830 = vmul.f32 1.1111112, %v2829
        %v2831 = vrcp.pop %v2800
        %v2832 = vmul.f32 1.1111112, %v2831
        %v2833 = vrcp.pop %v2802
        %v2834 = vmul.f32 1.1111112, %v2833
        %v2835 = vrcp.pop %v2804
        %v2836 = vmul.f32 1.1111112, %v2835
        %v2837 = vrcp.pop %v2806
        %v2838 = vmul.f32 1.1111112, %v2837
        %v2839 = vrcp.pop %v2808
        %v2840 = vmul.f32 1.1111112, %v2839
        %v2841 = vrcp.pop %v2810
        %v2842 = vmul.f32 1.1111112, %v2841
        %v2843 = vrcp.pop %v2812
        %v2844 = vmul.f32 1.1111112, %v2843
        %v2845 = vrcp.pop %v2814
        %v2846 = vmul.f32 1.1111112, %v2845
        %v2847 = vrcp.pop %v2816
        %v2848 = vmul.f32 1.1111112, %v2847
        %v2849 = vrcp.pop %v2818
        %v2850 = vmul.f32 1.1111112, %v2849
        %v2851 = vrcp.pop %v2820
        %v2852 = vmul.f32 1.1111112, %v2851
        %v2853 = vrcp.pop %v2822
        %v2854 = vmul.f32 1.1111112, %v2853
        %v2855 = vrcp.pop %v2824
        %v2856 = vmul.f32 1.1111112, %v2855
        %v2857 = vrcp.pop %v2826
        %v2858 = vmul.f32 1.1111112, %v2857
        %v2859 = vmul.f32 %v2764, %v2828
        %v2860 = vmul.f32 %v2766, %v2830
        %v2861 = vmul.f32 %v2768, %v2832
        %v2862 = vmul.f32 %v2770, %v2834
        %v2863 = vmul.f32 %v2772, %v2836
        %v2864 = vmul.f32 %v2774, %v2838
        %v2865 = vmul.f32 %v2776, %v2840
        %v2866 = vmul.f32 %v2778, %v2842
        %v2867 = vmul.f32 %v2780, %v2844
        %v2868 = vmul.f32 %v2782, %v2846
        %v2869 = vmul.f32 %v2784, %v2848
        %v2870 = vmul.f32 %v2786, %v2850
        %v2871 = vmul.f32 %v2788, %v2852
        %v2872 = vmul.f32 %v2790, %v2854
        %v2873 = vmul.f32 %v2792, %v2856
        %v2874 = vmul.f32 %v2794, %v2858
        %s2875 = sadd.s32 %s1480, 3
        %s2876 = smul.u32 %s2875, 1663821211
        %v2877 = vstv %s2876
        %v2878 = vadd.s32 %v2877, %v780
        %v2879 = vadd.s32 %v2877, %v781
        %v2880 = vadd.s32 %v2877, %v782
        %v2881 = vadd.s32 %v2877, %v783
        %v2882 = vadd.s32 %v2877, %v784
        %v2883 = vadd.s32 %v2877, %v785
        %v2884 = vadd.s32 %v2877, %v786
        %v2885 = vadd.s32 %v2877, %v787
        %v2886 = vadd.s32 %v2877, %v788
        %v2887 = vadd.s32 %v2877, %v789
        %v2888 = vadd.s32 %v2877, %v790
        %v2889 = vadd.s32 %v2877, %v791
        %v2890 = vadd.s32 %v2877, %v792
        %v2891 = vadd.s32 %v2877, %v793
        %v2892 = vadd.s32 %v2877, %v794
        %v2893 = vadd.s32 %v2877, %v795
        %v2894 = vadd.s32 %v2878, %v813
        %v2895 = vadd.s32 %v2879, %v813
        %v2896 = vadd.s32 %v2880, %v813
        %v2897 = vadd.s32 %v2881, %v813
        %v2898 = vadd.s32 %v2882, %v813
        %v2899 = vadd.s32 %v2883, %v813
        %v2900 = vadd.s32 %v2884, %v813
        %v2901 = vadd.s32 %v2885, %v813
        %v2902 = vadd.s32 %v2886, %v813
        %v2903 = vadd.s32 %v2887, %v813
        %v2904 = vadd.s32 %v2888, %v813
        %v2905 = vadd.s32 %v2889, %v813
        %v2906 = vadd.s32 %v2890, %v813
        %v2907 = vadd.s32 %v2891, %v813
        %v2908 = vadd.s32 %v2892, %v813
        %v2909 = vadd.s32 %v2893, %v813
        %v2910 = vshrl.u32 %v2894, 16
        %v2911 = vshrl.u32 %v2895, 16
        %v2912 = vshrl.u32 %v2896, 16
        %v2913 = vshrl.u32 %v2897, 16
        %v2914 = vshrl.u32 %v2898, 16
        %v2915 = vshrl.u32 %v2899, 16
        %v2916 = vshrl.u32 %v2900, 16
        %v2917 = vshrl.u32 %v2901, 16
        %v2918 = vshrl.u32 %v2902, 16
        %v2919 = vshrl.u32 %v2903, 16
        %v2920 = vshrl.u32 %v2904, 16
        %v2921 = vshrl.u32 %v2905, 16
        %v2922 = vshrl.u32 %v2906, 16
        %v2923 = vshrl.u32 %v2907, 16
        %v2924 = vshrl.u32 %v2908, 16
        %v2925 = vshrl.u32 %v2909, 16
        %v2926 = vxor.u32 %v2894, %v2910
        %v2927 = vxor.u32 %v2895, %v2911
        %v2928 = vxor.u32 %v2896, %v2912
        %v2929 = vxor.u32 %v2897, %v2913
        %v2930 = vxor.u32 %v2898, %v2914
        %v2931 = vxor.u32 %v2899, %v2915
        %v2932 = vxor.u32 %v2900, %v2916
        %v2933 = vxor.u32 %v2901, %v2917
        %v2934 = vxor.u32 %v2902, %v2918
        %v2935 = vxor.u32 %v2903, %v2919
        %v2936 = vxor.u32 %v2904, %v2920
        %v2937 = vxor.u32 %v2905, %v2921
        %v2938 = vxor.u32 %v2906, %v2922
        %v2939 = vxor.u32 %v2907, %v2923
        %v2940 = vxor.u32 %v2908, %v2924
        %v2941 = vxor.u32 %v2909, %v2925
        %v2942 = vmul.u32 %v2926, 2146121005
        %v2943 = vmul.u32 %v2927, 2146121005
        %v2944 = vmul.u32 %v2928, 2146121005
        %v2945 = vmul.u32 %v2929, 2146121005
        %v2946 = vmul.u32 %v2930, 2146121005
        %v2947 = vmul.u32 %v2931, 2146121005
        %v2948 = vmul.u32 %v2932, 2146121005
        %v2949 = vmul.u32 %v2933, 2146121005
        %v2950 = vmul.u32 %v2934, 2146121005
        %v2951 = vmul.u32 %v2935, 2146121005
        %v2952 = vmul.u32 %v2936, 2146121005
        %v2953 = vmul.u32 %v2937, 2146121005
        %v2954 = vmul.u32 %v2938, 2146121005
        %v2955 = vmul.u32 %v2939, 2146121005
        %v2956 = vmul.u32 %v2940, 2146121005
        %v2957 = vmul.u32 %v2941, 2146121005
        %v2958 = vshrl.u32 %v2942, 15
        %v2959 = vshrl.u32 %v2943, 15
        %v2960 = vshrl.u32 %v2944, 15
        %v2961 = vshrl.u32 %v2945, 15
        %v2962 = vshrl.u32 %v2946, 15
        %v2963 = vshrl.u32 %v2947, 15
        %v2964 = vshrl.u32 %v2948, 15
        %v2965 = vshrl.u32 %v2949, 15
        %v2966 = vshrl.u32 %v2950, 15
        %v2967 = vshrl.u32 %v2951, 15
        %v2968 = vshrl.u32 %v2952, 15
        %v2969 = vshrl.u32 %v2953, 15
        %v2970 = vshrl.u32 %v2954, 15
        %v2971 = vshrl.u32 %v2955, 15
        %v2972 = vshrl.u32 %v2956, 15
        %v2973 = vshrl.u32 %v2957, 15
        %v2974 = vxor.u32 %v2942, %v2958
        %v2975 = vxor.u32 %v2943, %v2959
        %v2976 = vxor.u32 %v2944, %v2960
        %v2977 = vxor.u32 %v2945, %v2961
        %v2978 = vxor.u32 %v2946, %v2962
        %v2979 = vxor.u32 %v2947, %v2963
        %v2980 = vxor.u32 %v2948, %v2964
        %v2981 = vxor.u32 %v2949, %v2965
        %v2982 = vxor.u32 %v2950, %v2966
        %v2983 = vxor.u32 %v2951, %v2967
        %v2984 = vxor.u32 %v2952, %v2968
        %v2985 = vxor.u32 %v2953, %v2969
        %v2986 = vxor.u32 %v2954, %v2970
        %v2987 = vxor.u32 %v2955, %v2971
        %v2988 = vxor.u32 %v2956, %v2972
        %v2989 = vxor.u32 %v2957, %v2973
        %v2990 = vmul.u32 %v2974, 2221713035
        %v2991 = vmul.u32 %v2975, 2221713035
        %v2992 = vmul.u32 %v2976, 2221713035
        %v2993 = vmul.u32 %v2977, 2221713035
        %v2994 = vmul.u32 %v2978, 2221713035
        %v2995 = vmul.u32 %v2979, 2221713035
        %v2996 = vmul.u32 %v2980, 2221713035
        %v2997 = vmul.u32 %v2981, 2221713035
        %v2998 = vmul.u32 %v2982, 2221713035
        %v2999 = vmul.u32 %v2983, 2221713035
        %v3000 = vmul.u32 %v2984, 2221713035
        %v3001 = vmul.u32 %v2985, 2221713035
        %v3002 = vmul.u32 %v2986, 2221713035
        %v3003 = vmul.u32 %v2987, 2221713035
        %v3004 = vmul.u32 %v2988, 2221713035
        %v3005 = vmul.u32 %v2989, 2221713035
        %v3006 = vshrl.u32 %v2990, 16
        %v3007 = vshrl.u32 %v2991, 16
        %v3008 = vshrl.u32 %v2992, 16
        %v3009 = vshrl.u32 %v2993, 16
        %v3010 = vshrl.u32 %v2994, 16
        %v3011 = vshrl.u32 %v2995, 16
        %v3012 = vshrl.u32 %v2996, 16
        %v3013 = vshrl.u32 %v2997, 16
        %v3014 = vshrl.u32 %v2998, 16
        %v3015 = vshrl.u32 %v2999, 16
        %v3016 = vshrl.u32 %v3000, 16
        %v3017 = vshrl.u32 %v3001, 16
        %v3018 = vshrl.u32 %v3002, 16
        %v3019 = vshrl.u32 %v3003, 16
        %v3020 = vshrl.u32 %v3004, 16
        %v3021 = vshrl.u32 %v3005, 16
        %v3022 = vxor.u32 %v2990, %v3006
        %v3023 = vxor.u32 %v2991, %v3007
        %v3024 = vxor.u32 %v2992, %v3008
        %v3025 = vxor.u32 %v2993, %v3009
        %v3026 = vxor.u32 %v2994, %v3010
        %v3027 = vxor.u32 %v2995, %v3011
        %v3028 = vxor.u32 %v2996, %v3012
        %v3029 = vxor.u32 %v2997, %v3013
        %v3030 = vxor.u32 %v2998, %v3014
        %v3031 = vxor.u32 %v2999, %v3015
        %v3032 = vxor.u32 %v3000, %v3016
        %v3033 = vxor.u32 %v3001, %v3017
        %v3034 = vxor.u32 %v3002, %v3018
        %v3035 = vxor.u32 %v3003, %v3019
        %v3036 = vxor.u32 %v3004, %v3020
        %v3037 = vxor.u32 %v3005, %v3021
        %vm3038 = vcmp.ge.u32.totalorder %v3022, 429496729
        %vm3039 = vcmp.ge.u32.totalorder %v3023, 429496729
        %vm3040 = vcmp.ge.u32.totalorder %v3024, 429496729
        %vm3041 = vcmp.ge.u32.totalorder %v3025, 429496729
        %vm3042 = vcmp.ge.u32.totalorder %v3026, 429496729
        %vm3043 = vcmp.ge.u32.totalorder %v3027, 429496729
        %vm3044 = vcmp.ge.u32.totalorder %v3028, 429496729
        %vm3045 = vcmp.ge.u32.totalorder %v3029, 429496729
        %vm3046 = vcmp.ge.u32.totalorder %v3030, 429496729
        %vm3047 = vcmp.ge.u32.totalorder %v3031, 429496729
        %vm3048 = vcmp.ge.u32.totalorder %v3032, 429496729
        %vm3049 = vcmp.ge.u32.totalorder %v3033, 429496729
        %vm3050 = vcmp.ge.u32.totalorder %v3034, 429496729
        %vm3051 = vcmp.ge.u32.totalorder %v3035, 429496729
        %vm3052 = vcmp.ge.u32.totalorder %v3036, 429496729
        %vm3053 = vcmp.ge.u32.totalorder %v3037, 429496729
        %v3054 = vsel %vm3038, %v2859, 0.0
        %v3055 = vsel %vm3039, %v2860, 0.0
        %v3056 = vsel %vm3040, %v2861, 0.0
        %v3057 = vsel %vm3041, %v2862, 0.0
        %v3058 = vsel %vm3042, %v2863, 0.0
        %v3059 = vsel %vm3043, %v2864, 0.0
        %v3060 = vsel %vm3044, %v2865, 0.0
        %v3061 = vsel %vm3045, %v2866, 0.0
        %v3062 = vsel %vm3046, %v2867, 0.0
        %v3063 = vsel %vm3047, %v2868, 0.0
        %v3064 = vsel %vm3048, %v2869, 0.0
        %v3065 = vsel %vm3049, %v2870, 0.0
        %v3066 = vsel %vm3050, %v2871, 0.0
        %v3067 = vsel %vm3051, %v2872, 0.0
        %v3068 = vsel %vm3052, %v2873, 0.0
        %v3069 = vsel %vm3053, %v2874, 0.0
        %v3070 = vpack.c.bf16 %v3055, %v3054
        %v3071 = vpack.c.bf16 %v3057, %v3056
        %v3072 = vpack.c.bf16 %v3059, %v3058
        %v3073 = vpack.c.bf16 %v3061, %v3060
        %v3074 = vpack.c.bf16 %v3063, %v3062
        %v3075 = vpack.c.bf16 %v3065, %v3064
        %v3076 = vpack.c.bf16 %v3067, %v3066
        %v3077 = vpack.c.bf16 %v3069, %v3068
        %3078 = vrot.lane.b32.xlu0 %v414, 32
        %v3079 = vpop.permute.xlu0 %3078
        %3080 = vrot.lane.b32.xlu0 %v415, 32
        %v3081 = vpop.permute.xlu0 %3080
        %3082 = vrot.lane.b32.xlu0 %v416, 32
        %v3083 = vpop.permute.xlu0 %3082
        %3084 = vrot.lane.b32.xlu0 %v417, 32
        %v3085 = vpop.permute.xlu0 %3084
        %3086 = vrot.lane.b32.xlu0 %v418, 32
        %v3087 = vpop.permute.xlu0 %3086
        %3088 = vrot.lane.b32.xlu0 %v419, 32
        %v3089 = vpop.permute.xlu0 %3088
        %3090 = vrot.lane.b32.xlu0 %v420, 32
        %v3091 = vpop.permute.xlu0 %3090
        %3092 = vrot.lane.b32.xlu0 %v421, 32
        %v3093 = vpop.permute.xlu0 %3092
        %3102 = vmatprep.subr.bf16.mxu0 0
        %3103 = vmatpush1.bf16.msra.mxu0 %v3093
        %3104 = vmatprep.subr.bf16.mxu0 0
        %3105 = vmatpush1.bf16.msra.mxu0 %v3091
        %3106 = vmatprep.subr.bf16.mxu0 0
        %3107 = vmatpush1.bf16.msra.mxu0 %v3089
        %3108 = vmatprep.subr.bf16.mxu0 0
        %3109 = vmatpush1.bf16.msra.mxu0 %v3087
        %3110 = vmatprep.subr.bf16.mxu0 0
        %3111 = vmatpush1.bf16.msra.mxu0 %v3085
        %3112 = vmatprep.subr.bf16.mxu0 0
        %3113 = vmatpush1.bf16.msra.mxu0 %v3083
        %3114 = vmatprep.subr.bf16.mxu0 0
        %3115 = vmatpush1.bf16.msra.mxu0 %v3081
        %3116 = vmatprep.subr.bf16.mxu0 0
        %3117 = vmatpush1.bf16.msra.mxu0 %v3079
        %3118 = vmatprep.subr.bf16.mxu0 0
        %3119 = vmatpush2.bf16.msra.mxu0 0
        %3120 = vmatprep.subr.bf16.mxu0 0
        %3121 = vmatpush2.bf16.msra.mxu0 0
        %3122 = vmatprep.subr.bf16.mxu0 0
        %3123 = vmatpush2.bf16.msra.mxu0 0
        %3124 = vmatprep.subr.bf16.mxu0 0
        %3125 = vmatpush2.bf16.msra.mxu0 0
        %3126 = vmatprep.subr.bf16.mxu0 0
        %3127 = vmatpush2.bf16.msra.mxu0 0
        %3128 = vmatprep.subr.bf16.mxu0 0
        %3129 = vmatpush2.bf16.msra.mxu0 0
        %3130 = vmatprep.subr.bf16.mxu0 0
        %3131 = vmatpush2.bf16.msra.mxu0 0
        %3132 = vmatprep.subr.bf16.mxu0 0
        %3133 = vmatpush2.bf16.msra.mxu0 0
        %3134 = vmatprep.mubr.bf16.mxu0 0
        %3135 = vmatmul.mubr.bf16.gmra.mxu0 %v3070
        %v3136 = vpop.f32.mrf.mxu0
        %v3137 = vadd.f32 0.0, %v3136
        %v3138 = vpop.f32.mrf.mxu0
        %v3139 = vpop.f32.mrf.mxu0
        %v3140 = vadd.f32 0.0, %v3139
        %v3141 = vpop.f32.mrf.mxu0
        %3142 = vmatprep.mubr.bf16.mxu0 0
        %3143 = vmatmul.mubr.bf16.gmra.mxu0 %v3071
        %v3144 = vpop.f32.mrf.mxu0
        %v3145 = vadd.f32 0.0, %v3144
        %v3146 = vpop.f32.mrf.mxu0
        %v3147 = vpop.f32.mrf.mxu0
        %v3148 = vadd.f32 0.0, %v3147
        %v3149 = vpop.f32.mrf.mxu0
        %3150 = vmatprep.mubr.bf16.mxu0 0
        %3151 = vmatmul.mubr.bf16.gmra.mxu0 %v3072
        %v3152 = vpop.f32.mrf.mxu0
        %v3153 = vadd.f32 0.0, %v3152
        %v3154 = vpop.f32.mrf.mxu0
        %v3155 = vpop.f32.mrf.mxu0
        %v3156 = vadd.f32 0.0, %v3155
        %v3157 = vpop.f32.mrf.mxu0
        %3158 = vmatprep.mubr.bf16.mxu0 0
        %3159 = vmatmul.mubr.bf16.gmra.mxu0 %v3073
        %v3160 = vpop.f32.mrf.mxu0
        %v3161 = vadd.f32 0.0, %v3160
        %v3162 = vpop.f32.mrf.mxu0
        %v3163 = vpop.f32.mrf.mxu0
        %v3164 = vadd.f32 0.0, %v3163
        %v3165 = vpop.f32.mrf.mxu0
        %3166 = vmatprep.mubr.bf16.mxu0 0
        %3167 = vmatmul.mubr.bf16.gmra.mxu0 %v3074
        %v3168 = vpop.f32.mrf.mxu0
        %v3169 = vadd.f32 0.0, %v3168
        %v3170 = vpop.f32.mrf.mxu0
        %v3171 = vpop.f32.mrf.mxu0
        %v3172 = vadd.f32 0.0, %v3171
        %v3173 = vpop.f32.mrf.mxu0
        %3174 = vmatprep.mubr.bf16.mxu0 0
        %3175 = vmatmul.mubr.bf16.gmra.mxu0 %v3075
        %v3176 = vpop.f32.mrf.mxu0
        %v3177 = vadd.f32 0.0, %v3176
        %v3178 = vpop.f32.mrf.mxu0
        %v3179 = vpop.f32.mrf.mxu0
        %v3180 = vadd.f32 0.0, %v3179
        %v3181 = vpop.f32.mrf.mxu0
        %3182 = vmatprep.mubr.bf16.mxu0 0
        %3183 = vmatmul.mubr.bf16.gmra.mxu0 %v3076
        %v3184 = vpop.f32.mrf.mxu0
        %v3185 = vadd.f32 0.0, %v3184
        %v3186 = vpop.f32.mrf.mxu0
        %v3187 = vpop.f32.mrf.mxu0
        %v3188 = vadd.f32 0.0, %v3187
        %v3189 = vpop.f32.mrf.mxu0
        %3190 = vmatprep.mubr.bf16.mxu0 0
        %3191 = vmatmul.mubr.bf16.gmra.mxu0 %v3077
        %v3192 = vpop.f32.mrf.mxu0
        %v3193 = vadd.f32 0.0, %v3192
        %v3194 = vpop.f32.mrf.mxu0
        %v3195 = vpop.f32.mrf.mxu0
        %v3196 = vadd.f32 0.0, %v3195
        %v3197 = vpop.f32.mrf.mxu0
        %3198 = vdwg.mxu0
        %3215 = vrot.lane.b32.xlu0 %v1751, 32
        %v3216 = vpop.permute.xlu0 %3215
        %3217 = vrot.lane.b32.xlu0 %v1754, 32
        %v3218 = vpop.permute.xlu0 %3217
        %3219 = vrot.lane.b32.xlu0 %v1759, 32
        %v3220 = vpop.permute.xlu0 %3219
        %3221 = vrot.lane.b32.xlu0 %v1762, 32
        %v3222 = vpop.permute.xlu0 %3221
        %3223 = vrot.lane.b32.xlu0 %v1767, 32
        %v3224 = vpop.permute.xlu0 %3223
        %3225 = vrot.lane.b32.xlu0 %v1770, 32
        %v3226 = vpop.permute.xlu0 %3225
        %3227 = vrot.lane.b32.xlu0 %v1775, 32
        %v3228 = vpop.permute.xlu0 %3227
        %3229 = vrot.lane.b32.xlu0 %v1778, 32
        %v3230 = vpop.permute.xlu0 %3229
        %3231 = vrot.lane.b32.xlu0 %v1783, 32
        %v3232 = vpop.permute.xlu0 %3231
        %3233 = vrot.lane.b32.xlu0 %v1786, 32
        %v3234 = vpop.permute.xlu0 %3233
        %3235 = vrot.lane.b32.xlu0 %v1791, 32
        %v3236 = vpop.permute.xlu0 %3235
        %3237 = vrot.lane.b32.xlu0 %v1794, 32
        %v3238 = vpop.permute.xlu0 %3237
        %3239 = vrot.lane.b32.xlu0 %v1799, 32
        %v3240 = vpop.permute.xlu0 %3239
        %3241 = vrot.lane.b32.xlu0 %v1802, 32
        %v3242 = vpop.permute.xlu0 %3241
        %3243 = vrot.lane.b32.xlu0 %v1807, 32
        %v3244 = vpop.permute.xlu0 %3243
        %3245 = vrot.lane.b32.xlu0 %v1810, 32
        %v3246 = vpop.permute.xlu0 %3245
        %3279 = vrot.lane.b32.xlu0 %v2444, 64
        %v3280 = vpop.permute.xlu0 %3279
        %3281 = vrot.lane.b32.xlu0 %v2447, 64
        %v3282 = vpop.permute.xlu0 %3281
        %3283 = vrot.lane.b32.xlu0 %v2452, 64
        %v3284 = vpop.permute.xlu0 %3283
        %3285 = vrot.lane.b32.xlu0 %v2455, 64
        %v3286 = vpop.permute.xlu0 %3285
        %3287 = vrot.lane.b32.xlu0 %v2460, 64
        %v3288 = vpop.permute.xlu0 %3287
        %3289 = vrot.lane.b32.xlu0 %v2463, 64
        %v3290 = vpop.permute.xlu0 %3289
        %3291 = vrot.lane.b32.xlu0 %v2468, 64
        %v3292 = vpop.permute.xlu0 %3291
        %3293 = vrot.lane.b32.xlu0 %v2471, 64
        %v3294 = vpop.permute.xlu0 %3293
        %3295 = vrot.lane.b32.xlu0 %v2476, 64
        %v3296 = vpop.permute.xlu0 %3295
        %3297 = vrot.lane.b32.xlu0 %v2479, 64
        %v3298 = vpop.permute.xlu0 %3297
        %3299 = vrot.lane.b32.xlu0 %v2484, 64
        %v3300 = vpop.permute.xlu0 %3299
        %3301 = vrot.lane.b32.xlu0 %v2487, 64
        %v3302 = vpop.permute.xlu0 %3301
        %3303 = vrot.lane.b32.xlu0 %v2492, 64
        %v3304 = vpop.permute.xlu0 %3303
        %3305 = vrot.lane.b32.xlu0 %v2495, 64
        %v3306 = vpop.permute.xlu0 %3305
        %3307 = vrot.lane.b32.xlu0 %v2500, 64
        %v3308 = vpop.permute.xlu0 %3307
        %3309 = vrot.lane.b32.xlu0 %v2503, 64
        %v3310 = vpop.permute.xlu0 %3309
        %3343 = vrot.lane.b32.xlu0 %v3137, 96
        %v3344 = vpop.permute.xlu0 %3343
        %3345 = vrot.lane.b32.xlu0 %v3140, 96
        %v3346 = vpop.permute.xlu0 %3345
        %3347 = vrot.lane.b32.xlu0 %v3145, 96
        %v3348 = vpop.permute.xlu0 %3347
        %3349 = vrot.lane.b32.xlu0 %v3148, 96
        %v3350 = vpop.permute.xlu0 %3349
        %3351 = vrot.lane.b32.xlu0 %v3153, 96
        %v3352 = vpop.permute.xlu0 %3351
        %3353 = vrot.lane.b32.xlu0 %v3156, 96
        %v3354 = vpop.permute.xlu0 %3353
        %3355 = vrot.lane.b32.xlu0 %v3161, 96
        %v3356 = vpop.permute.xlu0 %3355
        %3357 = vrot.lane.b32.xlu0 %v3164, 96
        %v3358 = vpop.permute.xlu0 %3357
        %3359 = vrot.lane.b32.xlu0 %v3169, 96
        %v3360 = vpop.permute.xlu0 %3359
        %3361 = vrot.lane.b32.xlu0 %v3172, 96
        %v3362 = vpop.permute.xlu0 %3361
        %3363 = vrot.lane.b32.xlu0 %v3177, 96
        %v3364 = vpop.permute.xlu0 %3363
        %3365 = vrot.lane.b32.xlu0 %v3180, 96
        %v3366 = vpop.permute.xlu0 %3365
        %3367 = vrot.lane.b32.xlu0 %v3185, 96
        %v3368 = vpop.permute.xlu0 %3367
        %3369 = vrot.lane.b32.xlu0 %v3188, 96
        %v3370 = vpop.permute.xlu0 %3369
        %3371 = vrot.lane.b32.xlu0 %v3193, 96
        %v3372 = vpop.permute.xlu0 %3371
        %3373 = vrot.lane.b32.xlu0 %v3196, 96
        %v3374 = vpop.permute.xlu0 %3373
        %v3391 = vsel %vm422, %v1033, %v3216
        %v3392 = vsel %vm422, %v1036, %v3218
        %v3393 = vsel %vm422, %v1041, %v3220
        %v3394 = vsel %vm422, %v1044, %v3222
        %v3395 = vsel %vm422, %v1049, %v3224
        %v3396 = vsel %vm422, %v1052, %v3226
        %v3397 = vsel %vm422, %v1057, %v3228
        %v3398 = vsel %vm422, %v1060, %v3230
        %v3399 = vsel %vm422, %v1065, %v3232
        %v3400 = vsel %vm422, %v1068, %v3234
        %v3401 = vsel %vm422, %v1073, %v3236
        %v3402 = vsel %vm422, %v1076, %v3238
        %v3403 = vsel %vm422, %v1081, %v3240
        %v3404 = vsel %vm422, %v1084, %v3242
        %v3405 = vsel %vm422, %v1089, %v3244
        %v3406 = vsel %vm422, %v1092, %v3246
        %vm3407 = vcmask 523264
        %v3408 = vsel %vm3407, %v3391, %v3280
        %v3409 = vsel %vm3407, %v3392, %v3282
        %v3410 = vsel %vm3407, %v3393, %v3284
        %v3411 = vsel %vm3407, %v3394, %v3286
        %v3412 = vsel %vm3407, %v3395, %v3288
        %v3413 = vsel %vm3407, %v3396, %v3290
        %v3414 = vsel %vm3407, %v3397, %v3292
        %v3415 = vsel %vm3407, %v3398, %v3294
        %v3416 = vsel %vm3407, %v3399, %v3296
        %v3417 = vsel %vm3407, %v3400, %v3298
        %v3418 = vsel %vm3407, %v3401, %v3300
        %v3419 = vsel %vm3407, %v3402, %v3302
        %v3420 = vsel %vm3407, %v3403, %v3304
        %v3421 = vsel %vm3407, %v3404, %v3306
        %v3422 = vsel %vm3407, %v3405, %v3308
        %v3423 = vsel %vm3407, %v3406, %v3310
        %vm3424 = vcmask 785408
        %v3425 = vsel %vm3424, %v3408, %v3344
        %v3426 = vsel %vm3424, %v3409, %v3346
        %v3427 = vsel %vm3424, %v3410, %v3348
        %v3428 = vsel %vm3424, %v3411, %v3350
        %v3429 = vsel %vm3424, %v3412, %v3352
        %v3430 = vsel %vm3424, %v3413, %v3354
        %v3431 = vsel %vm3424, %v3414, %v3356
        %v3432 = vsel %vm3424, %v3415, %v3358
        %v3433 = vsel %vm3424, %v3416, %v3360
        %v3434 = vsel %vm3424, %v3417, %v3362
        %v3435 = vsel %vm3424, %v3418, %v3364
        %v3436 = vsel %vm3424, %v3419, %v3366
        %v3437 = vsel %vm3424, %v3420, %v3368
        %v3438 = vsel %vm3424, %v3421, %v3370
        %v3439 = vsel %vm3424, %v3422, %v3372
        %v3440 = vsel %vm3424, %v3423, %v3374
        %3441 = vst [vmem:[%s332] sm:$0xff] %v3425
        %3442 = vst [vmem:[%s332 + $0x8] sm:$0xff] %v3426
        %3443 = vst [vmem:[%s332 + $0x10] sm:$0xff] %v3427
        %3444 = vst [vmem:[%s332 + $0x18] sm:$0xff] %v3428
        %3445 = vst [vmem:[%s332 + $0x20] sm:$0xff] %v3429
        %3446 = vst [vmem:[%s332 + $0x28] sm:$0xff] %v3430
        %3447 = vst [vmem:[%s332 + $0x30] sm:$0xff] %v3431
        %3448 = vst [vmem:[%s332 + $0x38] sm:$0xff] %v3432
        %3449 = vst [vmem:[%s332 + $0x40] sm:$0xff] %v3433
        %3450 = vst [vmem:[%s332 + $0x48] sm:$0xff] %v3434
        %3451 = vst [vmem:[%s332 + $0x50] sm:$0xff] %v3435
        %3452 = vst [vmem:[%s332 + $0x58] sm:$0xff] %v3436
        %3453 = vst [vmem:[%s332 + $0x60] sm:$0xff] %v3437
        %3454 = vst [vmem:[%s332 + $0x68] sm:$0xff] %v3438
        %3455 = vst [vmem:[%s332 + $0x70] sm:$0xff] %v3439
        %3456 = vst [vmem:[%s332 + $0x78] sm:$0xff] %v3440
        %s3457 = sand.u32 %s139, 1
        %s3458 = scalar_lea.sflag [#allocation4], %s3457
        %s3459 = sand.u32 %s139, 1
        %s3460 = smul.addr %s3459, 128
        %s3461 = scalar_lea.vmem [#allocation10], %s3460
        // Predicated region
        $region53: #{tpu_custom_call.1} parent=35 // pred_check
          %p3462 = pneg %p149
        $region54: #{tpu_custom_call.1} parent=35 // pred_check_branch
          %3464 = sbr.rel (%p3462) target = $region56
        $region55: #{tpu_custom_call.1} parent=35 // pred_region
          %s3466 = ssub.s32 2048, 2048
          %3467 = vsyncadd %s3458, %s3466
          %s3468 = smul.addr %s27, 16
          %s3469 = smul.addr %s3468, 128
          %s3470 = scalar_lea.hbm %s4, %s3469
          %s3471 = sshll.u32 %s3461, 4
          %s3472 = int_to_ptr.vmem [resolvable:$true] %s3471
          %3477 = dma.vmem_to_hbm [thread:$0]  %s3472, 2048, %s3470, %s3458, 128, 128, 8
        $region56: #{tpu_custom_call.1} parent=35 // pred_fallthru
          _
      $region36: #{tpu_custom_call.1} parent=5 // pred_fallthru
        _
      %p3478 = scmp.le.s32.totalorder 2, %s22
      // Predicated region
      $region57: #{tpu_custom_call.1} parent=5 // pred_check
        %p3479 = pneg %p3478
      $region58: #{tpu_custom_call.1} parent=5 // pred_check_branch
        %3481 = sbr.rel (%p3479) target = $region60
      $region59: #{tpu_custom_call.1} parent=5 // pred_region
        %s3482 = ssub.s32 %s22, 2
        // Predicated region
        $region61: #{tpu_custom_call.1} parent=59 // pred_check
          %p3483 = pneg %p155
        $region62: #{tpu_custom_call.1} parent=59 // pred_check_branch
          %3485 = sbr.rel (%p3483) target = $region64
        $region63: #{tpu_custom_call.1} parent=59 // pred_region
          %s3486 = sand.u32 %s140, 1
          %s3487 = scalar_lea.sflag [#allocation4], %s3486
          %s3488 = sand.u32 %s140, 1
          %s3489 = smul.addr %s3488, 128
          %s3490 = scalar_lea.vmem [#allocation10], %s3489
          %3491 = dma.done %s3487, 2048
        $region64: #{tpu_custom_call.1} parent=59 // pred_fallthru
          _
      $region60: #{tpu_custom_call.1} parent=5 // pred_fallthru
        _
    $region6: #{tpu_custom_call.1} parent=1 // loop_footer
      %s26 = sadd.s32 1, %s22
    $region7: #{tpu_custom_call.1} parent=1 // loop_footer_branch
      %21 = sbr.rel target = $region3
    $region8: #{tpu_custom_call.1} parent=1 // loop_exit
      _
    %3492 = vsyncpa [#allocation3], 1
    %s3493 = scalar_lea.sflag [#allocation3], 1
    %3494 = vsyncpa %s3493, 1
    %3495 = vsyncpa [#allocation6], 1
    %s3496 = scalar_lea.sflag [#allocation6], 1
    %3497 = vsyncpa %s3496, 1
    %3498 = vsyncpa [#allocation9], 1
    %s3499 = scalar_lea.sflag [#allocation9], 1
    %3500 = vsyncpa %s3499, 1
    %3501 = vsyncpa [#allocation4], 1
    %s3502 = scalar_lea.sflag [#allocation4], 1
    %3503 = vsyncpa %s3502, 1

</llo_original>
